<compile_context>
chip_gen: v7x
topology: tpu7x:2x2x1
jax: 0.10.0
libtpu: 0.0.40
codegen_flags: <defaults>
</compile_context>

<pallas_src>
import jax
import jax.numpy as jnp
from jax.experimental import pallas as pl
from jax.experimental.pallas import tpu as pltpu


LANE = 128
BATCH_TILE_ALIGN = 16  # bf16 sublane packing: keep batch tiles 16-row aligned


def _round_up(x, m):
    return ((x + m - 1) // m) * m


def _make_mlp_kernel(bias_slices, scale_slice, out_dtype):
    """bias_slices: 5 (static offset, width) pairs into the packed bias row.
    scale_slice: (offset, width) of the W2 per-column dequant scale row."""
    b1s, b2s, b3s, b4s, b5s = bias_slices
    s_off, s_w = scale_slice

    def kernel(x_ref, w1_ref, w2_ref, w3_ref, w4_ref, w5_ref, b_ref, o_ref):
        def bias(sl):
            off, width = sl
            return b_ref[:, off:off + width]

        # Layer 1: bf16 x bf16 on the MXU, f32 accumulate; bias + ReLU in
        # f32, hand-off to the next layer in bf16.
        h = jnp.dot(x_ref[...], w1_ref[...],
                    preferred_element_type=jnp.float32)
        h = jnp.maximum(h + bias(b1s), 0.0).astype(jnp.bfloat16)

        # Layer 2: W2 arrives as int8 (halves the dominant weight DMA).
        # int8 -> f32 -> bf16 is exact for values in [-127, 127]; the
        # per-output-column scale is applied after the dot as one VPU mul.
        w2 = w2_ref[...].astype(jnp.float32).astype(jnp.bfloat16)
        h = jnp.dot(h, w2, preferred_element_type=jnp.float32)
        h = h * b_ref[:, s_off:s_off + s_w] + bias(b2s)
        h = jnp.maximum(h, 0.0).astype(jnp.bfloat16)

        # Layer 3.
        h = jnp.dot(h, w3_ref[...], preferred_element_type=jnp.float32)
        h = jnp.maximum(h + bias(b3s), 0.0).astype(jnp.bfloat16)

        # Layer 4 (columns zero-padded 32 -> 128: lane-dense, exact since the
        # padded columns see zero weight and zero bias -> ReLU(0) = 0).
        h = jnp.dot(h, w4_ref[...], preferred_element_type=jnp.float32)
        h = jnp.maximum(h + bias(b4s), 0.0).astype(jnp.bfloat16)

        # Layer 5 (rows padded 32 -> 128, columns 2 -> 128 so the final store
        # is a full unmasked vst; real logits are the first num_classes cols).
        h = jnp.dot(h, w5_ref[...], preferred_element_type=jnp.float32)
        o_ref[...] = (h + bias(b5s)).astype(out_dtype)

    return kernel


def prepare_params(params):
    """One-time host-side prep (amortized across calls): pad to lane widths,
    cast to bf16, int8-quantize W2, and pack biases + W2 scales into one
    lane-aligned f32 row.  Also returns 'ref_params' (the effective f32
    weights) so a pure-JAX reference matches the kernel's weight rounding."""
    (w1, b1), (w2, b2), (w3, b3), (w4, b4), (w5, b5) = params
    in_features = int(w1.shape[0])
    num_classes = int(w5.shape[1])
    f_pad = _round_up(in_features, LANE)          # 100 -> 128
    h4_pad = _round_up(int(w4.shape[1]), LANE)    # 32  -> 128
    out_pad = _round_up(num_classes, LANE)        # 2   -> 128

    w1f, w2f, w3f, w4f, w5f = (w.astype(jnp.float32) for w in (w1, w2, w3, w4, w5))

    # Zero-pad: W1 rows (100->128), W4 cols (32->128), W5 rows+cols.
    w1p = jnp.zeros((f_pad, w1f.shape[1]), jnp.float32).at[:in_features, :].set(w1f)
    w4p = jnp.zeros((w4f.shape[0], h4_pad), jnp.float32).at[:, :w4f.shape[1]].set(w4f)
    w5p = jnp.zeros((h4_pad, out_pad), jnp.float32).at[:w5f.shape[0], :num_classes].set(w5f)

    # W2: symmetric int8 with per-output-column scale.
    absmax = jnp.max(jnp.abs(w2f), axis=0)
    w2_scale = jnp.where(absmax > 0, absmax / 127.0, 1.0).astype(jnp.float32)
    w2_q = jnp.clip(jnp.round(w2f / w2_scale), -127.0, 127.0).astype(jnp.int8)
    w2_deq = w2_q.astype(jnp.float32) * w2_scale          # effective W2 (for reference)

    weights = (
        w1p.astype(jnp.bfloat16),
        w2_q,
        w3f.astype(jnp.bfloat16),
        w4p.astype(jnp.bfloat16),
        w5p.astype(jnp.bfloat16),
    )

    # Pack biases (each padded to a lane multiple) + the W2 scale row into
    # one (1, N*128) f32 buffer.  After padding, every segment width equals
    # the corresponding layer's (padded) output width, so all slices in the
    # kernel are full-lane.
    b4p = jnp.zeros((h4_pad,), jnp.float32).at[:b4.shape[0]].set(b4.astype(jnp.float32))
    b5p = jnp.zeros((out_pad,), jnp.float32).at[:b5.shape[0]].set(b5.astype(jnp.float32))
    raw_segs = [b1.astype(jnp.float32), b2.astype(jnp.float32),
                b3.astype(jnp.float32), b4p, b5p, w2_scale]

    segs, offsets = [], []
    off = 0
    for s in raw_segs:
        width = _round_up(int(s.shape[0]), LANE)
        seg = jnp.zeros((width,), jnp.float32).at[:s.shape[0]].set(s)
        segs.append(seg)
        offsets.append((off, width))
        off += width
    bias_packed = jnp.concatenate(segs).reshape(1, -1)

    bias_slices = tuple(offsets[:5])
    scale_slice = offsets[5]

    def bf16_round(w):
        return w.astype(jnp.bfloat16).astype(jnp.float32)

    ref_params = [
        (bf16_round(w1f), b1.astype(jnp.float32)),
        (w2_deq, b2.astype(jnp.float32)),
        (bf16_round(w3f), b3.astype(jnp.float32)),
        (bf16_round(w4f), b4.astype(jnp.float32)),
        (bf16_round(w5f), b5.astype(jnp.float32)),
    ]

    return {
        "in_features": in_features,
        "num_classes": num_classes,
        "f_pad": f_pad,
        "out_pad": out_pad,
        "weights": weights,
        "bias_packed": bias_packed,
        "bias_slices": bias_slices,
        "scale_slice": scale_slice,
        "ref_params": ref_params,
    }


def mlp_forward(x, prepped, *, tile_m=256):
    """x: (B, in_features) float; prepped: output of prepare_params."""
    B, F = x.shape
    assert F == prepped["in_features"]
    f_pad = prepped["f_pad"]
    out_pad = prepped["out_pad"]
    num_classes = prepped["num_classes"]
    w1, w2, w3, w4, w5 = prepped["weights"]
    bias_packed = prepped["bias_packed"]

    # Batch tiling: at most tile_m rows per grid step (tile_m=256 amortizes
    # the ~0.35us per-step overhead at large batch); at B=8 it is a single
    # 16-row tile / one grid step, so v7x's second TC is idle by design.
    tm = min(_round_up(B, BATCH_TILE_ALIGN), tile_m)
    b_pad = _round_up(B, tm)

    # bf16 activations halve x DMA; padded columns are zero (and so are W1's
    # padded rows), so results are exact.
    xp = jnp.zeros((b_pad, f_pad), jnp.bfloat16).at[:B, :F].set(
        x.astype(jnp.bfloat16))

    kernel = _make_mlp_kernel(prepped["bias_slices"], prepped["scale_slice"],
                              jnp.float32)

    # Advisory cost: this kernel is HBM-bound on the weight bytes.
    dims = [(f_pad, w1.shape[1]), (w1.shape[1], w2.shape[1]),
            (w2.shape[1], w3.shape[1]), (w3.shape[1], w4.shape[1]),
            (w4.shape[1], w5.shape[1])]
    flops = 2 * b_pad * sum(di * do for di, do in dims)
    weight_bytes = sum(int(w.size) * w.dtype.itemsize for w in (w1, w2, w3, w4, w5))
    bytes_accessed = (weight_bytes + int(bias_packed.size) * 4
                      + int(xp.size) * 2 + b_pad * out_pad * 4)
    cost = pl.CostEstimate(flops=flops, transcendentals=0,
                           bytes_accessed=bytes_accessed)

    resident = lambda i: (0, 0)  # weights/biases stay resident across batch tiles

    out = pl.pallas_call(
        kernel,
        out_shape=jax.ShapeDtypeStruct((b_pad, out_pad), jnp.float32),
        grid=(b_pad // tm,),
        in_specs=[
            pl.BlockSpec((tm, f_pad), lambda i: (i, 0)),
            pl.BlockSpec(w1.shape, resident),
            pl.BlockSpec(w2.shape, resident),
            pl.BlockSpec(w3.shape, resident),
            pl.BlockSpec(w4.shape, resident),
            pl.BlockSpec(w5.shape, resident),
            pl.BlockSpec(bias_packed.shape, resident),
        ],
        out_specs=pl.BlockSpec((tm, out_pad), lambda i: (i, 0)),
        compiler_params=pltpu.CompilerParams(
            dimension_semantics=("parallel",),
            vmem_limit_bytes=32 * 1024 * 1024),
        cost_estimate=cost,
    )(xp, w1, w2, w3, w4, w5, bias_packed)

    return out[:B, :num_classes]


def init_params(key, in_features=100, num_classes=2):
    """Deterministic Kaiming-uniform-style init (matches torch Linear shapes)."""
    dims = [in_features, 2048, 512, 128, 32, num_classes]
    params = []
    for i in range(len(dims) - 1):
        fan_in, fan_out = dims[i], dims[i + 1]
        key, kw, kb = jax.random.split(key, 3)
        bound = 1.0 / jnp.sqrt(fan_in)
        # Stored as (in, out) == transpose of torch's (out, in) weight.
        w = jax.random.uniform(kw, (fan_in, fan_out), jnp.float32, -bound, bound)
        b = jax.random.uniform(kb, (fan_out,), jnp.float32, -bound, bound)
        params.append((w, b))
    return params


def reference_forward(x, params):
    h = x.astype(jnp.float32)
    for i, (w, b) in enumerate(params):
        h = h @ w + b
        if i < len(params) - 1:
            h = jnp.maximum(h, 0.0)
    return h


if __name__ == "__main__":
    key = jax.random.PRNGKey(0)
    key, kx = jax.random.split(key)

    B, IN_FEATURES, NUM_CLASSES = 8, 100, 2
    x = jax.random.normal(kx, (B, IN_FEATURES), dtype=jnp.float32)
    params = init_params(key, IN_FEATURES, NUM_CLASSES)

    prepped = prepare_params(params)
    out = jax.block_until_ready(mlp_forward(x, prepped))

    # Reference uses the same weight rounding the kernel sees (bf16 weights,
    # int8-dequantized W2) in f32 math, so only the in-kernel bf16 activation
    # rounding contributes to the tolerance.
    ref = reference_forward(x, prepped["ref_params"])

    assert out.shape == (B, NUM_CLASSES)
    assert jnp.allclose(out, ref, atol=4e-2, rtol=4e-2), "mismatch vs reference"

    print("KERNEL_OK")
</pallas_src>

<mosaic_0001>
module attributes {stable_mosaic.version = 11 : i64} {
  func.func @kernel(%arg0: i32, %arg1: memref<16x128xbf16, #tpu.memory_space<vmem>>, %arg2: memref<128x2048xbf16, #tpu.memory_space<vmem>>, %arg3: memref<2048x512xi8, #tpu.memory_space<vmem>>, %arg4: memref<512x128xbf16, #tpu.memory_space<vmem>>, %arg5: memref<128x128xbf16, #tpu.memory_space<vmem>>, %arg6: memref<128x128xbf16, #tpu.memory_space<vmem>>, %arg7: memref<1x3456xf32, #tpu.memory_space<vmem>>, %arg8: memref<16x128xf32, #tpu.memory_space<vmem>>) attributes {dimension_semantics = [#tpu.dimension_semantics<parallel>], iteration_bounds = array<i64: 1>, scalar_prefetch = 0 : i64, scratch_operands = 0 : i64, tpu.core_type = #tpu.core_type<tc>, window_params = [{transform_indices = @transform_0, window_bounds = array<i64: 16, 128>}, {pipeline_mode = #tpu.pipeline_mode<synchronous>, transform_indices = @transform_1, window_bounds = array<i64: 128, 2048>}, {pipeline_mode = #tpu.pipeline_mode<synchronous>, transform_indices = @transform_2, window_bounds = array<i64: 2048, 512>}, {pipeline_mode = #tpu.pipeline_mode<synchronous>, transform_indices = @transform_3, window_bounds = array<i64: 512, 128>}, {pipeline_mode = #tpu.pipeline_mode<synchronous>, transform_indices = @transform_4, window_bounds = array<i64: 128, 128>}, {pipeline_mode = #tpu.pipeline_mode<synchronous>, transform_indices = @transform_5, window_bounds = array<i64: 128, 128>}, {pipeline_mode = #tpu.pipeline_mode<synchronous>, transform_indices = @transform_6, window_bounds = array<i64: 1, 3456>}, {transform_indices = @transform_7, window_bounds = array<i64: 16, 128>}]} {
    %c0 = arith.constant 0 : index
    %c0_0 = arith.constant 0 : index
    %0 = vector.load %arg1[%c0, %c0_0] : memref<16x128xbf16, #tpu.memory_space<vmem>>, vector<16x128xbf16>
    %c0_1 = arith.constant 0 : index
    %c0_2 = arith.constant 0 : index
    %1 = vector.load %arg2[%c0_1, %c0_2] : memref<128x2048xbf16, #tpu.memory_space<vmem>>, vector<128x2048xbf16>
    %cst = arith.constant dense<0.000000e+00> : vector<16x2048xf32>
    %2 = tpu.matmul %0, %1, %cst {dimension_numbers = #tpu.dot_dimension_numbers<[1], [0], [0], [1], [0, 0, 1, 1], [], []>} : vector<16x128xbf16>, vector<128x2048xbf16>, vector<16x2048xf32> -> vector<16x2048xf32>
    %c0_3 = arith.constant 0 : index
    %c0_4 = arith.constant 0 : index
    %3 = vector.load %arg7[%c0_3, %c0_4] : memref<1x3456xf32, #tpu.memory_space<vmem>>, vector<1x2048xf32>
    %4 = vector.broadcast %3 : vector<1x2048xf32> to vector<16x2048xf32>
    %5 = arith.addf %2, %4 : vector<16x2048xf32>
    %cst_5 = arith.constant 0.000000e+00 : f32
    %6 = vector.broadcast %cst_5 : f32 to vector<16x2048xf32>
    %7 = arith.maximumf %5, %6 : vector<16x2048xf32>
    %8 = arith.truncf %7 : vector<16x2048xf32> to vector<16x2048xbf16>
    %c0_6 = arith.constant 0 : index
    %c0_7 = arith.constant 0 : index
    %9 = vector.load %arg3[%c0_6, %c0_7] : memref<2048x512xi8, #tpu.memory_space<vmem>>, vector<2048x512xi8>
    %10 = arith.sitofp %9 : vector<2048x512xi8> to vector<2048x512xf32>
    %11 = arith.truncf %10 : vector<2048x512xf32> to vector<2048x512xbf16>
    %cst_8 = arith.constant dense<0.000000e+00> : vector<16x512xf32>
    %12 = tpu.matmul %8, %11, %cst_8 {dimension_numbers = #tpu.dot_dimension_numbers<[1], [0], [0], [1], [0, 0, 1, 1], [], []>} : vector<16x2048xbf16>, vector<2048x512xbf16>, vector<16x512xf32> -> vector<16x512xf32>
    %c0_9 = arith.constant 0 : index
    %c2944 = arith.constant 2944 : index
    %13 = vector.load %arg7[%c0_9, %c2944] : memref<1x3456xf32, #tpu.memory_space<vmem>>, vector<1x512xf32>
    %14 = vector.broadcast %13 : vector<1x512xf32> to vector<16x512xf32>
    %15 = arith.mulf %12, %14 : vector<16x512xf32>
    %c0_10 = arith.constant 0 : index
    %c2048 = arith.constant 2048 : index
    %16 = vector.load %arg7[%c0_10, %c2048] : memref<1x3456xf32, #tpu.memory_space<vmem>>, vector<1x512xf32>
    %17 = vector.broadcast %16 : vector<1x512xf32> to vector<16x512xf32>
    %18 = arith.addf %15, %17 : vector<16x512xf32>
    %cst_11 = arith.constant 0.000000e+00 : f32
    %19 = vector.broadcast %cst_11 : f32 to vector<16x512xf32>
    %20 = arith.maximumf %18, %19 : vector<16x512xf32>
    %21 = arith.truncf %20 : vector<16x512xf32> to vector<16x512xbf16>
    %c0_12 = arith.constant 0 : index
    %c0_13 = arith.constant 0 : index
    %22 = vector.load %arg4[%c0_12, %c0_13] : memref<512x128xbf16, #tpu.memory_space<vmem>>, vector<512x128xbf16>
    %cst_14 = arith.constant dense<0.000000e+00> : vector<16x128xf32>
    %23 = tpu.matmul %21, %22, %cst_14 {dimension_numbers = #tpu.dot_dimension_numbers<[1], [0], [0], [1], [0, 0, 1, 1], [], []>} : vector<16x512xbf16>, vector<512x128xbf16>, vector<16x128xf32> -> vector<16x128xf32>
    %c0_15 = arith.constant 0 : index
    %c2560 = arith.constant 2560 : index
    %24 = vector.load %arg7[%c0_15, %c2560] : memref<1x3456xf32, #tpu.memory_space<vmem>>, vector<1x128xf32>
    %25 = vector.broadcast %24 : vector<1x128xf32> to vector<16x128xf32>
    %26 = arith.addf %23, %25 : vector<16x128xf32>
    %cst_16 = arith.constant 0.000000e+00 : f32
    %27 = vector.broadcast %cst_16 : f32 to vector<16x128xf32>
    %28 = arith.maximumf %26, %27 : vector<16x128xf32>
    %29 = arith.truncf %28 : vector<16x128xf32> to vector<16x128xbf16>
    %c0_17 = arith.constant 0 : index
    %c0_18 = arith.constant 0 : index
    %30 = vector.load %arg5[%c0_17, %c0_18] : memref<128x128xbf16, #tpu.memory_space<vmem>>, vector<128x128xbf16>
    %cst_19 = arith.constant dense<0.000000e+00> : vector<16x128xf32>
    %31 = tpu.matmul %29, %30, %cst_19 {dimension_numbers = #tpu.dot_dimension_numbers<[1], [0], [0], [1], [0, 0, 1, 1], [], []>} : vector<16x128xbf16>, vector<128x128xbf16>, vector<16x128xf32> -> vector<16x128xf32>
    %c0_20 = arith.constant 0 : index
    %c2688 = arith.constant 2688 : index
    %32 = vector.load %arg7[%c0_20, %c2688] : memref<1x3456xf32, #tpu.memory_space<vmem>>, vector<1x128xf32>
    %33 = vector.broadcast %32 : vector<1x128xf32> to vector<16x128xf32>
    %34 = arith.addf %31, %33 : vector<16x128xf32>
    %cst_21 = arith.constant 0.000000e+00 : f32
    %35 = vector.broadcast %cst_21 : f32 to vector<16x128xf32>
    %36 = arith.maximumf %34, %35 : vector<16x128xf32>
    %37 = arith.truncf %36 : vector<16x128xf32> to vector<16x128xbf16>
    %c0_22 = arith.constant 0 : index
    %c0_23 = arith.constant 0 : index
    %38 = vector.load %arg6[%c0_22, %c0_23] : memref<128x128xbf16, #tpu.memory_space<vmem>>, vector<128x128xbf16>
    %cst_24 = arith.constant dense<0.000000e+00> : vector<16x128xf32>
    %39 = tpu.matmul %37, %38, %cst_24 {dimension_numbers = #tpu.dot_dimension_numbers<[1], [0], [0], [1], [0, 0, 1, 1], [], []>} : vector<16x128xbf16>, vector<128x128xbf16>, vector<16x128xf32> -> vector<16x128xf32>
    %c0_25 = arith.constant 0 : index
    %c2816 = arith.constant 2816 : index
    %40 = vector.load %arg7[%c0_25, %c2816] : memref<1x3456xf32, #tpu.memory_space<vmem>>, vector<1x128xf32>
    %41 = vector.broadcast %40 : vector<1x128xf32> to vector<16x128xf32>
    %42 = arith.addf %39, %41 : vector<16x128xf32>
    %c0_26 = arith.constant 0 : index
    %c0_27 = arith.constant 0 : index
    %43 = vector.load %arg8[%c0_26, %c0_27] : memref<16x128xf32, #tpu.memory_space<vmem>>, vector<16x128xf32>
    tpu.vector_store %arg8[%c0_26, %c0_27], %42 {strides = array<i32>} : memref<16x128xf32, #tpu.memory_space<vmem>>, vector<16x128xf32>,
    return
  }
  func.func @transform_0(%arg0: i32) -> (i32, i32) {
    %c0_i32 = arith.constant 0 : i32
    %c0_i32_0 = arith.constant 0 : i32
    return %arg0, %c0_i32 : i32, i32
  }
  func.func @transform_1(%arg0: i32) -> (i32, i32) {
    %c0_i32 = arith.constant 0 : i32
    %c0_i32_0 = arith.constant 0 : i32
    %c0_i32_1 = arith.constant 0 : i32
    return %c0_i32, %c0_i32_0 : i32, i32
  }
  func.func @transform_2(%arg0: i32) -> (i32, i32) {
    %c0_i32 = arith.constant 0 : i32
    %c0_i32_0 = arith.constant 0 : i32
    %c0_i32_1 = arith.constant 0 : i32
    return %c0_i32, %c0_i32_0 : i32, i32
  }
  func.func @transform_3(%arg0: i32) -> (i32, i32) {
    %c0_i32 = arith.constant 0 : i32
    %c0_i32_0 = arith.constant 0 : i32
    %c0_i32_1 = arith.constant 0 : i32
    return %c0_i32, %c0_i32_0 : i32, i32
  }
  func.func @transform_4(%arg0: i32) -> (i32, i32) {
    %c0_i32 = arith.constant 0 : i32
    %c0_i32_0 = arith.constant 0 : i32
    %c0_i32_1 = arith.constant 0 : i32
    return %c0_i32, %c0_i32_0 : i32, i32
  }
  func.func @transform_5(%arg0: i32) -> (i32, i32) {
    %c0_i32 = arith.constant 0 : i32
    %c0_i32_0 = arith.constant 0 : i32
    %c0_i32_1 = arith.constant 0 : i32
    return %c0_i32, %c0_i32_0 : i32, i32
  }
  func.func @transform_6(%arg0: i32) -> (i32, i32) {
    %c0_i32 = arith.constant 0 : i32
    %c0_i32_0 = arith.constant 0 : i32
    %c0_i32_1 = arith.constant 0 : i32
    return %c0_i32, %c0_i32_0 : i32, i32
  }
  func.func @transform_7(%arg0: i32) -> (i32, i32) {
    %c0_i32 = arith.constant 0 : i32
    %c0_i32_0 = arith.constant 0 : i32
    return %arg0, %c0_i32 : i32, i32
  }
}

</mosaic_0001>

<llo_original>
// kernel: tpu_custom_call.1
$region0: #{tpu_custom_call.1}
  #allocation0 [shape = 'u32[]', space=smem, size = 0x4, offset = 0x4, fixed_abs, tag = 'smem constant byte address 0x4 - core index']
  #allocation1 [shape = 'u32[144,128]{1,0:T(1,128)}', space=vmem, size = 0x12000, scoped, tag = 'internal scratch']
  %s0 = inlined_call_operand.hbm [shape: bf16[16,128], index: 0, kind: input, shape index: {}]
  %s1 = inlined_call_operand.hbm [shape: bf16[128,2048], index: 1, kind: input, shape index: {}]
  %s2 = inlined_call_operand.hbm [shape: s8[2048,512], index: 2, kind: input, shape index: {}]
  %s3 = inlined_call_operand.hbm [shape: bf16[512,128], index: 3, kind: input, shape index: {}]
  %s4 = inlined_call_operand.hbm [shape: bf16[128,128], index: 4, kind: input, shape index: {}]
  %s5 = inlined_call_operand.hbm [shape: bf16[128,128], index: 5, kind: input, shape index: {}]
  %s6 = inlined_call_operand.hbm [shape: f32[1,3456], index: 6, kind: input, shape index: {}]
  %s7 = inlined_call_operand.hbm [shape: f32[16,128], index: 7, kind: output, shape index: {}]
  %s8 = sld [smem:[#allocation0]]
  $region66: #{tpu_custom_call.1} parent=0
    _
  %s10 = ssub.s32 1, %s8
  %s11 = scalar_select 0, %s10, %s8
  $region1: #{tpu_custom_call.1} parent=0
    #allocation2 [shape = 'u8[4096]{0}', space=vmem, size = 0x1000, scoped, tag = 'input window, operand 0, single buffered']
    #allocation3 [shape = 's32[1]{0}', space=sflag, size = 0x4, scoped, tag = 'scoped memory for tpu_custom_call.1']
    #allocation4 [shape = 's32[1]{0}', space=sflag, size = 0x4, scoped, tag = 'scoped memory for tpu_custom_call.1']
    #allocation5 [shape = 'u8[524288]{0}', space=vmem, size = 0x80000, scoped, tag = 'input window, operand 1, single buffered']
    #allocation6 [shape = 's32[1]{0}', space=sflag, size = 0x4, scoped, tag = 'scoped memory for tpu_custom_call.1']
    #allocation7 [shape = 'u8[1048576]{0}', space=vmem, size = 0x100000, scoped, tag = 'input window, operand 2, single buffered']
    #allocation8 [shape = 'u8[131072]{0}', space=vmem, size = 0x20000, scoped, tag = 'input window, operand 3, single buffered']
    #allocation9 [shape = 's32[1]{0}', space=sflag, size = 0x4, scoped, tag = 'scoped memory for tpu_custom_call.1']
    #allocation10 [shape = 'u8[32768]{0}', space=vmem, size = 0x8000, scoped, tag = 'input window, operand 4, single buffered']
    #allocation11 [shape = 'u8[32768]{0}', space=vmem, size = 0x8000, scoped, tag = 'input window, operand 5, single buffered']
    #allocation12 [shape = 's32[1]{0}', space=sflag, size = 0x4, scoped, tag = 'scoped memory for tpu_custom_call.1']
    #allocation13 [shape = 'u8[13824]{0}', space=vmem, size = 0x3800, scoped, tag = 'input window, operand 6, single buffered']
    #allocation14 [shape = 'u8[8192]{0}', space=vmem, size = 0x2000, scoped, tag = 'output window, operand 0, single buffered']
    %12 = vsyncpa [#allocation3], 0
    %13 = vsyncpa [#allocation6], 0
    %14 = vsyncpa [#allocation9], 0
    %15 = vsyncpa [#allocation12], 0
    %16 = vsyncpa [#allocation4], 0
    // Predicated region
    $region2: #{tpu_custom_call.1} parent=1 // pred_check
      _
    $region3: #{tpu_custom_call.1} parent=1 // pred_check_branch
      %18 = sbr.rel (0) target = $region5
    $region4: #{tpu_custom_call.1} parent=1 // pred_region
      %s20 = ssub.s32 128, 128
      %21 = vsyncadd [#allocation3], %s20
      %s22 = sshll.u32 [#allocation2], 4
      %s23 = int_to_ptr.vmem [resolvable:$true] %s22
      %28 = dma.hbm_to_vmem [thread:$0]  %s0, 128, %s23, [#allocation3], 64, 64, 4
    $region5: #{tpu_custom_call.1} parent=1 // pred_fallthru
      _
    // Predicated region
    $region6: #{tpu_custom_call.1} parent=1 // pred_check
      _
    $region7: #{tpu_custom_call.1} parent=1 // pred_check_branch
      %30 = sbr.rel (0) target = $region9
    $region8: #{tpu_custom_call.1} parent=1 // pred_region
      %s32 = ssub.s32 16384, 16384
      %33 = vsyncadd [#allocation6], %s32
      %s34 = sshll.u32 [#allocation5], 4
      %s35 = int_to_ptr.vmem [resolvable:$true] %s34
      %40 = dma.hbm_to_vmem [thread:$0]  %s1, 16384, %s35, [#allocation6], 1024, 1024, 64
    $region9: #{tpu_custom_call.1} parent=1 // pred_fallthru
      _
    // Predicated region
    $region10: #{tpu_custom_call.1} parent=1 // pred_check
      _
    $region11: #{tpu_custom_call.1} parent=1 // pred_check_branch
      %42 = sbr.rel (0) target = $region13
    $region12: #{tpu_custom_call.1} parent=1 // pred_region
      %s44 = ssub.s32 32768, 32768
      %45 = vsyncadd [#allocation6], %s44
      %s46 = sshll.u32 [#allocation7], 4
      %s47 = int_to_ptr.vmem [resolvable:$true] %s46
      %52 = dma.hbm_to_vmem [thread:$0]  %s2, 32768, %s47, [#allocation6], 512, 512, 32
    $region13: #{tpu_custom_call.1} parent=1 // pred_fallthru
      _
    // Predicated region
    $region14: #{tpu_custom_call.1} parent=1 // pred_check
      _
    $region15: #{tpu_custom_call.1} parent=1 // pred_check_branch
      %54 = sbr.rel (0) target = $region17
    $region16: #{tpu_custom_call.1} parent=1 // pred_region
      %s56 = ssub.s32 4096, 4096
      %57 = vsyncadd [#allocation9], %s56
      %s58 = sshll.u32 [#allocation8], 4
      %s59 = int_to_ptr.vmem [resolvable:$true] %s58
      %64 = dma.hbm_to_vmem [thread:$0]  %s3, 4096, %s59, [#allocation9], 64, 64, 4
    $region17: #{tpu_custom_call.1} parent=1 // pred_fallthru
      _
    // Predicated region
    $region18: #{tpu_custom_call.1} parent=1 // pred_check
      _
    $region19: #{tpu_custom_call.1} parent=1 // pred_check_branch
      %66 = sbr.rel (0) target = $region21
    $region20: #{tpu_custom_call.1} parent=1 // pred_region
      %s68 = ssub.s32 1024, 1024
      %69 = vsyncadd [#allocation9], %s68
      %s70 = sshll.u32 [#allocation10], 4
      %s71 = int_to_ptr.vmem [resolvable:$true] %s70
      %76 = dma.hbm_to_vmem [thread:$0]  %s4, 1024, %s71, [#allocation9], 64, 64, 4
    $region21: #{tpu_custom_call.1} parent=1 // pred_fallthru
      _
    // Predicated region
    $region22: #{tpu_custom_call.1} parent=1 // pred_check
      _
    $region23: #{tpu_custom_call.1} parent=1 // pred_check_branch
      %78 = sbr.rel (0) target = $region25
    $region24: #{tpu_custom_call.1} parent=1 // pred_region
      %s80 = ssub.s32 1024, 1024
      %81 = vsyncadd [#allocation12], %s80
      %s82 = sshll.u32 [#allocation11], 4
      %s83 = int_to_ptr.vmem [resolvable:$true] %s82
      %88 = dma.hbm_to_vmem [thread:$0]  %s5, 1024, %s83, [#allocation12], 64, 64, 4
    $region25: #{tpu_custom_call.1} parent=1 // pred_fallthru
      _
    // Predicated region
    $region26: #{tpu_custom_call.1} parent=1 // pred_check
      _
    $region27: #{tpu_custom_call.1} parent=1 // pred_check_branch
      %90 = sbr.rel (0) target = $region29
    $region28: #{tpu_custom_call.1} parent=1 // pred_region
      %s92 = ssub.s32 432, 432
      %93 = vsyncadd [#allocation12], %s92
      %s95 = sshll.u32 [#allocation13], 4
      %s96 = int_to_ptr.vmem [resolvable:$true] %s95
      %98 = dma.hbm_to_vmem [thread:$0]  %s6, 432, %s96, [#allocation12]
    $region29: #{tpu_custom_call.1} parent=1 // pred_fallthru
      _
    // Predicated region
    $region30: #{tpu_custom_call.1} parent=1 // pred_check
      _
    $region31: #{tpu_custom_call.1} parent=1 // pred_check_branch
      %100 = sbr.rel (0) target = $region33
    $region32: #{tpu_custom_call.1} parent=1 // pred_region
      %101 = dma.done [#allocation3], 128
    $region33: #{tpu_custom_call.1} parent=1 // pred_fallthru
      _
    // Predicated region
    $region34: #{tpu_custom_call.1} parent=1 // pred_check
      _
    $region35: #{tpu_custom_call.1} parent=1 // pred_check_branch
      %103 = sbr.rel (0) target = $region37
    $region36: #{tpu_custom_call.1} parent=1 // pred_region
      %104 = dma.done [#allocation6], 16384
    $region37: #{tpu_custom_call.1} parent=1 // pred_fallthru
      _
    // Predicated region
    $region38: #{tpu_custom_call.1} parent=1 // pred_check
      _
    $region39: #{tpu_custom_call.1} parent=1 // pred_check_branch
      %106 = sbr.rel (0) target = $region41
    $region40: #{tpu_custom_call.1} parent=1 // pred_region
      %107 = dma.done [#allocation6], 32768
    $region41: #{tpu_custom_call.1} parent=1 // pred_fallthru
      _
    // Predicated region
    $region42: #{tpu_custom_call.1} parent=1 // pred_check
      _
    $region43: #{tpu_custom_call.1} parent=1 // pred_check_branch
      %109 = sbr.rel (0) target = $region45
    $region44: #{tpu_custom_call.1} parent=1 // pred_region
      %110 = dma.done [#allocation9], 4096
    $region45: #{tpu_custom_call.1} parent=1 // pred_fallthru
      _
    // Predicated region
    $region46: #{tpu_custom_call.1} parent=1 // pred_check
      _
    $region47: #{tpu_custom_call.1} parent=1 // pred_check_branch
      %112 = sbr.rel (0) target = $region49
    $region48: #{tpu_custom_call.1} parent=1 // pred_region
      %113 = dma.done [#allocation9], 1024
    $region49: #{tpu_custom_call.1} parent=1 // pred_fallthru
      _
    // Predicated region
    $region50: #{tpu_custom_call.1} parent=1 // pred_check
      _
    $region51: #{tpu_custom_call.1} parent=1 // pred_check_branch
      %115 = sbr.rel (0) target = $region53
    $region52: #{tpu_custom_call.1} parent=1 // pred_region
      %116 = dma.done [#allocation12], 1024
    $region53: #{tpu_custom_call.1} parent=1 // pred_fallthru
      _
    // Predicated region
    $region54: #{tpu_custom_call.1} parent=1 // pred_check
      _
    $region55: #{tpu_custom_call.1} parent=1 // pred_check_branch
      %118 = sbr.rel (0) target = $region57
    $region56: #{tpu_custom_call.1} parent=1 // pred_region
      %119 = dma.done [#allocation12], 432
    $region57: #{tpu_custom_call.1} parent=1 // pred_fallthru
      _
    %v121 = vld [vmem:[#allocation2] sm:$0xf]
    %v122 = vld [vmem:[#allocation2 + $0x4] sm:$0xf]
    %v123 = vld [vmem:[#allocation5] sm:$0xff]
    %v124 = vld [vmem:[#allocation5 + $0x8] sm:$0xff]
    %v125 = vld [vmem:[#allocation5 + $0x10] sm:$0xff]
    %v126 = vld [vmem:[#allocation5 + $0x18] sm:$0xff]
    %v127 = vld [vmem:[#allocation5 + $0x20] sm:$0xff]
    %v128 = vld [vmem:[#allocation5 + $0x28] sm:$0xff]
    %v129 = vld [vmem:[#allocation5 + $0x30] sm:$0xff]
    %v130 = vld [vmem:[#allocation5 + $0x38] sm:$0xff]
    %v131 = vld [vmem:[#allocation5 + $0x40] sm:$0xff]
    %v132 = vld [vmem:[#allocation5 + $0x48] sm:$0xff]
    %v133 = vld [vmem:[#allocation5 + $0x50] sm:$0xff]
    %v134 = vld [vmem:[#allocation5 + $0x58] sm:$0xff]
    %v135 = vld [vmem:[#allocation5 + $0x60] sm:$0xff]
    %v136 = vld [vmem:[#allocation5 + $0x68] sm:$0xff]
    %v137 = vld [vmem:[#allocation5 + $0x70] sm:$0xff]
    %v138 = vld [vmem:[#allocation5 + $0x78] sm:$0xff]
    %v139 = vld [vmem:[#allocation5 + $0x80] sm:$0xff]
    %v140 = vld [vmem:[#allocation5 + $0x88] sm:$0xff]
    %v141 = vld [vmem:[#allocation5 + $0x90] sm:$0xff]
    %v142 = vld [vmem:[#allocation5 + $0x98] sm:$0xff]
    %v143 = vld [vmem:[#allocation5 + $0xa0] sm:$0xff]
    %v144 = vld [vmem:[#allocation5 + $0xa8] sm:$0xff]
    %v145 = vld [vmem:[#allocation5 + $0xb0] sm:$0xff]
    %v146 = vld [vmem:[#allocation5 + $0xb8] sm:$0xff]
    %v147 = vld [vmem:[#allocation5 + $0xc0] sm:$0xff]
    %v148 = vld [vmem:[#allocation5 + $0xc8] sm:$0xff]
    %v149 = vld [vmem:[#allocation5 + $0xd0] sm:$0xff]
    %v150 = vld [vmem:[#allocation5 + $0xd8] sm:$0xff]
    %v151 = vld [vmem:[#allocation5 + $0xe0] sm:$0xff]
    %v152 = vld [vmem:[#allocation5 + $0xe8] sm:$0xff]
    %v153 = vld [vmem:[#allocation5 + $0xf0] sm:$0xff]
    %v154 = vld [vmem:[#allocation5 + $0xf8] sm:$0xff]
    %v155 = vld [vmem:[#allocation5 + $0x100] sm:$0xff]
    %v156 = vld [vmem:[#allocation5 + $0x108] sm:$0xff]
    %v157 = vld [vmem:[#allocation5 + $0x110] sm:$0xff]
    %v158 = vld [vmem:[#allocation5 + $0x118] sm:$0xff]
    %v159 = vld [vmem:[#allocation5 + $0x120] sm:$0xff]
    %v160 = vld [vmem:[#allocation5 + $0x128] sm:$0xff]
    %v161 = vld [vmem:[#allocation5 + $0x130] sm:$0xff]
    %v162 = vld [vmem:[#allocation5 + $0x138] sm:$0xff]
    %v163 = vld [vmem:[#allocation5 + $0x140] sm:$0xff]
    %v164 = vld [vmem:[#allocation5 + $0x148] sm:$0xff]
    %v165 = vld [vmem:[#allocation5 + $0x150] sm:$0xff]
    %v166 = vld [vmem:[#allocation5 + $0x158] sm:$0xff]
    %v167 = vld [vmem:[#allocation5 + $0x160] sm:$0xff]
    %v168 = vld [vmem:[#allocation5 + $0x168] sm:$0xff]
    %v169 = vld [vmem:[#allocation5 + $0x170] sm:$0xff]
    %v170 = vld [vmem:[#allocation5 + $0x178] sm:$0xff]
    %v171 = vld [vmem:[#allocation5 + $0x180] sm:$0xff]
    %v172 = vld [vmem:[#allocation5 + $0x188] sm:$0xff]
    %v173 = vld [vmem:[#allocation5 + $0x190] sm:$0xff]
    %v174 = vld [vmem:[#allocation5 + $0x198] sm:$0xff]
    %v175 = vld [vmem:[#allocation5 + $0x1a0] sm:$0xff]
    %v176 = vld [vmem:[#allocation5 + $0x1a8] sm:$0xff]
    %v177 = vld [vmem:[#allocation5 + $0x1b0] sm:$0xff]
    %v178 = vld [vmem:[#allocation5 + $0x1b8] sm:$0xff]
    %v179 = vld [vmem:[#allocation5 + $0x1c0] sm:$0xff]
    %v180 = vld [vmem:[#allocation5 + $0x1c8] sm:$0xff]
    %v181 = vld [vmem:[#allocation5 + $0x1d0] sm:$0xff]
    %v182 = vld [vmem:[#allocation5 + $0x1d8] sm:$0xff]
    %v183 = vld [vmem:[#allocation5 + $0x1e0] sm:$0xff]
    %v184 = vld [vmem:[#allocation5 + $0x1e8] sm:$0xff]
    %v185 = vld [vmem:[#allocation5 + $0x1f0] sm:$0xff]
    %v186 = vld [vmem:[#allocation5 + $0x1f8] sm:$0xff]
    %v187 = vld [vmem:[#allocation5 + $0x200] sm:$0xff]
    %v188 = vld [vmem:[#allocation5 + $0x208] sm:$0xff]
    %v189 = vld [vmem:[#allocation5 + $0x210] sm:$0xff]
    %v190 = vld [vmem:[#allocation5 + $0x218] sm:$0xff]
    %v191 = vld [vmem:[#allocation5 + $0x220] sm:$0xff]
    %v192 = vld [vmem:[#allocation5 + $0x228] sm:$0xff]
    %v193 = vld [vmem:[#allocation5 + $0x230] sm:$0xff]
    %v194 = vld [vmem:[#allocation5 + $0x238] sm:$0xff]
    %v195 = vld [vmem:[#allocation5 + $0x240] sm:$0xff]
    %v196 = vld [vmem:[#allocation5 + $0x248] sm:$0xff]
    %v197 = vld [vmem:[#allocation5 + $0x250] sm:$0xff]
    %v198 = vld [vmem:[#allocation5 + $0x258] sm:$0xff]
    %v199 = vld [vmem:[#allocation5 + $0x260] sm:$0xff]
    %v200 = vld [vmem:[#allocation5 + $0x268] sm:$0xff]
    %v201 = vld [vmem:[#allocation5 + $0x270] sm:$0xff]
    %v202 = vld [vmem:[#allocation5 + $0x278] sm:$0xff]
    %v203 = vld [vmem:[#allocation5 + $0x280] sm:$0xff]
    %v204 = vld [vmem:[#allocation5 + $0x288] sm:$0xff]
    %v205 = vld [vmem:[#allocation5 + $0x290] sm:$0xff]
    %v206 = vld [vmem:[#allocation5 + $0x298] sm:$0xff]
    %v207 = vld [vmem:[#allocation5 + $0x2a0] sm:$0xff]
    %v208 = vld [vmem:[#allocation5 + $0x2a8] sm:$0xff]
    %v209 = vld [vmem:[#allocation5 + $0x2b0] sm:$0xff]
    %v210 = vld [vmem:[#allocation5 + $0x2b8] sm:$0xff]
    %v211 = vld [vmem:[#allocation5 + $0x2c0] sm:$0xff]
    %v212 = vld [vmem:[#allocation5 + $0x2c8] sm:$0xff]
    %v213 = vld [vmem:[#allocation5 + $0x2d0] sm:$0xff]
    %v214 = vld [vmem:[#allocation5 + $0x2d8] sm:$0xff]
    %v215 = vld [vmem:[#allocation5 + $0x2e0] sm:$0xff]
    %v216 = vld [vmem:[#allocation5 + $0x2e8] sm:$0xff]
    %v217 = vld [vmem:[#allocation5 + $0x2f0] sm:$0xff]
    %v218 = vld [vmem:[#allocation5 + $0x2f8] sm:$0xff]
    %v219 = vld [vmem:[#allocation5 + $0x300] sm:$0xff]
    %v220 = vld [vmem:[#allocation5 + $0x308] sm:$0xff]
    %v221 = vld [vmem:[#allocation5 + $0x310] sm:$0xff]
    %v222 = vld [vmem:[#allocation5 + $0x318] sm:$0xff]
    %v223 = vld [vmem:[#allocation5 + $0x320] sm:$0xff]
    %v224 = vld [vmem:[#allocation5 + $0x328] sm:$0xff]
    %v225 = vld [vmem:[#allocation5 + $0x330] sm:$0xff]
    %v226 = vld [vmem:[#allocation5 + $0x338] sm:$0xff]
    %v227 = vld [vmem:[#allocation5 + $0x340] sm:$0xff]
    %v228 = vld [vmem:[#allocation5 + $0x348] sm:$0xff]
    %v229 = vld [vmem:[#allocation5 + $0x350] sm:$0xff]
    %v230 = vld [vmem:[#allocation5 + $0x358] sm:$0xff]
    %v231 = vld [vmem:[#allocation5 + $0x360] sm:$0xff]
    %v232 = vld [vmem:[#allocation5 + $0x368] sm:$0xff]
    %v233 = vld [vmem:[#allocation5 + $0x370] sm:$0xff]
    %v234 = vld [vmem:[#allocation5 + $0x378] sm:$0xff]
    %v235 = vld [vmem:[#allocation5 + $0x380] sm:$0xff]
    %v236 = vld [vmem:[#allocation5 + $0x388] sm:$0xff]
    %v237 = vld [vmem:[#allocation5 + $0x390] sm:$0xff]
    %v238 = vld [vmem:[#allocation5 + $0x398] sm:$0xff]
    %v239 = vld [vmem:[#allocation5 + $0x3a0] sm:$0xff]
    %v240 = vld [vmem:[#allocation5 + $0x3a8] sm:$0xff]
    %v241 = vld [vmem:[#allocation5 + $0x3b0] sm:$0xff]
    %v242 = vld [vmem:[#allocation5 + $0x3b8] sm:$0xff]
    %v243 = vld [vmem:[#allocation5 + $0x3c0] sm:$0xff]
    %v244 = vld [vmem:[#allocation5 + $0x3c8] sm:$0xff]
    %v245 = vld [vmem:[#allocation5 + $0x3d0] sm:$0xff]
    %v246 = vld [vmem:[#allocation5 + $0x3d8] sm:$0xff]
    %v247 = vld [vmem:[#allocation5 + $0x3e0] sm:$0xff]
    %v248 = vld [vmem:[#allocation5 + $0x3e8] sm:$0xff]
    %v249 = vld [vmem:[#allocation5 + $0x3f0] sm:$0xff]
    %v250 = vld [vmem:[#allocation5 + $0x3f8] sm:$0xff]
    %v251 = vld [vmem:[#allocation13] sm:$0xff]
    %v252 = vld [vmem:[#allocation13 + $0x8] sm:$0xff]
    %v255 = vlaneseq
    %v256 = vshrl.u32 %v255, 7
    %v257 = vsub.s32 0, %v256
    %v258 = vrot.slane %v251, %v257
    %v259 = vlaneseq
    %v260 = vshrl.u32 %v259, 7
    %v261 = vsub.s32 1, %v260
    %v262 = vrot.slane %v251, %v261
    %v263 = vlaneseq
    %v264 = vshrl.u32 %v263, 7
    %v265 = vsub.s32 2, %v264
    %v266 = vrot.slane %v251, %v265
    %v267 = vlaneseq
    %v268 = vshrl.u32 %v267, 7
    %v269 = vsub.s32 3, %v268
    %v270 = vrot.slane %v251, %v269
    %v271 = vlaneseq
    %v272 = vshrl.u32 %v271, 7
    %v273 = vsub.s32 4, %v272
    %v274 = vrot.slane %v251, %v273
    %v275 = vlaneseq
    %v276 = vshrl.u32 %v275, 7
    %v277 = vsub.s32 5, %v276
    %v278 = vrot.slane %v251, %v277
    %v279 = vlaneseq
    %v280 = vshrl.u32 %v279, 7
    %v281 = vsub.s32 6, %v280
    %v282 = vrot.slane %v251, %v281
    %v283 = vlaneseq
    %v284 = vshrl.u32 %v283, 7
    %v285 = vsub.s32 7, %v284
    %v286 = vrot.slane %v251, %v285
    %v287 = vlaneseq
    %v288 = vshrl.u32 %v287, 7
    %v289 = vsub.s32 0, %v288
    %v290 = vrot.slane %v252, %v289
    %v291 = vlaneseq
    %v292 = vshrl.u32 %v291, 7
    %v293 = vsub.s32 1, %v292
    %v294 = vrot.slane %v252, %v293
    %v295 = vlaneseq
    %v296 = vshrl.u32 %v295, 7
    %v297 = vsub.s32 2, %v296
    %v298 = vrot.slane %v252, %v297
    %v299 = vlaneseq
    %v300 = vshrl.u32 %v299, 7
    %v301 = vsub.s32 3, %v300
    %v302 = vrot.slane %v252, %v301
    %v303 = vlaneseq
    %v304 = vshrl.u32 %v303, 7
    %v305 = vsub.s32 4, %v304
    %v306 = vrot.slane %v252, %v305
    %v307 = vlaneseq
    %v308 = vshrl.u32 %v307, 7
    %v309 = vsub.s32 5, %v308
    %v310 = vrot.slane %v252, %v309
    %v311 = vlaneseq
    %v312 = vshrl.u32 %v311, 7
    %v313 = vsub.s32 6, %v312
    %v314 = vrot.slane %v252, %v313
    %v315 = vlaneseq
    %v316 = vshrl.u32 %v315, 7
    %v317 = vsub.s32 7, %v316
    %v318 = vrot.slane %v252, %v317
    %v337 = vunpack.c.l.b16 %v121
    %v338 = vunpack.c.l.b16 %v122
    %v339 = vpack.c.b16 %v338, %v337
    %v469 = vunpack.c.l.b16 %v123
    %v470 = vunpack.c.h.b16 %v123
    %v471 = vunpack.c.l.b16 %v124
    %v472 = vunpack.c.h.b16 %v124
    %v473 = vunpack.c.l.b16 %v125
    %v474 = vunpack.c.h.b16 %v125
    %v475 = vunpack.c.l.b16 %v126
    %v476 = vunpack.c.h.b16 %v126
    %v477 = vunpack.c.l.b16 %v127
    %v478 = vunpack.c.h.b16 %v127
    %v479 = vunpack.c.l.b16 %v128
    %v480 = vunpack.c.h.b16 %v128
    %v481 = vunpack.c.l.b16 %v129
    %v482 = vunpack.c.h.b16 %v129
    %v483 = vunpack.c.l.b16 %v130
    %v484 = vunpack.c.h.b16 %v130
    %v485 = vunpack.c.l.b16 %v131
    %v486 = vunpack.c.h.b16 %v131
    %v487 = vunpack.c.l.b16 %v132
    %v488 = vunpack.c.h.b16 %v132
    %v489 = vunpack.c.l.b16 %v133
    %v490 = vunpack.c.h.b16 %v133
    %v491 = vunpack.c.l.b16 %v134
    %v492 = vunpack.c.h.b16 %v134
    %v493 = vunpack.c.l.b16 %v135
    %v494 = vunpack.c.h.b16 %v135
    %v495 = vunpack.c.l.b16 %v136
    %v496 = vunpack.c.h.b16 %v136
    %v497 = vunpack.c.l.b16 %v137
    %v498 = vunpack.c.h.b16 %v137
    %v499 = vunpack.c.l.b16 %v138
    %v500 = vunpack.c.h.b16 %v138
    %v501 = vunpack.c.l.b16 %v139
    %v502 = vunpack.c.h.b16 %v139
    %v503 = vunpack.c.l.b16 %v140
    %v504 = vunpack.c.h.b16 %v140
    %v505 = vunpack.c.l.b16 %v141
    %v506 = vunpack.c.h.b16 %v141
    %v507 = vunpack.c.l.b16 %v142
    %v508 = vunpack.c.h.b16 %v142
    %v509 = vunpack.c.l.b16 %v143
    %v510 = vunpack.c.h.b16 %v143
    %v511 = vunpack.c.l.b16 %v144
    %v512 = vunpack.c.h.b16 %v144
    %v513 = vunpack.c.l.b16 %v145
    %v514 = vunpack.c.h.b16 %v145
    %v515 = vunpack.c.l.b16 %v146
    %v516 = vunpack.c.h.b16 %v146
    %v517 = vunpack.c.l.b16 %v147
    %v518 = vunpack.c.h.b16 %v147
    %v519 = vunpack.c.l.b16 %v148
    %v520 = vunpack.c.h.b16 %v148
    %v521 = vunpack.c.l.b16 %v149
    %v522 = vunpack.c.h.b16 %v149
    %v523 = vunpack.c.l.b16 %v150
    %v524 = vunpack.c.h.b16 %v150
    %v525 = vunpack.c.l.b16 %v151
    %v526 = vunpack.c.h.b16 %v151
    %v527 = vunpack.c.l.b16 %v152
    %v528 = vunpack.c.h.b16 %v152
    %v529 = vunpack.c.l.b16 %v153
    %v530 = vunpack.c.h.b16 %v153
    %v531 = vunpack.c.l.b16 %v154
    %v532 = vunpack.c.h.b16 %v154
    %v533 = vunpack.c.l.b16 %v155
    %v534 = vunpack.c.h.b16 %v155
    %v535 = vunpack.c.l.b16 %v156
    %v536 = vunpack.c.h.b16 %v156
    %v537 = vunpack.c.l.b16 %v157
    %v538 = vunpack.c.h.b16 %v157
    %v539 = vunpack.c.l.b16 %v158
    %v540 = vunpack.c.h.b16 %v158
    %v541 = vunpack.c.l.b16 %v159
    %v542 = vunpack.c.h.b16 %v159
    %v543 = vunpack.c.l.b16 %v160
    %v544 = vunpack.c.h.b16 %v160
    %v545 = vunpack.c.l.b16 %v161
    %v546 = vunpack.c.h.b16 %v161
    %v547 = vunpack.c.l.b16 %v162
    %v548 = vunpack.c.h.b16 %v162
    %v549 = vunpack.c.l.b16 %v163
    %v550 = vunpack.c.h.b16 %v163
    %v551 = vunpack.c.l.b16 %v164
    %v552 = vunpack.c.h.b16 %v164
    %v553 = vunpack.c.l.b16 %v165
    %v554 = vunpack.c.h.b16 %v165
    %v555 = vunpack.c.l.b16 %v166
    %v556 = vunpack.c.h.b16 %v166
    %v557 = vunpack.c.l.b16 %v167
    %v558 = vunpack.c.h.b16 %v167
    %v559 = vunpack.c.l.b16 %v168
    %v560 = vunpack.c.h.b16 %v168
    %v561 = vunpack.c.l.b16 %v169
    %v562 = vunpack.c.h.b16 %v169
    %v563 = vunpack.c.l.b16 %v170
    %v564 = vunpack.c.h.b16 %v170
    %v565 = vunpack.c.l.b16 %v171
    %v566 = vunpack.c.h.b16 %v171
    %v567 = vunpack.c.l.b16 %v172
    %v568 = vunpack.c.h.b16 %v172
    %v569 = vunpack.c.l.b16 %v173
    %v570 = vunpack.c.h.b16 %v173
    %v571 = vunpack.c.l.b16 %v174
    %v572 = vunpack.c.h.b16 %v174
    %v573 = vunpack.c.l.b16 %v175
    %v574 = vunpack.c.h.b16 %v175
    %v575 = vunpack.c.l.b16 %v176
    %v576 = vunpack.c.h.b16 %v176
    %v577 = vunpack.c.l.b16 %v177
    %v578 = vunpack.c.h.b16 %v177
    %v579 = vunpack.c.l.b16 %v178
    %v580 = vunpack.c.h.b16 %v178
    %v581 = vunpack.c.l.b16 %v179
    %v582 = vunpack.c.h.b16 %v179
    %v583 = vunpack.c.l.b16 %v180
    %v584 = vunpack.c.h.b16 %v180
    %v585 = vunpack.c.l.b16 %v181
    %v586 = vunpack.c.h.b16 %v181
    %v587 = vunpack.c.l.b16 %v182
    %v588 = vunpack.c.h.b16 %v182
    %v589 = vunpack.c.l.b16 %v183
    %v590 = vunpack.c.h.b16 %v183
    %v591 = vunpack.c.l.b16 %v184
    %v592 = vunpack.c.h.b16 %v184
    %v593 = vunpack.c.l.b16 %v185
    %v594 = vunpack.c.h.b16 %v185
    %v595 = vunpack.c.l.b16 %v186
    %v596 = vunpack.c.h.b16 %v186
    %v597 = vunpack.c.l.b16 %v187
    %v598 = vunpack.c.h.b16 %v187
    %v599 = vunpack.c.l.b16 %v188
    %v600 = vunpack.c.h.b16 %v188
    %v601 = vunpack.c.l.b16 %v189
    %v602 = vunpack.c.h.b16 %v189
    %v603 = vunpack.c.l.b16 %v190
    %v604 = vunpack.c.h.b16 %v190
    %v605 = vunpack.c.l.b16 %v191
    %v606 = vunpack.c.h.b16 %v191
    %v607 = vunpack.c.l.b16 %v192
    %v608 = vunpack.c.h.b16 %v192
    %v609 = vunpack.c.l.b16 %v193
    %v610 = vunpack.c.h.b16 %v193
    %v611 = vunpack.c.l.b16 %v194
    %v612 = vunpack.c.h.b16 %v194
    %v613 = vunpack.c.l.b16 %v195
    %v614 = vunpack.c.h.b16 %v195
    %v615 = vunpack.c.l.b16 %v196
    %v616 = vunpack.c.h.b16 %v196
    %v617 = vunpack.c.l.b16 %v197
    %v618 = vunpack.c.h.b16 %v197
    %v619 = vunpack.c.l.b16 %v198
    %v620 = vunpack.c.h.b16 %v198
    %v621 = vunpack.c.l.b16 %v199
    %v622 = vunpack.c.h.b16 %v199
    %v623 = vunpack.c.l.b16 %v200
    %v624 = vunpack.c.h.b16 %v200
    %v625 = vunpack.c.l.b16 %v201
    %v626 = vunpack.c.h.b16 %v201
    %v627 = vunpack.c.l.b16 %v202
    %v628 = vunpack.c.h.b16 %v202
    %v629 = vunpack.c.l.b16 %v203
    %v630 = vunpack.c.h.b16 %v203
    %v631 = vunpack.c.l.b16 %v204
    %v632 = vunpack.c.h.b16 %v204
    %v633 = vunpack.c.l.b16 %v205
    %v634 = vunpack.c.h.b16 %v205
    %v635 = vunpack.c.l.b16 %v206
    %v636 = vunpack.c.h.b16 %v206
    %v637 = vunpack.c.l.b16 %v207
    %v638 = vunpack.c.h.b16 %v207
    %v639 = vunpack.c.l.b16 %v208
    %v640 = vunpack.c.h.b16 %v208
    %v641 = vunpack.c.l.b16 %v209
    %v642 = vunpack.c.h.b16 %v209
    %v643 = vunpack.c.l.b16 %v210
    %v644 = vunpack.c.h.b16 %v210
    %v645 = vunpack.c.l.b16 %v211
    %v646 = vunpack.c.h.b16 %v211
    %v647 = vunpack.c.l.b16 %v212
    %v648 = vunpack.c.h.b16 %v212
    %v649 = vunpack.c.l.b16 %v213
    %v650 = vunpack.c.h.b16 %v213
    %v651 = vunpack.c.l.b16 %v214
    %v652 = vunpack.c.h.b16 %v214
    %v653 = vunpack.c.l.b16 %v215
    %v654 = vunpack.c.h.b16 %v215
    %v655 = vunpack.c.l.b16 %v216
    %v656 = vunpack.c.h.b16 %v216
    %v657 = vunpack.c.l.b16 %v217
    %v658 = vunpack.c.h.b16 %v217
    %v659 = vunpack.c.l.b16 %v218
    %v660 = vunpack.c.h.b16 %v218
    %v661 = vunpack.c.l.b16 %v219
    %v662 = vunpack.c.h.b16 %v219
    %v663 = vunpack.c.l.b16 %v220
    %v664 = vunpack.c.h.b16 %v220
    %v665 = vunpack.c.l.b16 %v221
    %v666 = vunpack.c.h.b16 %v221
    %v667 = vunpack.c.l.b16 %v222
    %v668 = vunpack.c.h.b16 %v222
    %v669 = vunpack.c.l.b16 %v223
    %v670 = vunpack.c.h.b16 %v223
    %v671 = vunpack.c.l.b16 %v224
    %v672 = vunpack.c.h.b16 %v224
    %v673 = vunpack.c.l.b16 %v225
    %v674 = vunpack.c.h.b16 %v225
    %v675 = vunpack.c.l.b16 %v226
    %v676 = vunpack.c.h.b16 %v226
    %v677 = vunpack.c.l.b16 %v227
    %v678 = vunpack.c.h.b16 %v227
    %v679 = vunpack.c.l.b16 %v228
    %v680 = vunpack.c.h.b16 %v228
    %v681 = vunpack.c.l.b16 %v229
    %v682 = vunpack.c.h.b16 %v229
    %v683 = vunpack.c.l.b16 %v230
    %v684 = vunpack.c.h.b16 %v230
    %v685 = vunpack.c.l.b16 %v231
    %v686 = vunpack.c.h.b16 %v231
    %v687 = vunpack.c.l.b16 %v232
    %v688 = vunpack.c.h.b16 %v232
    %v689 = vunpack.c.l.b16 %v233
    %v690 = vunpack.c.h.b16 %v233
    %v691 = vunpack.c.l.b16 %v234
    %v692 = vunpack.c.h.b16 %v234
    %v693 = vunpack.c.l.b16 %v235
    %v694 = vunpack.c.h.b16 %v235
    %v695 = vunpack.c.l.b16 %v236
    %v696 = vunpack.c.h.b16 %v236
    %v697 = vunpack.c.l.b16 %v237
    %v698 = vunpack.c.h.b16 %v237
    %v699 = vunpack.c.l.b16 %v238
    %v700 = vunpack.c.h.b16 %v238
    %v701 = vunpack.c.l.b16 %v239
    %v702 = vunpack.c.h.b16 %v239
    %v703 = vunpack.c.l.b16 %v240
    %v704 = vunpack.c.h.b16 %v240
    %v705 = vunpack.c.l.b16 %v241
    %v706 = vunpack.c.h.b16 %v241
    %v707 = vunpack.c.l.b16 %v242
    %v708 = vunpack.c.h.b16 %v242
    %v709 = vunpack.c.l.b16 %v243
    %v710 = vunpack.c.h.b16 %v243
    %v711 = vunpack.c.l.b16 %v244
    %v712 = vunpack.c.h.b16 %v244
    %v713 = vunpack.c.l.b16 %v245
    %v714 = vunpack.c.h.b16 %v245
    %v715 = vunpack.c.l.b16 %v246
    %v716 = vunpack.c.h.b16 %v246
    %v717 = vunpack.c.l.b16 %v247
    %v718 = vunpack.c.h.b16 %v247
    %v719 = vunpack.c.l.b16 %v248
    %v720 = vunpack.c.h.b16 %v248
    %v721 = vunpack.c.l.b16 %v249
    %v722 = vunpack.c.h.b16 %v249
    %v723 = vunpack.c.l.b16 %v250
    %v724 = vunpack.c.h.b16 %v250
    %v725 = vpack.c.b16 %v485, %v469
    %v726 = vpack.c.b16 %v486, %v470
    %v727 = vpack.c.b16 %v487, %v471
    %v728 = vpack.c.b16 %v488, %v472
    %v729 = vpack.c.b16 %v489, %v473
    %v730 = vpack.c.b16 %v490, %v474
    %v731 = vpack.c.b16 %v491, %v475
    %v732 = vpack.c.b16 %v492, %v476
    %v733 = vpack.c.b16 %v493, %v477
    %v734 = vpack.c.b16 %v494, %v478
    %v735 = vpack.c.b16 %v495, %v479
    %v736 = vpack.c.b16 %v496, %v480
    %v737 = vpack.c.b16 %v497, %v481
    %v738 = vpack.c.b16 %v498, %v482
    %v739 = vpack.c.b16 %v499, %v483
    %v740 = vpack.c.b16 %v500, %v484
    %v741 = vpack.c.b16 %v517, %v501
    %v742 = vpack.c.b16 %v518, %v502
    %v743 = vpack.c.b16 %v519, %v503
    %v744 = vpack.c.b16 %v520, %v504
    %v745 = vpack.c.b16 %v521, %v505
    %v746 = vpack.c.b16 %v522, %v506
    %v747 = vpack.c.b16 %v523, %v507
    %v748 = vpack.c.b16 %v524, %v508
    %v749 = vpack.c.b16 %v525, %v509
    %v750 = vpack.c.b16 %v526, %v510
    %v751 = vpack.c.b16 %v527, %v511
    %v752 = vpack.c.b16 %v528, %v512
    %v753 = vpack.c.b16 %v529, %v513
    %v754 = vpack.c.b16 %v530, %v514
    %v755 = vpack.c.b16 %v531, %v515
    %v756 = vpack.c.b16 %v532, %v516
    %v757 = vpack.c.b16 %v549, %v533
    %v758 = vpack.c.b16 %v550, %v534
    %v759 = vpack.c.b16 %v551, %v535
    %v760 = vpack.c.b16 %v552, %v536
    %v761 = vpack.c.b16 %v553, %v537
    %v762 = vpack.c.b16 %v554, %v538
    %v763 = vpack.c.b16 %v555, %v539
    %v764 = vpack.c.b16 %v556, %v540
    %v765 = vpack.c.b16 %v557, %v541
    %v766 = vpack.c.b16 %v558, %v542
    %v767 = vpack.c.b16 %v559, %v543
    %v768 = vpack.c.b16 %v560, %v544
    %v769 = vpack.c.b16 %v561, %v545
    %v770 = vpack.c.b16 %v562, %v546
    %v771 = vpack.c.b16 %v563, %v547
    %v772 = vpack.c.b16 %v564, %v548
    %v773 = vpack.c.b16 %v581, %v565
    %v774 = vpack.c.b16 %v582, %v566
    %v775 = vpack.c.b16 %v583, %v567
    %v776 = vpack.c.b16 %v584, %v568
    %v777 = vpack.c.b16 %v585, %v569
    %v778 = vpack.c.b16 %v586, %v570
    %v779 = vpack.c.b16 %v587, %v571
    %v780 = vpack.c.b16 %v588, %v572
    %v781 = vpack.c.b16 %v589, %v573
    %v782 = vpack.c.b16 %v590, %v574
    %v783 = vpack.c.b16 %v591, %v575
    %v784 = vpack.c.b16 %v592, %v576
    %v785 = vpack.c.b16 %v593, %v577
    %v786 = vpack.c.b16 %v594, %v578
    %v787 = vpack.c.b16 %v595, %v579
    %v788 = vpack.c.b16 %v596, %v580
    %v789 = vpack.c.b16 %v613, %v597
    %v790 = vpack.c.b16 %v614, %v598
    %v791 = vpack.c.b16 %v615, %v599
    %v792 = vpack.c.b16 %v616, %v600
    %v793 = vpack.c.b16 %v617, %v601
    %v794 = vpack.c.b16 %v618, %v602
    %v795 = vpack.c.b16 %v619, %v603
    %v796 = vpack.c.b16 %v620, %v604
    %v797 = vpack.c.b16 %v621, %v605
    %v798 = vpack.c.b16 %v622, %v606
    %v799 = vpack.c.b16 %v623, %v607
    %v800 = vpack.c.b16 %v624, %v608
    %v801 = vpack.c.b16 %v625, %v609
    %v802 = vpack.c.b16 %v626, %v610
    %v803 = vpack.c.b16 %v627, %v611
    %v804 = vpack.c.b16 %v628, %v612
    %v805 = vpack.c.b16 %v645, %v629
    %v806 = vpack.c.b16 %v646, %v630
    %v807 = vpack.c.b16 %v647, %v631
    %v808 = vpack.c.b16 %v648, %v632
    %v809 = vpack.c.b16 %v649, %v633
    %v810 = vpack.c.b16 %v650, %v634
    %v811 = vpack.c.b16 %v651, %v635
    %v812 = vpack.c.b16 %v652, %v636
    %v813 = vpack.c.b16 %v653, %v637
    %v814 = vpack.c.b16 %v654, %v638
    %v815 = vpack.c.b16 %v655, %v639
    %v816 = vpack.c.b16 %v656, %v640
    %v817 = vpack.c.b16 %v657, %v641
    %v818 = vpack.c.b16 %v658, %v642
    %v819 = vpack.c.b16 %v659, %v643
    %v820 = vpack.c.b16 %v660, %v644
    %v821 = vpack.c.b16 %v677, %v661
    %v822 = vpack.c.b16 %v678, %v662
    %v823 = vpack.c.b16 %v679, %v663
    %v824 = vpack.c.b16 %v680, %v664
    %v825 = vpack.c.b16 %v681, %v665
    %v826 = vpack.c.b16 %v682, %v666
    %v827 = vpack.c.b16 %v683, %v667
    %v828 = vpack.c.b16 %v684, %v668
    %v829 = vpack.c.b16 %v685, %v669
    %v830 = vpack.c.b16 %v686, %v670
    %v831 = vpack.c.b16 %v687, %v671
    %v832 = vpack.c.b16 %v688, %v672
    %v833 = vpack.c.b16 %v689, %v673
    %v834 = vpack.c.b16 %v690, %v674
    %v835 = vpack.c.b16 %v691, %v675
    %v836 = vpack.c.b16 %v692, %v676
    %v837 = vpack.c.b16 %v709, %v693
    %v838 = vpack.c.b16 %v710, %v694
    %v839 = vpack.c.b16 %v711, %v695
    %v840 = vpack.c.b16 %v712, %v696
    %v841 = vpack.c.b16 %v713, %v697
    %v842 = vpack.c.b16 %v714, %v698
    %v843 = vpack.c.b16 %v715, %v699
    %v844 = vpack.c.b16 %v716, %v700
    %v845 = vpack.c.b16 %v717, %v701
    %v846 = vpack.c.b16 %v718, %v702
    %v847 = vpack.c.b16 %v719, %v703
    %v848 = vpack.c.b16 %v720, %v704
    %v849 = vpack.c.b16 %v721, %v705
    %v850 = vpack.c.b16 %v722, %v706
    %v851 = vpack.c.b16 %v723, %v707
    %v852 = vpack.c.b16 %v724, %v708
    %981 = vmatprep.subr.bf16.mxu0 %v726
    %982 = vmatpush1.bf16.msra.mxu0 %v725
    %983 = vmatprep.subr.bf16.mxu0 %v742
    %984 = vmatpush1.bf16.msra.mxu0 %v741
    %985 = vmatprep.subr.bf16.mxu0 %v758
    %986 = vmatpush1.bf16.msra.mxu0 %v757
    %987 = vmatprep.subr.bf16.mxu0 %v774
    %988 = vmatpush1.bf16.msra.mxu0 %v773
    %989 = vmatprep.subr.bf16.mxu0 %v790
    %990 = vmatpush1.bf16.msra.mxu0 %v789
    %991 = vmatprep.subr.bf16.mxu0 %v806
    %992 = vmatpush1.bf16.msra.mxu0 %v805
    %993 = vmatprep.subr.bf16.mxu0 %v822
    %994 = vmatpush1.bf16.msra.mxu0 %v821
    %995 = vmatprep.subr.bf16.mxu0 %v838
    %996 = vmatpush1.bf16.msra.mxu0 %v837
    %997 = vmatprep.subr.bf16.mxu0 0
    %998 = vmatpush1.bf16.msra.mxu0 0
    %999 = vmatprep.subr.bf16.mxu0 0
    %1000 = vmatpush1.bf16.msra.mxu0 0
    %1001 = vmatprep.subr.bf16.mxu0 0
    %1002 = vmatpush1.bf16.msra.mxu0 0
    %1003 = vmatprep.subr.bf16.mxu0 0
    %1004 = vmatpush1.bf16.msra.mxu0 0
    %1005 = vmatprep.subr.bf16.mxu0 0
    %1006 = vmatpush1.bf16.msra.mxu0 0
    %1007 = vmatprep.subr.bf16.mxu0 0
    %1008 = vmatpush1.bf16.msra.mxu0 0
    %1009 = vmatprep.subr.bf16.mxu0 0
    %1010 = vmatpush1.bf16.msra.mxu0 0
    %1011 = vmatprep.subr.bf16.mxu0 0
    %1012 = vmatpush1.bf16.msra.mxu0 0
    %1013 = vmatprep.mubr.bf16.mxu0 0
    %1014 = vmatmul.mubr.bf16.gmra.mrb[0].mxu0 %v339
    %v1015 = vpop.f32.mrb[0].mxu0
    %v1016 = vadd.f32 %v258, %v1015
    %v1017 = vpop.f32.mrb[0].mxu0
    %v1018 = vadd.f32 %v262, %v1017
    %v1019 = vpop.f32.mrb[0].mxu0
    %v1020 = vadd.f32 %v258, %v1019
    %v1021 = vpop.f32.mrb[0].mxu0
    %v1022 = vadd.f32 %v262, %v1021
    %1023 = vdwg.mxu0
    %1024 = vmatprep.subr.bf16.mxu0 %v728
    %1025 = vmatpush1.bf16.msra.mxu0 %v727
    %1026 = vmatprep.subr.bf16.mxu0 %v744
    %1027 = vmatpush1.bf16.msra.mxu0 %v743
    %1028 = vmatprep.subr.bf16.mxu0 %v760
    %1029 = vmatpush1.bf16.msra.mxu0 %v759
    %1030 = vmatprep.subr.bf16.mxu0 %v776
    %1031 = vmatpush1.bf16.msra.mxu0 %v775
    %1032 = vmatprep.subr.bf16.mxu0 %v792
    %1033 = vmatpush1.bf16.msra.mxu0 %v791
    %1034 = vmatprep.subr.bf16.mxu0 %v808
    %1035 = vmatpush1.bf16.msra.mxu0 %v807
    %1036 = vmatprep.subr.bf16.mxu0 %v824
    %1037 = vmatpush1.bf16.msra.mxu0 %v823
    %1038 = vmatprep.subr.bf16.mxu0 %v840
    %1039 = vmatpush1.bf16.msra.mxu0 %v839
    %1040 = vmatprep.subr.bf16.mxu0 0
    %1041 = vmatpush1.bf16.msra.mxu0 0
    %1042 = vmatprep.subr.bf16.mxu0 0
    %1043 = vmatpush1.bf16.msra.mxu0 0
    %1044 = vmatprep.subr.bf16.mxu0 0
    %1045 = vmatpush1.bf16.msra.mxu0 0
    %1046 = vmatprep.subr.bf16.mxu0 0
    %1047 = vmatpush1.bf16.msra.mxu0 0
    %1048 = vmatprep.subr.bf16.mxu0 0
    %1049 = vmatpush1.bf16.msra.mxu0 0
    %1050 = vmatprep.subr.bf16.mxu0 0
    %1051 = vmatpush1.bf16.msra.mxu0 0
    %1052 = vmatprep.subr.bf16.mxu0 0
    %1053 = vmatpush1.bf16.msra.mxu0 0
    %1054 = vmatprep.subr.bf16.mxu0 0
    %1055 = vmatpush1.bf16.msra.mxu0 0
    %1056 = vmatprep.mubr.bf16.mxu0 0
    %1057 = vmatmul.mubr.bf16.gmra.mrb[0].mxu0 %v339
    %v1058 = vpop.f32.mrb[0].mxu0
    %v1059 = vadd.f32 %v266, %v1058
    %v1060 = vpop.f32.mrb[0].mxu0
    %v1061 = vadd.f32 %v270, %v1060
    %v1062 = vpop.f32.mrb[0].mxu0
    %v1063 = vadd.f32 %v266, %v1062
    %v1064 = vpop.f32.mrb[0].mxu0
    %v1065 = vadd.f32 %v270, %v1064
    %1066 = vdwg.mxu0
    %1067 = vmatprep.subr.bf16.mxu0 %v730
    %1068 = vmatpush1.bf16.msra.mxu0 %v729
    %1069 = vmatprep.subr.bf16.mxu0 %v746
    %1070 = vmatpush1.bf16.msra.mxu0 %v745
    %1071 = vmatprep.subr.bf16.mxu0 %v762
    %1072 = vmatpush1.bf16.msra.mxu0 %v761
    %1073 = vmatprep.subr.bf16.mxu0 %v778
    %1074 = vmatpush1.bf16.msra.mxu0 %v777
    %1075 = vmatprep.subr.bf16.mxu0 %v794
    %1076 = vmatpush1.bf16.msra.mxu0 %v793
    %1077 = vmatprep.subr.bf16.mxu0 %v810
    %1078 = vmatpush1.bf16.msra.mxu0 %v809
    %1079 = vmatprep.subr.bf16.mxu0 %v826
    %1080 = vmatpush1.bf16.msra.mxu0 %v825
    %1081 = vmatprep.subr.bf16.mxu0 %v842
    %1082 = vmatpush1.bf16.msra.mxu0 %v841
    %1083 = vmatprep.subr.bf16.mxu0 0
    %1084 = vmatpush1.bf16.msra.mxu0 0
    %1085 = vmatprep.subr.bf16.mxu0 0
    %1086 = vmatpush1.bf16.msra.mxu0 0
    %1087 = vmatprep.subr.bf16.mxu0 0
    %1088 = vmatpush1.bf16.msra.mxu0 0
    %1089 = vmatprep.subr.bf16.mxu0 0
    %1090 = vmatpush1.bf16.msra.mxu0 0
    %1091 = vmatprep.subr.bf16.mxu0 0
    %1092 = vmatpush1.bf16.msra.mxu0 0
    %1093 = vmatprep.subr.bf16.mxu0 0
    %1094 = vmatpush1.bf16.msra.mxu0 0
    %1095 = vmatprep.subr.bf16.mxu0 0
    %1096 = vmatpush1.bf16.msra.mxu0 0
    %1097 = vmatprep.subr.bf16.mxu0 0
    %1098 = vmatpush1.bf16.msra.mxu0 0
    %1099 = vmatprep.mubr.bf16.mxu0 0
    %1100 = vmatmul.mubr.bf16.gmra.mrb[0].mxu0 %v339
    %v1101 = vpop.f32.mrb[0].mxu0
    %v1102 = vadd.f32 %v274, %v1101
    %v1103 = vpop.f32.mrb[0].mxu0
    %v1104 = vadd.f32 %v278, %v1103
    %v1105 = vpop.f32.mrb[0].mxu0
    %v1106 = vadd.f32 %v274, %v1105
    %v1107 = vpop.f32.mrb[0].mxu0
    %v1108 = vadd.f32 %v278, %v1107
    %1109 = vdwg.mxu0
    %1110 = vmatprep.subr.bf16.mxu0 %v732
    %1111 = vmatpush1.bf16.msra.mxu0 %v731
    %1112 = vmatprep.subr.bf16.mxu0 %v748
    %1113 = vmatpush1.bf16.msra.mxu0 %v747
    %1114 = vmatprep.subr.bf16.mxu0 %v764
    %1115 = vmatpush1.bf16.msra.mxu0 %v763
    %1116 = vmatprep.subr.bf16.mxu0 %v780
    %1117 = vmatpush1.bf16.msra.mxu0 %v779
    %1118 = vmatprep.subr.bf16.mxu0 %v796
    %1119 = vmatpush1.bf16.msra.mxu0 %v795
    %1120 = vmatprep.subr.bf16.mxu0 %v812
    %1121 = vmatpush1.bf16.msra.mxu0 %v811
    %1122 = vmatprep.subr.bf16.mxu0 %v828
    %1123 = vmatpush1.bf16.msra.mxu0 %v827
    %1124 = vmatprep.subr.bf16.mxu0 %v844
    %1125 = vmatpush1.bf16.msra.mxu0 %v843
    %1126 = vmatprep.subr.bf16.mxu0 0
    %1127 = vmatpush1.bf16.msra.mxu0 0
    %1128 = vmatprep.subr.bf16.mxu0 0
    %1129 = vmatpush1.bf16.msra.mxu0 0
    %1130 = vmatprep.subr.bf16.mxu0 0
    %1131 = vmatpush1.bf16.msra.mxu0 0
    %1132 = vmatprep.subr.bf16.mxu0 0
    %1133 = vmatpush1.bf16.msra.mxu0 0
    %1134 = vmatprep.subr.bf16.mxu0 0
    %1135 = vmatpush1.bf16.msra.mxu0 0
    %1136 = vmatprep.subr.bf16.mxu0 0
    %1137 = vmatpush1.bf16.msra.mxu0 0
    %1138 = vmatprep.subr.bf16.mxu0 0
    %1139 = vmatpush1.bf16.msra.mxu0 0
    %1140 = vmatprep.subr.bf16.mxu0 0
    %1141 = vmatpush1.bf16.msra.mxu0 0
    %1142 = vmatprep.mubr.bf16.mxu0 0
    %1143 = vmatmul.mubr.bf16.gmra.mrb[0].mxu0 %v339
    %v1144 = vpop.f32.mrb[0].mxu0
    %v1145 = vadd.f32 %v282, %v1144
    %v1146 = vpop.f32.mrb[0].mxu0
    %v1147 = vadd.f32 %v286, %v1146
    %v1148 = vpop.f32.mrb[0].mxu0
    %v1149 = vadd.f32 %v282, %v1148
    %v1150 = vpop.f32.mrb[0].mxu0
    %v1151 = vadd.f32 %v286, %v1150
    %1152 = vdwg.mxu0
    %1153 = vmatprep.subr.bf16.mxu0 %v734
    %1154 = vmatpush1.bf16.msra.mxu0 %v733
    %1155 = vmatprep.subr.bf16.mxu0 %v750
    %1156 = vmatpush1.bf16.msra.mxu0 %v749
    %1157 = vmatprep.subr.bf16.mxu0 %v766
    %1158 = vmatpush1.bf16.msra.mxu0 %v765
    %1159 = vmatprep.subr.bf16.mxu0 %v782
    %1160 = vmatpush1.bf16.msra.mxu0 %v781
    %1161 = vmatprep.subr.bf16.mxu0 %v798
    %1162 = vmatpush1.bf16.msra.mxu0 %v797
    %1163 = vmatprep.subr.bf16.mxu0 %v814
    %1164 = vmatpush1.bf16.msra.mxu0 %v813
    %1165 = vmatprep.subr.bf16.mxu0 %v830
    %1166 = vmatpush1.bf16.msra.mxu0 %v829
    %1167 = vmatprep.subr.bf16.mxu0 %v846
    %1168 = vmatpush1.bf16.msra.mxu0 %v845
    %1169 = vmatprep.subr.bf16.mxu0 0
    %1170 = vmatpush1.bf16.msra.mxu0 0
    %1171 = vmatprep.subr.bf16.mxu0 0
    %1172 = vmatpush1.bf16.msra.mxu0 0
    %1173 = vmatprep.subr.bf16.mxu0 0
    %1174 = vmatpush1.bf16.msra.mxu0 0
    %1175 = vmatprep.subr.bf16.mxu0 0
    %1176 = vmatpush1.bf16.msra.mxu0 0
    %1177 = vmatprep.subr.bf16.mxu0 0
    %1178 = vmatpush1.bf16.msra.mxu0 0
    %1179 = vmatprep.subr.bf16.mxu0 0
    %1180 = vmatpush1.bf16.msra.mxu0 0
    %1181 = vmatprep.subr.bf16.mxu0 0
    %1182 = vmatpush1.bf16.msra.mxu0 0
    %1183 = vmatprep.subr.bf16.mxu0 0
    %1184 = vmatpush1.bf16.msra.mxu0 0
    %1185 = vmatprep.mubr.bf16.mxu0 0
    %1186 = vmatmul.mubr.bf16.gmra.mrb[0].mxu0 %v339
    %v1187 = vpop.f32.mrb[0].mxu0
    %v1188 = vadd.f32 %v290, %v1187
    %v1189 = vpop.f32.mrb[0].mxu0
    %v1190 = vadd.f32 %v294, %v1189
    %v1191 = vpop.f32.mrb[0].mxu0
    %v1192 = vadd.f32 %v290, %v1191
    %v1193 = vpop.f32.mrb[0].mxu0
    %v1194 = vadd.f32 %v294, %v1193
    %1195 = vdwg.mxu0
    %1196 = vmatprep.subr.bf16.mxu0 %v736
    %1197 = vmatpush1.bf16.msra.mxu0 %v735
    %1198 = vmatprep.subr.bf16.mxu0 %v752
    %1199 = vmatpush1.bf16.msra.mxu0 %v751
    %1200 = vmatprep.subr.bf16.mxu0 %v768
    %1201 = vmatpush1.bf16.msra.mxu0 %v767
    %1202 = vmatprep.subr.bf16.mxu0 %v784
    %1203 = vmatpush1.bf16.msra.mxu0 %v783
    %1204 = vmatprep.subr.bf16.mxu0 %v800
    %1205 = vmatpush1.bf16.msra.mxu0 %v799
    %1206 = vmatprep.subr.bf16.mxu0 %v816
    %1207 = vmatpush1.bf16.msra.mxu0 %v815
    %1208 = vmatprep.subr.bf16.mxu0 %v832
    %1209 = vmatpush1.bf16.msra.mxu0 %v831
    %1210 = vmatprep.subr.bf16.mxu0 %v848
    %1211 = vmatpush1.bf16.msra.mxu0 %v847
    %1212 = vmatprep.subr.bf16.mxu0 0
    %1213 = vmatpush1.bf16.msra.mxu0 0
    %1214 = vmatprep.subr.bf16.mxu0 0
    %1215 = vmatpush1.bf16.msra.mxu0 0
    %1216 = vmatprep.subr.bf16.mxu0 0
    %1217 = vmatpush1.bf16.msra.mxu0 0
    %1218 = vmatprep.subr.bf16.mxu0 0
    %1219 = vmatpush1.bf16.msra.mxu0 0
    %1220 = vmatprep.subr.bf16.mxu0 0
    %1221 = vmatpush1.bf16.msra.mxu0 0
    %1222 = vmatprep.subr.bf16.mxu0 0
    %1223 = vmatpush1.bf16.msra.mxu0 0
    %1224 = vmatprep.subr.bf16.mxu0 0
    %1225 = vmatpush1.bf16.msra.mxu0 0
    %1226 = vmatprep.subr.bf16.mxu0 0
    %1227 = vmatpush1.bf16.msra.mxu0 0
    %1228 = vmatprep.mubr.bf16.mxu0 0
    %1229 = vmatmul.mubr.bf16.gmra.mrb[0].mxu0 %v339
    %v1230 = vpop.f32.mrb[0].mxu0
    %v1231 = vadd.f32 %v298, %v1230
    %v1232 = vpop.f32.mrb[0].mxu0
    %v1233 = vadd.f32 %v302, %v1232
    %v1234 = vpop.f32.mrb[0].mxu0
    %v1235 = vadd.f32 %v298, %v1234
    %v1236 = vpop.f32.mrb[0].mxu0
    %v1237 = vadd.f32 %v302, %v1236
    %1238 = vdwg.mxu0
    %1239 = vmatprep.subr.bf16.mxu0 %v738
    %1240 = vmatpush1.bf16.msra.mxu0 %v737
    %1241 = vmatprep.subr.bf16.mxu0 %v754
    %1242 = vmatpush1.bf16.msra.mxu0 %v753
    %1243 = vmatprep.subr.bf16.mxu0 %v770
    %1244 = vmatpush1.bf16.msra.mxu0 %v769
    %1245 = vmatprep.subr.bf16.mxu0 %v786
    %1246 = vmatpush1.bf16.msra.mxu0 %v785
    %1247 = vmatprep.subr.bf16.mxu0 %v802
    %1248 = vmatpush1.bf16.msra.mxu0 %v801
    %1249 = vmatprep.subr.bf16.mxu0 %v818
    %1250 = vmatpush1.bf16.msra.mxu0 %v817
    %1251 = vmatprep.subr.bf16.mxu0 %v834
    %1252 = vmatpush1.bf16.msra.mxu0 %v833
    %1253 = vmatprep.subr.bf16.mxu0 %v850
    %1254 = vmatpush1.bf16.msra.mxu0 %v849
    %1255 = vmatprep.subr.bf16.mxu0 0
    %1256 = vmatpush1.bf16.msra.mxu0 0
    %1257 = vmatprep.subr.bf16.mxu0 0
    %1258 = vmatpush1.bf16.msra.mxu0 0
    %1259 = vmatprep.subr.bf16.mxu0 0
    %1260 = vmatpush1.bf16.msra.mxu0 0
    %1261 = vmatprep.subr.bf16.mxu0 0
    %1262 = vmatpush1.bf16.msra.mxu0 0
    %1263 = vmatprep.subr.bf16.mxu0 0
    %1264 = vmatpush1.bf16.msra.mxu0 0
    %1265 = vmatprep.subr.bf16.mxu0 0
    %1266 = vmatpush1.bf16.msra.mxu0 0
    %1267 = vmatprep.subr.bf16.mxu0 0
    %1268 = vmatpush1.bf16.msra.mxu0 0
    %1269 = vmatprep.subr.bf16.mxu0 0
    %1270 = vmatpush1.bf16.msra.mxu0 0
    %1271 = vmatprep.mubr.bf16.mxu0 0
    %1272 = vmatmul.mubr.bf16.gmra.mrb[0].mxu0 %v339
    %v1273 = vpop.f32.mrb[0].mxu0
    %v1274 = vadd.f32 %v306, %v1273
    %v1275 = vpop.f32.mrb[0].mxu0
    %v1276 = vadd.f32 %v310, %v1275
    %v1277 = vpop.f32.mrb[0].mxu0
    %v1278 = vadd.f32 %v306, %v1277
    %v1279 = vpop.f32.mrb[0].mxu0
    %v1280 = vadd.f32 %v310, %v1279
    %1281 = vdwg.mxu0
    %1282 = vmatprep.subr.bf16.mxu0 %v740
    %1283 = vmatpush1.bf16.msra.mxu0 %v739
    %1284 = vmatprep.subr.bf16.mxu0 %v756
    %1285 = vmatpush1.bf16.msra.mxu0 %v755
    %1286 = vmatprep.subr.bf16.mxu0 %v772
    %1287 = vmatpush1.bf16.msra.mxu0 %v771
    %1288 = vmatprep.subr.bf16.mxu0 %v788
    %1289 = vmatpush1.bf16.msra.mxu0 %v787
    %1290 = vmatprep.subr.bf16.mxu0 %v804
    %1291 = vmatpush1.bf16.msra.mxu0 %v803
    %1292 = vmatprep.subr.bf16.mxu0 %v820
    %1293 = vmatpush1.bf16.msra.mxu0 %v819
    %1294 = vmatprep.subr.bf16.mxu0 %v836
    %1295 = vmatpush1.bf16.msra.mxu0 %v835
    %1296 = vmatprep.subr.bf16.mxu0 %v852
    %1297 = vmatpush1.bf16.msra.mxu0 %v851
    %1298 = vmatprep.subr.bf16.mxu0 0
    %1299 = vmatpush1.bf16.msra.mxu0 0
    %1300 = vmatprep.subr.bf16.mxu0 0
    %1301 = vmatpush1.bf16.msra.mxu0 0
    %1302 = vmatprep.subr.bf16.mxu0 0
    %1303 = vmatpush1.bf16.msra.mxu0 0
    %1304 = vmatprep.subr.bf16.mxu0 0
    %1305 = vmatpush1.bf16.msra.mxu0 0
    %1306 = vmatprep.subr.bf16.mxu0 0
    %1307 = vmatpush1.bf16.msra.mxu0 0
    %1308 = vmatprep.subr.bf16.mxu0 0
    %1309 = vmatpush1.bf16.msra.mxu0 0
    %1310 = vmatprep.subr.bf16.mxu0 0
    %1311 = vmatpush1.bf16.msra.mxu0 0
    %1312 = vmatprep.subr.bf16.mxu0 0
    %1313 = vmatpush1.bf16.msra.mxu0 0
    %1314 = vmatprep.mubr.bf16.mxu0 0
    %1315 = vmatmul.mubr.bf16.gmra.mrb[0].mxu0 %v339
    %v1316 = vpop.f32.mrb[0].mxu0
    %v1317 = vadd.f32 %v314, %v1316
    %v1318 = vpop.f32.mrb[0].mxu0
    %v1319 = vadd.f32 %v318, %v1318
    %v1320 = vpop.f32.mrb[0].mxu0
    %v1321 = vadd.f32 %v314, %v1320
    %v1322 = vpop.f32.mrb[0].mxu0
    %v1323 = vadd.f32 %v318, %v1322
    %1324 = vdwg.mxu0
    %v1325 = vmax.f32 %v1016, 0.0
    %v1326 = vmax.f32 %v1018, 0.0
    %v1327 = vmax.f32 %v1059, 0.0
    %v1328 = vmax.f32 %v1061, 0.0
    %v1329 = vmax.f32 %v1102, 0.0
    %v1330 = vmax.f32 %v1104, 0.0
    %v1331 = vmax.f32 %v1145, 0.0
    %v1332 = vmax.f32 %v1147, 0.0
    %v1333 = vmax.f32 %v1188, 0.0
    %v1334 = vmax.f32 %v1190, 0.0
    %v1335 = vmax.f32 %v1231, 0.0
    %v1336 = vmax.f32 %v1233, 0.0
    %v1337 = vmax.f32 %v1274, 0.0
    %v1338 = vmax.f32 %v1276, 0.0
    %v1339 = vmax.f32 %v1317, 0.0
    %v1340 = vmax.f32 %v1319, 0.0
    %v1341 = vmax.f32 %v1020, 0.0
    %v1342 = vmax.f32 %v1022, 0.0
    %v1343 = vmax.f32 %v1063, 0.0
    %v1344 = vmax.f32 %v1065, 0.0
    %v1345 = vmax.f32 %v1106, 0.0
    %v1346 = vmax.f32 %v1108, 0.0
    %v1347 = vmax.f32 %v1149, 0.0
    %v1348 = vmax.f32 %v1151, 0.0
    %v1349 = vmax.f32 %v1192, 0.0
    %v1350 = vmax.f32 %v1194, 0.0
    %v1351 = vmax.f32 %v1235, 0.0
    %v1352 = vmax.f32 %v1237, 0.0
    %v1353 = vmax.f32 %v1278, 0.0
    %v1354 = vmax.f32 %v1280, 0.0
    %v1355 = vmax.f32 %v1321, 0.0
    %v1356 = vmax.f32 %v1323, 0.0
    %v1357 = vpack.c.bf16 %v1341, %v1325
    %v1358 = vpack.c.bf16 %v1342, %v1326
    %v1359 = vpack.c.bf16 %v1343, %v1327
    %v1360 = vpack.c.bf16 %v1344, %v1328
    %v1361 = vpack.c.bf16 %v1345, %v1329
    %v1362 = vpack.c.bf16 %v1346, %v1330
    %v1363 = vpack.c.bf16 %v1347, %v1331
    %v1364 = vpack.c.bf16 %v1348, %v1332
    %v1365 = vpack.c.bf16 %v1349, %v1333
    %v1366 = vpack.c.bf16 %v1350, %v1334
    %v1367 = vpack.c.bf16 %v1351, %v1335
    %v1368 = vpack.c.bf16 %v1352, %v1336
    %v1369 = vpack.c.bf16 %v1353, %v1337
    %v1370 = vpack.c.bf16 %v1354, %v1338
    %v1371 = vpack.c.bf16 %v1355, %v1339
    %v1372 = vpack.c.bf16 %v1356, %v1340
    %v1373 = vld [vmem:[#allocation7] sm:$0xff]
    %v1374 = vld [vmem:[#allocation7 + $0x8] sm:$0xff]
    %v1375 = vld [vmem:[#allocation7 + $0x10] sm:$0xff]
    %v1376 = vld [vmem:[#allocation7 + $0x18] sm:$0xff]
    %v1377 = vld [vmem:[#allocation7 + $0x20] sm:$0xff]
    %v1378 = vld [vmem:[#allocation7 + $0x28] sm:$0xff]
    %v1379 = vld [vmem:[#allocation7 + $0x30] sm:$0xff]
    %v1380 = vld [vmem:[#allocation7 + $0x38] sm:$0xff]
    %v1381 = vld [vmem:[#allocation7 + $0x40] sm:$0xff]
    %v1382 = vld [vmem:[#allocation7 + $0x48] sm:$0xff]
    %v1383 = vld [vmem:[#allocation7 + $0x50] sm:$0xff]
    %v1384 = vld [vmem:[#allocation7 + $0x58] sm:$0xff]
    %v1385 = vld [vmem:[#allocation7 + $0x60] sm:$0xff]
    %v1386 = vld [vmem:[#allocation7 + $0x68] sm:$0xff]
    %v1387 = vld [vmem:[#allocation7 + $0x70] sm:$0xff]
    %v1388 = vld [vmem:[#allocation7 + $0x78] sm:$0xff]
    %v1389 = vld [vmem:[#allocation7 + $0x80] sm:$0xff]
    %v1390 = vld [vmem:[#allocation7 + $0x88] sm:$0xff]
    %v1391 = vld [vmem:[#allocation7 + $0x90] sm:$0xff]
    %v1392 = vld [vmem:[#allocation7 + $0x98] sm:$0xff]
    %v1393 = vld [vmem:[#allocation7 + $0xa0] sm:$0xff]
    %v1394 = vld [vmem:[#allocation7 + $0xa8] sm:$0xff]
    %v1395 = vld [vmem:[#allocation7 + $0xb0] sm:$0xff]
    %v1396 = vld [vmem:[#allocation7 + $0xb8] sm:$0xff]
    %v1397 = vld [vmem:[#allocation7 + $0xc0] sm:$0xff]
    %v1398 = vld [vmem:[#allocation7 + $0xc8] sm:$0xff]
    %v1399 = vld [vmem:[#allocation7 + $0xd0] sm:$0xff]
    %v1400 = vld [vmem:[#allocation7 + $0xd8] sm:$0xff]
    %v1401 = vld [vmem:[#allocation7 + $0xe0] sm:$0xff]
    %v1402 = vld [vmem:[#allocation7 + $0xe8] sm:$0xff]
    %v1403 = vld [vmem:[#allocation7 + $0xf0] sm:$0xff]
    %v1404 = vld [vmem:[#allocation7 + $0xf8] sm:$0xff]
    %v1405 = vld [vmem:[#allocation7 + $0x100] sm:$0xff]
    %v1406 = vld [vmem:[#allocation7 + $0x108] sm:$0xff]
    %v1407 = vld [vmem:[#allocation7 + $0x110] sm:$0xff]
    %v1408 = vld [vmem:[#allocation7 + $0x118] sm:$0xff]
    %v1409 = vld [vmem:[#allocation7 + $0x120] sm:$0xff]
    %v1410 = vld [vmem:[#allocation7 + $0x128] sm:$0xff]
    %v1411 = vld [vmem:[#allocation7 + $0x130] sm:$0xff]
    %v1412 = vld [vmem:[#allocation7 + $0x138] sm:$0xff]
    %v1413 = vld [vmem:[#allocation7 + $0x140] sm:$0xff]
    %v1414 = vld [vmem:[#allocation7 + $0x148] sm:$0xff]
    %v1415 = vld [vmem:[#allocation7 + $0x150] sm:$0xff]
    %v1416 = vld [vmem:[#allocation7 + $0x158] sm:$0xff]
    %v1417 = vld [vmem:[#allocation7 + $0x160] sm:$0xff]
    %v1418 = vld [vmem:[#allocation7 + $0x168] sm:$0xff]
    %v1419 = vld [vmem:[#allocation7 + $0x170] sm:$0xff]
    %v1420 = vld [vmem:[#allocation7 + $0x178] sm:$0xff]
    %v1421 = vld [vmem:[#allocation7 + $0x180] sm:$0xff]
    %v1422 = vld [vmem:[#allocation7 + $0x188] sm:$0xff]
    %v1423 = vld [vmem:[#allocation7 + $0x190] sm:$0xff]
    %v1424 = vld [vmem:[#allocation7 + $0x198] sm:$0xff]
    %v1425 = vld [vmem:[#allocation7 + $0x1a0] sm:$0xff]
    %v1426 = vld [vmem:[#allocation7 + $0x1a8] sm:$0xff]
    %v1427 = vld [vmem:[#allocation7 + $0x1b0] sm:$0xff]
    %v1428 = vld [vmem:[#allocation7 + $0x1b8] sm:$0xff]
    %v1429 = vld [vmem:[#allocation7 + $0x1c0] sm:$0xff]
    %v1430 = vld [vmem:[#allocation7 + $0x1c8] sm:$0xff]
    %v1431 = vld [vmem:[#allocation7 + $0x1d0] sm:$0xff]
    %v1432 = vld [vmem:[#allocation7 + $0x1d8] sm:$0xff]
    %v1433 = vld [vmem:[#allocation7 + $0x1e0] sm:$0xff]
    %v1434 = vld [vmem:[#allocation7 + $0x1e8] sm:$0xff]
    %v1435 = vld [vmem:[#allocation7 + $0x1f0] sm:$0xff]
    %v1436 = vld [vmem:[#allocation7 + $0x1f8] sm:$0xff]
    %v1437 = vld [vmem:[#allocation7 + $0x200] sm:$0xff]
    %v1438 = vld [vmem:[#allocation7 + $0x208] sm:$0xff]
    %v1439 = vld [vmem:[#allocation7 + $0x210] sm:$0xff]
    %v1440 = vld [vmem:[#allocation7 + $0x218] sm:$0xff]
    %v1441 = vld [vmem:[#allocation7 + $0x220] sm:$0xff]
    %v1442 = vld [vmem:[#allocation7 + $0x228] sm:$0xff]
    %v1443 = vld [vmem:[#allocation7 + $0x230] sm:$0xff]
    %v1444 = vld [vmem:[#allocation7 + $0x238] sm:$0xff]
    %v1445 = vld [vmem:[#allocation7 + $0x240] sm:$0xff]
    %v1446 = vld [vmem:[#allocation7 + $0x248] sm:$0xff]
    %v1447 = vld [vmem:[#allocation7 + $0x250] sm:$0xff]
    %v1448 = vld [vmem:[#allocation7 + $0x258] sm:$0xff]
    %v1449 = vld [vmem:[#allocation7 + $0x260] sm:$0xff]
    %v1450 = vld [vmem:[#allocation7 + $0x268] sm:$0xff]
    %v1451 = vld [vmem:[#allocation7 + $0x270] sm:$0xff]
    %v1452 = vld [vmem:[#allocation7 + $0x278] sm:$0xff]
    %v1453 = vld [vmem:[#allocation7 + $0x280] sm:$0xff]
    %v1454 = vld [vmem:[#allocation7 + $0x288] sm:$0xff]
    %v1455 = vld [vmem:[#allocation7 + $0x290] sm:$0xff]
    %v1456 = vld [vmem:[#allocation7 + $0x298] sm:$0xff]
    %v1457 = vld [vmem:[#allocation7 + $0x2a0] sm:$0xff]
    %v1458 = vld [vmem:[#allocation7 + $0x2a8] sm:$0xff]
    %v1459 = vld [vmem:[#allocation7 + $0x2b0] sm:$0xff]
    %v1460 = vld [vmem:[#allocation7 + $0x2b8] sm:$0xff]
    %v1461 = vld [vmem:[#allocation7 + $0x2c0] sm:$0xff]
    %v1462 = vld [vmem:[#allocation7 + $0x2c8] sm:$0xff]
    %v1463 = vld [vmem:[#allocation7 + $0x2d0] sm:$0xff]
    %v1464 = vld [vmem:[#allocation7 + $0x2d8] sm:$0xff]
    %v1465 = vld [vmem:[#allocation7 + $0x2e0] sm:$0xff]
    %v1466 = vld [vmem:[#allocation7 + $0x2e8] sm:$0xff]
    %v1467 = vld [vmem:[#allocation7 + $0x2f0] sm:$0xff]
    %v1468 = vld [vmem:[#allocation7 + $0x2f8] sm:$0xff]
    %v1469 = vld [vmem:[#allocation7 + $0x300] sm:$0xff]
    %v1470 = vld [vmem:[#allocation7 + $0x308] sm:$0xff]
    %v1471 = vld [vmem:[#allocation7 + $0x310] sm:$0xff]
    %v1472 = vld [vmem:[#allocation7 + $0x318] sm:$0xff]
    %v1473 = vld [vmem:[#allocation7 + $0x320] sm:$0xff]
    %v1474 = vld [vmem:[#allocation7 + $0x328] sm:$0xff]
    %v1475 = vld [vmem:[#allocation7 + $0x330] sm:$0xff]
    %v1476 = vld [vmem:[#allocation7 + $0x338] sm:$0xff]
    %v1477 = vld [vmem:[#allocation7 + $0x340] sm:$0xff]
    %v1478 = vld [vmem:[#allocation7 + $0x348] sm:$0xff]
    %v1479 = vld [vmem:[#allocation7 + $0x350] sm:$0xff]
    %v1480 = vld [vmem:[#allocation7 + $0x358] sm:$0xff]
    %v1481 = vld [vmem:[#allocation7 + $0x360] sm:$0xff]
    %v1482 = vld [vmem:[#allocation7 + $0x368] sm:$0xff]
    %v1483 = vld [vmem:[#allocation7 + $0x370] sm:$0xff]
    %v1484 = vld [vmem:[#allocation7 + $0x378] sm:$0xff]
    %v1485 = vld [vmem:[#allocation7 + $0x380] sm:$0xff]
    %v1486 = vld [vmem:[#allocation7 + $0x388] sm:$0xff]
    %v1487 = vld [vmem:[#allocation7 + $0x390] sm:$0xff]
    %v1488 = vld [vmem:[#allocation7 + $0x398] sm:$0xff]
    %v1489 = vld [vmem:[#allocation7 + $0x3a0] sm:$0xff]
    %v1490 = vld [vmem:[#allocation7 + $0x3a8] sm:$0xff]
    %v1491 = vld [vmem:[#allocation7 + $0x3b0] sm:$0xff]
    %v1492 = vld [vmem:[#allocation7 + $0x3b8] sm:$0xff]
    %v1493 = vld [vmem:[#allocation7 + $0x3c0] sm:$0xff]
    %v1494 = vld [vmem:[#allocation7 + $0x3c8] sm:$0xff]
    %v1495 = vld [vmem:[#allocation7 + $0x3d0] sm:$0xff]
    %v1496 = vld [vmem:[#allocation7 + $0x3d8] sm:$0xff]
    %v1497 = vld [vmem:[#allocation7 + $0x3e0] sm:$0xff]
    %v1498 = vld [vmem:[#allocation7 + $0x3e8] sm:$0xff]
    %v1499 = vld [vmem:[#allocation7 + $0x3f0] sm:$0xff]
    %v1500 = vld [vmem:[#allocation7 + $0x3f8] sm:$0xff]
    %v1501 = vld [vmem:[#allocation7 + $0x400] sm:$0xff]
    %v1502 = vld [vmem:[#allocation7 + $0x408] sm:$0xff]
    %v1503 = vld [vmem:[#allocation7 + $0x410] sm:$0xff]
    %v1504 = vld [vmem:[#allocation7 + $0x418] sm:$0xff]
    %v1505 = vld [vmem:[#allocation7 + $0x420] sm:$0xff]
    %v1506 = vld [vmem:[#allocation7 + $0x428] sm:$0xff]
    %v1507 = vld [vmem:[#allocation7 + $0x430] sm:$0xff]
    %v1508 = vld [vmem:[#allocation7 + $0x438] sm:$0xff]
    %v1509 = vld [vmem:[#allocation7 + $0x440] sm:$0xff]
    %v1510 = vld [vmem:[#allocation7 + $0x448] sm:$0xff]
    %v1511 = vld [vmem:[#allocation7 + $0x450] sm:$0xff]
    %v1512 = vld [vmem:[#allocation7 + $0x458] sm:$0xff]
    %v1513 = vld [vmem:[#allocation7 + $0x460] sm:$0xff]
    %v1514 = vld [vmem:[#allocation7 + $0x468] sm:$0xff]
    %v1515 = vld [vmem:[#allocation7 + $0x470] sm:$0xff]
    %v1516 = vld [vmem:[#allocation7 + $0x478] sm:$0xff]
    %v1517 = vld [vmem:[#allocation7 + $0x480] sm:$0xff]
    %v1518 = vld [vmem:[#allocation7 + $0x488] sm:$0xff]
    %v1519 = vld [vmem:[#allocation7 + $0x490] sm:$0xff]
    %v1520 = vld [vmem:[#allocation7 + $0x498] sm:$0xff]
    %v1521 = vld [vmem:[#allocation7 + $0x4a0] sm:$0xff]
    %v1522 = vld [vmem:[#allocation7 + $0x4a8] sm:$0xff]
    %v1523 = vld [vmem:[#allocation7 + $0x4b0] sm:$0xff]
    %v1524 = vld [vmem:[#allocation7 + $0x4b8] sm:$0xff]
    %v1525 = vld [vmem:[#allocation7 + $0x4c0] sm:$0xff]
    %v1526 = vld [vmem:[#allocation7 + $0x4c8] sm:$0xff]
    %v1527 = vld [vmem:[#allocation7 + $0x4d0] sm:$0xff]
    %v1528 = vld [vmem:[#allocation7 + $0x4d8] sm:$0xff]
    %v1529 = vld [vmem:[#allocation7 + $0x4e0] sm:$0xff]
    %v1530 = vld [vmem:[#allocation7 + $0x4e8] sm:$0xff]
    %v1531 = vld [vmem:[#allocation7 + $0x4f0] sm:$0xff]
    %v1532 = vld [vmem:[#allocation7 + $0x4f8] sm:$0xff]
    %v1533 = vld [vmem:[#allocation7 + $0x500] sm:$0xff]
    %v1534 = vld [vmem:[#allocation7 + $0x508] sm:$0xff]
    %v1535 = vld [vmem:[#allocation7 + $0x510] sm:$0xff]
    %v1536 = vld [vmem:[#allocation7 + $0x518] sm:$0xff]
    %v1537 = vld [vmem:[#allocation7 + $0x520] sm:$0xff]
    %v1538 = vld [vmem:[#allocation7 + $0x528] sm:$0xff]
    %v1539 = vld [vmem:[#allocation7 + $0x530] sm:$0xff]
    %v1540 = vld [vmem:[#allocation7 + $0x538] sm:$0xff]
    %v1541 = vld [vmem:[#allocation7 + $0x540] sm:$0xff]
    %v1542 = vld [vmem:[#allocation7 + $0x548] sm:$0xff]
    %v1543 = vld [vmem:[#allocation7 + $0x550] sm:$0xff]
    %v1544 = vld [vmem:[#allocation7 + $0x558] sm:$0xff]
    %v1545 = vld [vmem:[#allocation7 + $0x560] sm:$0xff]
    %v1546 = vld [vmem:[#allocation7 + $0x568] sm:$0xff]
    %v1547 = vld [vmem:[#allocation7 + $0x570] sm:$0xff]
    %v1548 = vld [vmem:[#allocation7 + $0x578] sm:$0xff]
    %v1549 = vld [vmem:[#allocation7 + $0x580] sm:$0xff]
    %v1550 = vld [vmem:[#allocation7 + $0x588] sm:$0xff]
    %v1551 = vld [vmem:[#allocation7 + $0x590] sm:$0xff]
    %v1552 = vld [vmem:[#allocation7 + $0x598] sm:$0xff]
    %v1553 = vld [vmem:[#allocation7 + $0x5a0] sm:$0xff]
    %v1554 = vld [vmem:[#allocation7 + $0x5a8] sm:$0xff]
    %v1555 = vld [vmem:[#allocation7 + $0x5b0] sm:$0xff]
    %v1556 = vld [vmem:[#allocation7 + $0x5b8] sm:$0xff]
    %v1557 = vld [vmem:[#allocation7 + $0x5c0] sm:$0xff]
    %v1558 = vld [vmem:[#allocation7 + $0x5c8] sm:$0xff]
    %v1559 = vld [vmem:[#allocation7 + $0x5d0] sm:$0xff]
    %v1560 = vld [vmem:[#allocation7 + $0x5d8] sm:$0xff]
    %v1561 = vld [vmem:[#allocation7 + $0x5e0] sm:$0xff]
    %v1562 = vld [vmem:[#allocation7 + $0x5e8] sm:$0xff]
    %v1563 = vld [vmem:[#allocation7 + $0x5f0] sm:$0xff]
    %v1564 = vld [vmem:[#allocation7 + $0x5f8] sm:$0xff]
    %v1565 = vld [vmem:[#allocation7 + $0x600] sm:$0xff]
    %v1566 = vld [vmem:[#allocation7 + $0x608] sm:$0xff]
    %v1567 = vld [vmem:[#allocation7 + $0x610] sm:$0xff]
    %v1568 = vld [vmem:[#allocation7 + $0x618] sm:$0xff]
    %v1569 = vld [vmem:[#allocation7 + $0x620] sm:$0xff]
    %v1570 = vld [vmem:[#allocation7 + $0x628] sm:$0xff]
    %v1571 = vld [vmem:[#allocation7 + $0x630] sm:$0xff]
    %v1572 = vld [vmem:[#allocation7 + $0x638] sm:$0xff]
    %v1573 = vld [vmem:[#allocation7 + $0x640] sm:$0xff]
    %v1574 = vld [vmem:[#allocation7 + $0x648] sm:$0xff]
    %v1575 = vld [vmem:[#allocation7 + $0x650] sm:$0xff]
    %v1576 = vld [vmem:[#allocation7 + $0x658] sm:$0xff]
    %v1577 = vld [vmem:[#allocation7 + $0x660] sm:$0xff]
    %v1578 = vld [vmem:[#allocation7 + $0x668] sm:$0xff]
    %v1579 = vld [vmem:[#allocation7 + $0x670] sm:$0xff]
    %v1580 = vld [vmem:[#allocation7 + $0x678] sm:$0xff]
    %v1581 = vld [vmem:[#allocation7 + $0x680] sm:$0xff]
    %v1582 = vld [vmem:[#allocation7 + $0x688] sm:$0xff]
    %v1583 = vld [vmem:[#allocation7 + $0x690] sm:$0xff]
    %v1584 = vld [vmem:[#allocation7 + $0x698] sm:$0xff]
    %v1585 = vld [vmem:[#allocation7 + $0x6a0] sm:$0xff]
    %v1586 = vld [vmem:[#allocation7 + $0x6a8] sm:$0xff]
    %v1587 = vld [vmem:[#allocation7 + $0x6b0] sm:$0xff]
    %v1588 = vld [vmem:[#allocation7 + $0x6b8] sm:$0xff]
    %v1589 = vld [vmem:[#allocation7 + $0x6c0] sm:$0xff]
    %v1590 = vld [vmem:[#allocation7 + $0x6c8] sm:$0xff]
    %v1591 = vld [vmem:[#allocation7 + $0x6d0] sm:$0xff]
    %v1592 = vld [vmem:[#allocation7 + $0x6d8] sm:$0xff]
    %v1593 = vld [vmem:[#allocation7 + $0x6e0] sm:$0xff]
    %v1594 = vld [vmem:[#allocation7 + $0x6e8] sm:$0xff]
    %v1595 = vld [vmem:[#allocation7 + $0x6f0] sm:$0xff]
    %v1596 = vld [vmem:[#allocation7 + $0x6f8] sm:$0xff]
    %v1597 = vld [vmem:[#allocation7 + $0x700] sm:$0xff]
    %v1598 = vld [vmem:[#allocation7 + $0x708] sm:$0xff]
    %v1599 = vld [vmem:[#allocation7 + $0x710] sm:$0xff]
    %v1600 = vld [vmem:[#allocation7 + $0x718] sm:$0xff]
    %v1601 = vld [vmem:[#allocation7 + $0x720] sm:$0xff]
    %v1602 = vld [vmem:[#allocation7 + $0x728] sm:$0xff]
    %v1603 = vld [vmem:[#allocation7 + $0x730] sm:$0xff]
    %v1604 = vld [vmem:[#allocation7 + $0x738] sm:$0xff]
    %v1605 = vld [vmem:[#allocation7 + $0x740] sm:$0xff]
    %v1606 = vld [vmem:[#allocation7 + $0x748] sm:$0xff]
    %v1607 = vld [vmem:[#allocation7 + $0x750] sm:$0xff]
    %v1608 = vld [vmem:[#allocation7 + $0x758] sm:$0xff]
    %v1609 = vld [vmem:[#allocation7 + $0x760] sm:$0xff]
    %v1610 = vld [vmem:[#allocation7 + $0x768] sm:$0xff]
    %v1611 = vld [vmem:[#allocation7 + $0x770] sm:$0xff]
    %v1612 = vld [vmem:[#allocation7 + $0x778] sm:$0xff]
    %v1613 = vld [vmem:[#allocation7 + $0x780] sm:$0xff]
    %v1614 = vld [vmem:[#allocation7 + $0x788] sm:$0xff]
    %v1615 = vld [vmem:[#allocation7 + $0x790] sm:$0xff]
    %v1616 = vld [vmem:[#allocation7 + $0x798] sm:$0xff]
    %v1617 = vld [vmem:[#allocation7 + $0x7a0] sm:$0xff]
    %v1618 = vld [vmem:[#allocation7 + $0x7a8] sm:$0xff]
    %v1619 = vld [vmem:[#allocation7 + $0x7b0] sm:$0xff]
    %v1620 = vld [vmem:[#allocation7 + $0x7b8] sm:$0xff]
    %v1621 = vld [vmem:[#allocation7 + $0x7c0] sm:$0xff]
    %v1622 = vld [vmem:[#allocation7 + $0x7c8] sm:$0xff]
    %v1623 = vld [vmem:[#allocation7 + $0x7d0] sm:$0xff]
    %v1624 = vld [vmem:[#allocation7 + $0x7d8] sm:$0xff]
    %v1625 = vld [vmem:[#allocation7 + $0x7e0] sm:$0xff]
    %v1626 = vld [vmem:[#allocation7 + $0x7e8] sm:$0xff]
    %v1627 = vld [vmem:[#allocation7 + $0x7f0] sm:$0xff]
    %v1628 = vld [vmem:[#allocation7 + $0x7f8] sm:$0xff]
    %v1629 = vunpack.c.l.s8.bf16 %v1373
    %v1630 = vunpack.c.l.s8.bf16 %v1374
    %v1631 = vunpack.c.l.s8.bf16 %v1375
    %v1632 = vunpack.c.l.s8.bf16 %v1376
    %v1633 = vunpack.c.h.s8.bf16 %v1373
    %v1634 = vunpack.c.h.s8.bf16 %v1374
    %v1635 = vunpack.c.h.s8.bf16 %v1375
    %v1636 = vunpack.c.h.s8.bf16 %v1376
    %v1637 = vunpack.c.l.s8.bf16 %v1377
    %v1638 = vunpack.c.l.s8.bf16 %v1378
    %v1639 = vunpack.c.l.s8.bf16 %v1379
    %v1640 = vunpack.c.l.s8.bf16 %v1380
    %v1641 = vunpack.c.h.s8.bf16 %v1377
    %v1642 = vunpack.c.h.s8.bf16 %v1378
    %v1643 = vunpack.c.h.s8.bf16 %v1379
    %v1644 = vunpack.c.h.s8.bf16 %v1380
    %v1645 = vunpack.c.l.s8.bf16 %v1381
    %v1646 = vunpack.c.l.s8.bf16 %v1382
    %v1647 = vunpack.c.l.s8.bf16 %v1383
    %v1648 = vunpack.c.l.s8.bf16 %v1384
    %v1649 = vunpack.c.h.s8.bf16 %v1381
    %v1650 = vunpack.c.h.s8.bf16 %v1382
    %v1651 = vunpack.c.h.s8.bf16 %v1383
    %v1652 = vunpack.c.h.s8.bf16 %v1384
    %v1653 = vunpack.c.l.s8.bf16 %v1385
    %v1654 = vunpack.c.l.s8.bf16 %v1386
    %v1655 = vunpack.c.l.s8.bf16 %v1387
    %v1656 = vunpack.c.l.s8.bf16 %v1388
    %v1657 = vunpack.c.h.s8.bf16 %v1385
    %v1658 = vunpack.c.h.s8.bf16 %v1386
    %v1659 = vunpack.c.h.s8.bf16 %v1387
    %v1660 = vunpack.c.h.s8.bf16 %v1388
    %v1661 = vunpack.c.l.s8.bf16 %v1389
    %v1662 = vunpack.c.l.s8.bf16 %v1390
    %v1663 = vunpack.c.l.s8.bf16 %v1391
    %v1664 = vunpack.c.l.s8.bf16 %v1392
    %v1665 = vunpack.c.h.s8.bf16 %v1389
    %v1666 = vunpack.c.h.s8.bf16 %v1390
    %v1667 = vunpack.c.h.s8.bf16 %v1391
    %v1668 = vunpack.c.h.s8.bf16 %v1392
    %v1669 = vunpack.c.l.s8.bf16 %v1393
    %v1670 = vunpack.c.l.s8.bf16 %v1394
    %v1671 = vunpack.c.l.s8.bf16 %v1395
    %v1672 = vunpack.c.l.s8.bf16 %v1396
    %v1673 = vunpack.c.h.s8.bf16 %v1393
    %v1674 = vunpack.c.h.s8.bf16 %v1394
    %v1675 = vunpack.c.h.s8.bf16 %v1395
    %v1676 = vunpack.c.h.s8.bf16 %v1396
    %v1677 = vunpack.c.l.s8.bf16 %v1397
    %v1678 = vunpack.c.l.s8.bf16 %v1398
    %v1679 = vunpack.c.l.s8.bf16 %v1399
    %v1680 = vunpack.c.l.s8.bf16 %v1400
    %v1681 = vunpack.c.h.s8.bf16 %v1397
    %v1682 = vunpack.c.h.s8.bf16 %v1398
    %v1683 = vunpack.c.h.s8.bf16 %v1399
    %v1684 = vunpack.c.h.s8.bf16 %v1400
    %v1685 = vunpack.c.l.s8.bf16 %v1401
    %v1686 = vunpack.c.l.s8.bf16 %v1402
    %v1687 = vunpack.c.l.s8.bf16 %v1403
    %v1688 = vunpack.c.l.s8.bf16 %v1404
    %v1689 = vunpack.c.h.s8.bf16 %v1401
    %v1690 = vunpack.c.h.s8.bf16 %v1402
    %v1691 = vunpack.c.h.s8.bf16 %v1403
    %v1692 = vunpack.c.h.s8.bf16 %v1404
    %v1693 = vunpack.c.l.s8.bf16 %v1405
    %v1694 = vunpack.c.l.s8.bf16 %v1406
    %v1695 = vunpack.c.l.s8.bf16 %v1407
    %v1696 = vunpack.c.l.s8.bf16 %v1408
    %v1697 = vunpack.c.h.s8.bf16 %v1405
    %v1698 = vunpack.c.h.s8.bf16 %v1406
    %v1699 = vunpack.c.h.s8.bf16 %v1407
    %v1700 = vunpack.c.h.s8.bf16 %v1408
    %v1701 = vunpack.c.l.s8.bf16 %v1409
    %v1702 = vunpack.c.l.s8.bf16 %v1410
    %v1703 = vunpack.c.l.s8.bf16 %v1411
    %v1704 = vunpack.c.l.s8.bf16 %v1412
    %v1705 = vunpack.c.h.s8.bf16 %v1409
    %v1706 = vunpack.c.h.s8.bf16 %v1410
    %v1707 = vunpack.c.h.s8.bf16 %v1411
    %v1708 = vunpack.c.h.s8.bf16 %v1412
    %v1709 = vunpack.c.l.s8.bf16 %v1413
    %v1710 = vunpack.c.l.s8.bf16 %v1414
    %v1711 = vunpack.c.l.s8.bf16 %v1415
    %v1712 = vunpack.c.l.s8.bf16 %v1416
    %v1713 = vunpack.c.h.s8.bf16 %v1413
    %v1714 = vunpack.c.h.s8.bf16 %v1414
    %v1715 = vunpack.c.h.s8.bf16 %v1415
    %v1716 = vunpack.c.h.s8.bf16 %v1416
    %v1717 = vunpack.c.l.s8.bf16 %v1417
    %v1718 = vunpack.c.l.s8.bf16 %v1418
    %v1719 = vunpack.c.l.s8.bf16 %v1419
    %v1720 = vunpack.c.l.s8.bf16 %v1420
    %v1721 = vunpack.c.h.s8.bf16 %v1417
    %v1722 = vunpack.c.h.s8.bf16 %v1418
    %v1723 = vunpack.c.h.s8.bf16 %v1419
    %v1724 = vunpack.c.h.s8.bf16 %v1420
    %v1725 = vunpack.c.l.s8.bf16 %v1421
    %v1726 = vunpack.c.l.s8.bf16 %v1422
    %v1727 = vunpack.c.l.s8.bf16 %v1423
    %v1728 = vunpack.c.l.s8.bf16 %v1424
    %v1729 = vunpack.c.h.s8.bf16 %v1421
    %v1730 = vunpack.c.h.s8.bf16 %v1422
    %v1731 = vunpack.c.h.s8.bf16 %v1423
    %v1732 = vunpack.c.h.s8.bf16 %v1424
    %v1733 = vunpack.c.l.s8.bf16 %v1425
    %v1734 = vunpack.c.l.s8.bf16 %v1426
    %v1735 = vunpack.c.l.s8.bf16 %v1427
    %v1736 = vunpack.c.l.s8.bf16 %v1428
    %v1737 = vunpack.c.h.s8.bf16 %v1425
    %v1738 = vunpack.c.h.s8.bf16 %v1426
    %v1739 = vunpack.c.h.s8.bf16 %v1427
    %v1740 = vunpack.c.h.s8.bf16 %v1428
    %v1741 = vunpack.c.l.s8.bf16 %v1429
    %v1742 = vunpack.c.l.s8.bf16 %v1430
    %v1743 = vunpack.c.l.s8.bf16 %v1431
    %v1744 = vunpack.c.l.s8.bf16 %v1432
    %v1745 = vunpack.c.h.s8.bf16 %v1429
    %v1746 = vunpack.c.h.s8.bf16 %v1430
    %v1747 = vunpack.c.h.s8.bf16 %v1431
    %v1748 = vunpack.c.h.s8.bf16 %v1432
    %v1749 = vunpack.c.l.s8.bf16 %v1433
    %v1750 = vunpack.c.l.s8.bf16 %v1434
    %v1751 = vunpack.c.l.s8.bf16 %v1435
    %v1752 = vunpack.c.l.s8.bf16 %v1436
    %v1753 = vunpack.c.h.s8.bf16 %v1433
    %v1754 = vunpack.c.h.s8.bf16 %v1434
    %v1755 = vunpack.c.h.s8.bf16 %v1435
    %v1756 = vunpack.c.h.s8.bf16 %v1436
    %v1757 = vunpack.c.l.s8.bf16 %v1437
    %v1758 = vunpack.c.l.s8.bf16 %v1438
    %v1759 = vunpack.c.l.s8.bf16 %v1439
    %v1760 = vunpack.c.l.s8.bf16 %v1440
    %v1761 = vunpack.c.h.s8.bf16 %v1437
    %v1762 = vunpack.c.h.s8.bf16 %v1438
    %v1763 = vunpack.c.h.s8.bf16 %v1439
    %v1764 = vunpack.c.h.s8.bf16 %v1440
    %v1765 = vunpack.c.l.s8.bf16 %v1441
    %v1766 = vunpack.c.l.s8.bf16 %v1442
    %v1767 = vunpack.c.l.s8.bf16 %v1443
    %v1768 = vunpack.c.l.s8.bf16 %v1444
    %v1769 = vunpack.c.h.s8.bf16 %v1441
    %v1770 = vunpack.c.h.s8.bf16 %v1442
    %v1771 = vunpack.c.h.s8.bf16 %v1443
    %v1772 = vunpack.c.h.s8.bf16 %v1444
    %v1773 = vunpack.c.l.s8.bf16 %v1445
    %v1774 = vunpack.c.l.s8.bf16 %v1446
    %v1775 = vunpack.c.l.s8.bf16 %v1447
    %v1776 = vunpack.c.l.s8.bf16 %v1448
    %v1777 = vunpack.c.h.s8.bf16 %v1445
    %v1778 = vunpack.c.h.s8.bf16 %v1446
    %v1779 = vunpack.c.h.s8.bf16 %v1447
    %v1780 = vunpack.c.h.s8.bf16 %v1448
    %v1781 = vunpack.c.l.s8.bf16 %v1449
    %v1782 = vunpack.c.l.s8.bf16 %v1450
    %v1783 = vunpack.c.l.s8.bf16 %v1451
    %v1784 = vunpack.c.l.s8.bf16 %v1452
    %v1785 = vunpack.c.h.s8.bf16 %v1449
    %v1786 = vunpack.c.h.s8.bf16 %v1450
    %v1787 = vunpack.c.h.s8.bf16 %v1451
    %v1788 = vunpack.c.h.s8.bf16 %v1452
    %v1789 = vunpack.c.l.s8.bf16 %v1453
    %v1790 = vunpack.c.l.s8.bf16 %v1454
    %v1791 = vunpack.c.l.s8.bf16 %v1455
    %v1792 = vunpack.c.l.s8.bf16 %v1456
    %v1793 = vunpack.c.h.s8.bf16 %v1453
    %v1794 = vunpack.c.h.s8.bf16 %v1454
    %v1795 = vunpack.c.h.s8.bf16 %v1455
    %v1796 = vunpack.c.h.s8.bf16 %v1456
    %v1797 = vunpack.c.l.s8.bf16 %v1457
    %v1798 = vunpack.c.l.s8.bf16 %v1458
    %v1799 = vunpack.c.l.s8.bf16 %v1459
    %v1800 = vunpack.c.l.s8.bf16 %v1460
    %v1801 = vunpack.c.h.s8.bf16 %v1457
    %v1802 = vunpack.c.h.s8.bf16 %v1458
    %v1803 = vunpack.c.h.s8.bf16 %v1459
    %v1804 = vunpack.c.h.s8.bf16 %v1460
    %v1805 = vunpack.c.l.s8.bf16 %v1461
    %v1806 = vunpack.c.l.s8.bf16 %v1462
    %v1807 = vunpack.c.l.s8.bf16 %v1463
    %v1808 = vunpack.c.l.s8.bf16 %v1464
    %v1809 = vunpack.c.h.s8.bf16 %v1461
    %v1810 = vunpack.c.h.s8.bf16 %v1462
    %v1811 = vunpack.c.h.s8.bf16 %v1463
    %v1812 = vunpack.c.h.s8.bf16 %v1464
    %v1813 = vunpack.c.l.s8.bf16 %v1465
    %v1814 = vunpack.c.l.s8.bf16 %v1466
    %v1815 = vunpack.c.l.s8.bf16 %v1467
    %v1816 = vunpack.c.l.s8.bf16 %v1468
    %v1817 = vunpack.c.h.s8.bf16 %v1465
    %v1818 = vunpack.c.h.s8.bf16 %v1466
    %v1819 = vunpack.c.h.s8.bf16 %v1467
    %v1820 = vunpack.c.h.s8.bf16 %v1468
    %v1821 = vunpack.c.l.s8.bf16 %v1469
    %v1822 = vunpack.c.l.s8.bf16 %v1470
    %v1823 = vunpack.c.l.s8.bf16 %v1471
    %v1824 = vunpack.c.l.s8.bf16 %v1472
    %v1825 = vunpack.c.h.s8.bf16 %v1469
    %v1826 = vunpack.c.h.s8.bf16 %v1470
    %v1827 = vunpack.c.h.s8.bf16 %v1471
    %v1828 = vunpack.c.h.s8.bf16 %v1472
    %v1829 = vunpack.c.l.s8.bf16 %v1473
    %v1830 = vunpack.c.l.s8.bf16 %v1474
    %v1831 = vunpack.c.l.s8.bf16 %v1475
    %v1832 = vunpack.c.l.s8.bf16 %v1476
    %v1833 = vunpack.c.h.s8.bf16 %v1473
    %v1834 = vunpack.c.h.s8.bf16 %v1474
    %v1835 = vunpack.c.h.s8.bf16 %v1475
    %v1836 = vunpack.c.h.s8.bf16 %v1476
    %v1837 = vunpack.c.l.s8.bf16 %v1477
    %v1838 = vunpack.c.l.s8.bf16 %v1478
    %v1839 = vunpack.c.l.s8.bf16 %v1479
    %v1840 = vunpack.c.l.s8.bf16 %v1480
    %v1841 = vunpack.c.h.s8.bf16 %v1477
    %v1842 = vunpack.c.h.s8.bf16 %v1478
    %v1843 = vunpack.c.h.s8.bf16 %v1479
    %v1844 = vunpack.c.h.s8.bf16 %v1480
    %v1845 = vunpack.c.l.s8.bf16 %v1481
    %v1846 = vunpack.c.l.s8.bf16 %v1482
    %v1847 = vunpack.c.l.s8.bf16 %v1483
    %v1848 = vunpack.c.l.s8.bf16 %v1484
    %v1849 = vunpack.c.h.s8.bf16 %v1481
    %v1850 = vunpack.c.h.s8.bf16 %v1482
    %v1851 = vunpack.c.h.s8.bf16 %v1483
    %v1852 = vunpack.c.h.s8.bf16 %v1484
    %v1853 = vunpack.c.l.s8.bf16 %v1485
    %v1854 = vunpack.c.l.s8.bf16 %v1486
    %v1855 = vunpack.c.l.s8.bf16 %v1487
    %v1856 = vunpack.c.l.s8.bf16 %v1488
    %v1857 = vunpack.c.h.s8.bf16 %v1485
    %v1858 = vunpack.c.h.s8.bf16 %v1486
    %v1859 = vunpack.c.h.s8.bf16 %v1487
    %v1860 = vunpack.c.h.s8.bf16 %v1488
    %v1861 = vunpack.c.l.s8.bf16 %v1489
    %v1862 = vunpack.c.l.s8.bf16 %v1490
    %v1863 = vunpack.c.l.s8.bf16 %v1491
    %v1864 = vunpack.c.l.s8.bf16 %v1492
    %v1865 = vunpack.c.h.s8.bf16 %v1489
    %v1866 = vunpack.c.h.s8.bf16 %v1490
    %v1867 = vunpack.c.h.s8.bf16 %v1491
    %v1868 = vunpack.c.h.s8.bf16 %v1492
    %v1869 = vunpack.c.l.s8.bf16 %v1493
    %v1870 = vunpack.c.l.s8.bf16 %v1494
    %v1871 = vunpack.c.l.s8.bf16 %v1495
    %v1872 = vunpack.c.l.s8.bf16 %v1496
    %v1873 = vunpack.c.h.s8.bf16 %v1493
    %v1874 = vunpack.c.h.s8.bf16 %v1494
    %v1875 = vunpack.c.h.s8.bf16 %v1495
    %v1876 = vunpack.c.h.s8.bf16 %v1496
    %v1877 = vunpack.c.l.s8.bf16 %v1497
    %v1878 = vunpack.c.l.s8.bf16 %v1498
    %v1879 = vunpack.c.l.s8.bf16 %v1499
    %v1880 = vunpack.c.l.s8.bf16 %v1500
    %v1881 = vunpack.c.h.s8.bf16 %v1497
    %v1882 = vunpack.c.h.s8.bf16 %v1498
    %v1883 = vunpack.c.h.s8.bf16 %v1499
    %v1884 = vunpack.c.h.s8.bf16 %v1500
    %v1885 = vunpack.c.l.s8.bf16 %v1501
    %v1886 = vunpack.c.l.s8.bf16 %v1502
    %v1887 = vunpack.c.l.s8.bf16 %v1503
    %v1888 = vunpack.c.l.s8.bf16 %v1504
    %v1889 = vunpack.c.h.s8.bf16 %v1501
    %v1890 = vunpack.c.h.s8.bf16 %v1502
    %v1891 = vunpack.c.h.s8.bf16 %v1503
    %v1892 = vunpack.c.h.s8.bf16 %v1504
    %v1893 = vunpack.c.l.s8.bf16 %v1505
    %v1894 = vunpack.c.l.s8.bf16 %v1506
    %v1895 = vunpack.c.l.s8.bf16 %v1507
    %v1896 = vunpack.c.l.s8.bf16 %v1508
    %v1897 = vunpack.c.h.s8.bf16 %v1505
    %v1898 = vunpack.c.h.s8.bf16 %v1506
    %v1899 = vunpack.c.h.s8.bf16 %v1507
    %v1900 = vunpack.c.h.s8.bf16 %v1508
    %v1901 = vunpack.c.l.s8.bf16 %v1509
    %v1902 = vunpack.c.l.s8.bf16 %v1510
    %v1903 = vunpack.c.l.s8.bf16 %v1511
    %v1904 = vunpack.c.l.s8.bf16 %v1512
    %v1905 = vunpack.c.h.s8.bf16 %v1509
    %v1906 = vunpack.c.h.s8.bf16 %v1510
    %v1907 = vunpack.c.h.s8.bf16 %v1511
    %v1908 = vunpack.c.h.s8.bf16 %v1512
    %v1909 = vunpack.c.l.s8.bf16 %v1513
    %v1910 = vunpack.c.l.s8.bf16 %v1514
    %v1911 = vunpack.c.l.s8.bf16 %v1515
    %v1912 = vunpack.c.l.s8.bf16 %v1516
    %v1913 = vunpack.c.h.s8.bf16 %v1513
    %v1914 = vunpack.c.h.s8.bf16 %v1514
    %v1915 = vunpack.c.h.s8.bf16 %v1515
    %v1916 = vunpack.c.h.s8.bf16 %v1516
    %v1917 = vunpack.c.l.s8.bf16 %v1517
    %v1918 = vunpack.c.l.s8.bf16 %v1518
    %v1919 = vunpack.c.l.s8.bf16 %v1519
    %v1920 = vunpack.c.l.s8.bf16 %v1520
    %v1921 = vunpack.c.h.s8.bf16 %v1517
    %v1922 = vunpack.c.h.s8.bf16 %v1518
    %v1923 = vunpack.c.h.s8.bf16 %v1519
    %v1924 = vunpack.c.h.s8.bf16 %v1520
    %v1925 = vunpack.c.l.s8.bf16 %v1521
    %v1926 = vunpack.c.l.s8.bf16 %v1522
    %v1927 = vunpack.c.l.s8.bf16 %v1523
    %v1928 = vunpack.c.l.s8.bf16 %v1524
    %v1929 = vunpack.c.h.s8.bf16 %v1521
    %v1930 = vunpack.c.h.s8.bf16 %v1522
    %v1931 = vunpack.c.h.s8.bf16 %v1523
    %v1932 = vunpack.c.h.s8.bf16 %v1524
    %v1933 = vunpack.c.l.s8.bf16 %v1525
    %v1934 = vunpack.c.l.s8.bf16 %v1526
    %v1935 = vunpack.c.l.s8.bf16 %v1527
    %v1936 = vunpack.c.l.s8.bf16 %v1528
    %v1937 = vunpack.c.h.s8.bf16 %v1525
    %v1938 = vunpack.c.h.s8.bf16 %v1526
    %v1939 = vunpack.c.h.s8.bf16 %v1527
    %v1940 = vunpack.c.h.s8.bf16 %v1528
    %v1941 = vunpack.c.l.s8.bf16 %v1529
    %v1942 = vunpack.c.l.s8.bf16 %v1530
    %v1943 = vunpack.c.l.s8.bf16 %v1531
    %v1944 = vunpack.c.l.s8.bf16 %v1532
    %v1945 = vunpack.c.h.s8.bf16 %v1529
    %v1946 = vunpack.c.h.s8.bf16 %v1530
    %v1947 = vunpack.c.h.s8.bf16 %v1531
    %v1948 = vunpack.c.h.s8.bf16 %v1532
    %v1949 = vunpack.c.l.s8.bf16 %v1533
    %v1950 = vunpack.c.l.s8.bf16 %v1534
    %v1951 = vunpack.c.l.s8.bf16 %v1535
    %v1952 = vunpack.c.l.s8.bf16 %v1536
    %v1953 = vunpack.c.h.s8.bf16 %v1533
    %v1954 = vunpack.c.h.s8.bf16 %v1534
    %v1955 = vunpack.c.h.s8.bf16 %v1535
    %v1956 = vunpack.c.h.s8.bf16 %v1536
    %v1957 = vunpack.c.l.s8.bf16 %v1537
    %v1958 = vunpack.c.l.s8.bf16 %v1538
    %v1959 = vunpack.c.l.s8.bf16 %v1539
    %v1960 = vunpack.c.l.s8.bf16 %v1540
    %v1961 = vunpack.c.h.s8.bf16 %v1537
    %v1962 = vunpack.c.h.s8.bf16 %v1538
    %v1963 = vunpack.c.h.s8.bf16 %v1539
    %v1964 = vunpack.c.h.s8.bf16 %v1540
    %v1965 = vunpack.c.l.s8.bf16 %v1541
    %v1966 = vunpack.c.l.s8.bf16 %v1542
    %v1967 = vunpack.c.l.s8.bf16 %v1543
    %v1968 = vunpack.c.l.s8.bf16 %v1544
    %v1969 = vunpack.c.h.s8.bf16 %v1541
    %v1970 = vunpack.c.h.s8.bf16 %v1542
    %v1971 = vunpack.c.h.s8.bf16 %v1543
    %v1972 = vunpack.c.h.s8.bf16 %v1544
    %v1973 = vunpack.c.l.s8.bf16 %v1545
    %v1974 = vunpack.c.l.s8.bf16 %v1546
    %v1975 = vunpack.c.l.s8.bf16 %v1547
    %v1976 = vunpack.c.l.s8.bf16 %v1548
    %v1977 = vunpack.c.h.s8.bf16 %v1545
    %v1978 = vunpack.c.h.s8.bf16 %v1546
    %v1979 = vunpack.c.h.s8.bf16 %v1547
    %v1980 = vunpack.c.h.s8.bf16 %v1548
    %v1981 = vunpack.c.l.s8.bf16 %v1549
    %v1982 = vunpack.c.l.s8.bf16 %v1550
    %v1983 = vunpack.c.l.s8.bf16 %v1551
    %v1984 = vunpack.c.l.s8.bf16 %v1552
    %v1985 = vunpack.c.h.s8.bf16 %v1549
    %v1986 = vunpack.c.h.s8.bf16 %v1550
    %v1987 = vunpack.c.h.s8.bf16 %v1551
    %v1988 = vunpack.c.h.s8.bf16 %v1552
    %v1989 = vunpack.c.l.s8.bf16 %v1553
    %v1990 = vunpack.c.l.s8.bf16 %v1554
    %v1991 = vunpack.c.l.s8.bf16 %v1555
    %v1992 = vunpack.c.l.s8.bf16 %v1556
    %v1993 = vunpack.c.h.s8.bf16 %v1553
    %v1994 = vunpack.c.h.s8.bf16 %v1554
    %v1995 = vunpack.c.h.s8.bf16 %v1555
    %v1996 = vunpack.c.h.s8.bf16 %v1556
    %v1997 = vunpack.c.l.s8.bf16 %v1557
    %v1998 = vunpack.c.l.s8.bf16 %v1558
    %v1999 = vunpack.c.l.s8.bf16 %v1559
    %v2000 = vunpack.c.l.s8.bf16 %v1560
    %v2001 = vunpack.c.h.s8.bf16 %v1557
    %v2002 = vunpack.c.h.s8.bf16 %v1558
    %v2003 = vunpack.c.h.s8.bf16 %v1559
    %v2004 = vunpack.c.h.s8.bf16 %v1560
    %v2005 = vunpack.c.l.s8.bf16 %v1561
    %v2006 = vunpack.c.l.s8.bf16 %v1562
    %v2007 = vunpack.c.l.s8.bf16 %v1563
    %v2008 = vunpack.c.l.s8.bf16 %v1564
    %v2009 = vunpack.c.h.s8.bf16 %v1561
    %v2010 = vunpack.c.h.s8.bf16 %v1562
    %v2011 = vunpack.c.h.s8.bf16 %v1563
    %v2012 = vunpack.c.h.s8.bf16 %v1564
    %v2013 = vunpack.c.l.s8.bf16 %v1565
    %v2014 = vunpack.c.l.s8.bf16 %v1566
    %v2015 = vunpack.c.l.s8.bf16 %v1567
    %v2016 = vunpack.c.l.s8.bf16 %v1568
    %v2017 = vunpack.c.h.s8.bf16 %v1565
    %v2018 = vunpack.c.h.s8.bf16 %v1566
    %v2019 = vunpack.c.h.s8.bf16 %v1567
    %v2020 = vunpack.c.h.s8.bf16 %v1568
    %v2021 = vunpack.c.l.s8.bf16 %v1569
    %v2022 = vunpack.c.l.s8.bf16 %v1570
    %v2023 = vunpack.c.l.s8.bf16 %v1571
    %v2024 = vunpack.c.l.s8.bf16 %v1572
    %v2025 = vunpack.c.h.s8.bf16 %v1569
    %v2026 = vunpack.c.h.s8.bf16 %v1570
    %v2027 = vunpack.c.h.s8.bf16 %v1571
    %v2028 = vunpack.c.h.s8.bf16 %v1572
    %v2029 = vunpack.c.l.s8.bf16 %v1573
    %v2030 = vunpack.c.l.s8.bf16 %v1574
    %v2031 = vunpack.c.l.s8.bf16 %v1575
    %v2032 = vunpack.c.l.s8.bf16 %v1576
    %v2033 = vunpack.c.h.s8.bf16 %v1573
    %v2034 = vunpack.c.h.s8.bf16 %v1574
    %v2035 = vunpack.c.h.s8.bf16 %v1575
    %v2036 = vunpack.c.h.s8.bf16 %v1576
    %v2037 = vunpack.c.l.s8.bf16 %v1577
    %v2038 = vunpack.c.l.s8.bf16 %v1578
    %v2039 = vunpack.c.l.s8.bf16 %v1579
    %v2040 = vunpack.c.l.s8.bf16 %v1580
    %v2041 = vunpack.c.h.s8.bf16 %v1577
    %v2042 = vunpack.c.h.s8.bf16 %v1578
    %v2043 = vunpack.c.h.s8.bf16 %v1579
    %v2044 = vunpack.c.h.s8.bf16 %v1580
    %v2045 = vunpack.c.l.s8.bf16 %v1581
    %v2046 = vunpack.c.l.s8.bf16 %v1582
    %v2047 = vunpack.c.l.s8.bf16 %v1583
    %v2048 = vunpack.c.l.s8.bf16 %v1584
    %v2049 = vunpack.c.h.s8.bf16 %v1581
    %v2050 = vunpack.c.h.s8.bf16 %v1582
    %v2051 = vunpack.c.h.s8.bf16 %v1583
    %v2052 = vunpack.c.h.s8.bf16 %v1584
    %v2053 = vunpack.c.l.s8.bf16 %v1585
    %v2054 = vunpack.c.l.s8.bf16 %v1586
    %v2055 = vunpack.c.l.s8.bf16 %v1587
    %v2056 = vunpack.c.l.s8.bf16 %v1588
    %v2057 = vunpack.c.h.s8.bf16 %v1585
    %v2058 = vunpack.c.h.s8.bf16 %v1586
    %v2059 = vunpack.c.h.s8.bf16 %v1587
    %v2060 = vunpack.c.h.s8.bf16 %v1588
    %v2061 = vunpack.c.l.s8.bf16 %v1589
    %v2062 = vunpack.c.l.s8.bf16 %v1590
    %v2063 = vunpack.c.l.s8.bf16 %v1591
    %v2064 = vunpack.c.l.s8.bf16 %v1592
    %v2065 = vunpack.c.h.s8.bf16 %v1589
    %v2066 = vunpack.c.h.s8.bf16 %v1590
    %v2067 = vunpack.c.h.s8.bf16 %v1591
    %v2068 = vunpack.c.h.s8.bf16 %v1592
    %v2069 = vunpack.c.l.s8.bf16 %v1593
    %v2070 = vunpack.c.l.s8.bf16 %v1594
    %v2071 = vunpack.c.l.s8.bf16 %v1595
    %v2072 = vunpack.c.l.s8.bf16 %v1596
    %v2073 = vunpack.c.h.s8.bf16 %v1593
    %v2074 = vunpack.c.h.s8.bf16 %v1594
    %v2075 = vunpack.c.h.s8.bf16 %v1595
    %v2076 = vunpack.c.h.s8.bf16 %v1596
    %v2077 = vunpack.c.l.s8.bf16 %v1597
    %v2078 = vunpack.c.l.s8.bf16 %v1598
    %v2079 = vunpack.c.l.s8.bf16 %v1599
    %v2080 = vunpack.c.l.s8.bf16 %v1600
    %v2081 = vunpack.c.h.s8.bf16 %v1597
    %v2082 = vunpack.c.h.s8.bf16 %v1598
    %v2083 = vunpack.c.h.s8.bf16 %v1599
    %v2084 = vunpack.c.h.s8.bf16 %v1600
    %v2085 = vunpack.c.l.s8.bf16 %v1601
    %v2086 = vunpack.c.l.s8.bf16 %v1602
    %v2087 = vunpack.c.l.s8.bf16 %v1603
    %v2088 = vunpack.c.l.s8.bf16 %v1604
    %v2089 = vunpack.c.h.s8.bf16 %v1601
    %v2090 = vunpack.c.h.s8.bf16 %v1602
    %v2091 = vunpack.c.h.s8.bf16 %v1603
    %v2092 = vunpack.c.h.s8.bf16 %v1604
    %v2093 = vunpack.c.l.s8.bf16 %v1605
    %v2094 = vunpack.c.l.s8.bf16 %v1606
    %v2095 = vunpack.c.l.s8.bf16 %v1607
    %v2096 = vunpack.c.l.s8.bf16 %v1608
    %v2097 = vunpack.c.h.s8.bf16 %v1605
    %v2098 = vunpack.c.h.s8.bf16 %v1606
    %v2099 = vunpack.c.h.s8.bf16 %v1607
    %v2100 = vunpack.c.h.s8.bf16 %v1608
    %v2101 = vunpack.c.l.s8.bf16 %v1609
    %v2102 = vunpack.c.l.s8.bf16 %v1610
    %v2103 = vunpack.c.l.s8.bf16 %v1611
    %v2104 = vunpack.c.l.s8.bf16 %v1612
    %v2105 = vunpack.c.h.s8.bf16 %v1609
    %v2106 = vunpack.c.h.s8.bf16 %v1610
    %v2107 = vunpack.c.h.s8.bf16 %v1611
    %v2108 = vunpack.c.h.s8.bf16 %v1612
    %v2109 = vunpack.c.l.s8.bf16 %v1613
    %v2110 = vunpack.c.l.s8.bf16 %v1614
    %v2111 = vunpack.c.l.s8.bf16 %v1615
    %v2112 = vunpack.c.l.s8.bf16 %v1616
    %v2113 = vunpack.c.h.s8.bf16 %v1613
    %v2114 = vunpack.c.h.s8.bf16 %v1614
    %v2115 = vunpack.c.h.s8.bf16 %v1615
    %v2116 = vunpack.c.h.s8.bf16 %v1616
    %v2117 = vunpack.c.l.s8.bf16 %v1617
    %v2118 = vunpack.c.l.s8.bf16 %v1618
    %v2119 = vunpack.c.l.s8.bf16 %v1619
    %v2120 = vunpack.c.l.s8.bf16 %v1620
    %v2121 = vunpack.c.h.s8.bf16 %v1617
    %v2122 = vunpack.c.h.s8.bf16 %v1618
    %v2123 = vunpack.c.h.s8.bf16 %v1619
    %v2124 = vunpack.c.h.s8.bf16 %v1620
    %v2125 = vunpack.c.l.s8.bf16 %v1621
    %v2126 = vunpack.c.l.s8.bf16 %v1622
    %v2127 = vunpack.c.l.s8.bf16 %v1623
    %v2128 = vunpack.c.l.s8.bf16 %v1624
    %v2129 = vunpack.c.h.s8.bf16 %v1621
    %v2130 = vunpack.c.h.s8.bf16 %v1622
    %v2131 = vunpack.c.h.s8.bf16 %v1623
    %v2132 = vunpack.c.h.s8.bf16 %v1624
    %v2133 = vunpack.c.l.s8.bf16 %v1625
    %v2134 = vunpack.c.l.s8.bf16 %v1626
    %v2135 = vunpack.c.l.s8.bf16 %v1627
    %v2136 = vunpack.c.l.s8.bf16 %v1628
    %v2137 = vunpack.c.h.s8.bf16 %v1625
    %v2138 = vunpack.c.h.s8.bf16 %v1626
    %v2139 = vunpack.c.h.s8.bf16 %v1627
    %v2140 = vunpack.c.h.s8.bf16 %v1628
    %2141 = vmatprep.subr.bf16.mxu0 %v1630
    %2142 = vmatpush1.bf16.msra.mxu0 %v1629
    %2143 = vmatprep.subr.bf16.mxu0 %v1634
    %2144 = vmatpush1.bf16.msra.mxu0 %v1633
    %2145 = vmatprep.subr.bf16.mxu0 %v1638
    %2146 = vmatpush1.bf16.msra.mxu0 %v1637
    %2147 = vmatprep.subr.bf16.mxu0 %v1642
    %2148 = vmatpush1.bf16.msra.mxu0 %v1641
    %2149 = vmatprep.subr.bf16.mxu0 %v1646
    %2150 = vmatpush1.bf16.msra.mxu0 %v1645
    %2151 = vmatprep.subr.bf16.mxu0 %v1650
    %2152 = vmatpush1.bf16.msra.mxu0 %v1649
    %2153 = vmatprep.subr.bf16.mxu0 %v1654
    %2154 = vmatpush1.bf16.msra.mxu0 %v1653
    %2155 = vmatprep.subr.bf16.mxu0 %v1658
    %2156 = vmatpush1.bf16.msra.mxu0 %v1657
    %2157 = vmatprep.subr.bf16.mxu0 %v1662
    %2158 = vmatpush1.bf16.msra.mxu0 %v1661
    %2159 = vmatprep.subr.bf16.mxu0 %v1666
    %2160 = vmatpush1.bf16.msra.mxu0 %v1665
    %2161 = vmatprep.subr.bf16.mxu0 %v1670
    %2162 = vmatpush1.bf16.msra.mxu0 %v1669
    %2163 = vmatprep.subr.bf16.mxu0 %v1674
    %2164 = vmatpush1.bf16.msra.mxu0 %v1673
    %2165 = vmatprep.subr.bf16.mxu0 %v1678
    %2166 = vmatpush1.bf16.msra.mxu0 %v1677
    %2167 = vmatprep.subr.bf16.mxu0 %v1682
    %2168 = vmatpush1.bf16.msra.mxu0 %v1681
    %2169 = vmatprep.subr.bf16.mxu0 %v1686
    %2170 = vmatpush1.bf16.msra.mxu0 %v1685
    %2171 = vmatprep.subr.bf16.mxu0 %v1690
    %2172 = vmatpush1.bf16.msra.mxu0 %v1689
    %2173 = vmatprep.mubr.bf16.mxu0 %v1358
    %2174 = vmatmul.mubr.bf16.gmra.mrb[0].mxu0 %v1357
    %v2175 = vpop.f32.mrb[0].mxu0
    %v2176 = vadd.f32 0.0, %v2175
    %v2177 = vpop.f32.mrb[0].mxu0
    %v2178 = vadd.f32 0.0, %v2177
    %v2179 = vpop.f32.mrb[0].mxu0
    %v2180 = vadd.f32 0.0, %v2179
    %v2181 = vpop.f32.mrb[0].mxu0
    %v2182 = vadd.f32 0.0, %v2181
    %2183 = vdwg.mxu0
    %2184 = vmatprep.subr.bf16.mxu0 %v1694
    %2185 = vmatpush1.bf16.msra.mxu0 %v1693
    %2186 = vmatprep.subr.bf16.mxu0 %v1698
    %2187 = vmatpush1.bf16.msra.mxu0 %v1697
    %2188 = vmatprep.subr.bf16.mxu0 %v1702
    %2189 = vmatpush1.bf16.msra.mxu0 %v1701
    %2190 = vmatprep.subr.bf16.mxu0 %v1706
    %2191 = vmatpush1.bf16.msra.mxu0 %v1705
    %2192 = vmatprep.subr.bf16.mxu0 %v1710
    %2193 = vmatpush1.bf16.msra.mxu0 %v1709
    %2194 = vmatprep.subr.bf16.mxu0 %v1714
    %2195 = vmatpush1.bf16.msra.mxu0 %v1713
    %2196 = vmatprep.subr.bf16.mxu0 %v1718
    %2197 = vmatpush1.bf16.msra.mxu0 %v1717
    %2198 = vmatprep.subr.bf16.mxu0 %v1722
    %2199 = vmatpush1.bf16.msra.mxu0 %v1721
    %2200 = vmatprep.subr.bf16.mxu0 %v1726
    %2201 = vmatpush1.bf16.msra.mxu0 %v1725
    %2202 = vmatprep.subr.bf16.mxu0 %v1730
    %2203 = vmatpush1.bf16.msra.mxu0 %v1729
    %2204 = vmatprep.subr.bf16.mxu0 %v1734
    %2205 = vmatpush1.bf16.msra.mxu0 %v1733
    %2206 = vmatprep.subr.bf16.mxu0 %v1738
    %2207 = vmatpush1.bf16.msra.mxu0 %v1737
    %2208 = vmatprep.subr.bf16.mxu0 %v1742
    %2209 = vmatpush1.bf16.msra.mxu0 %v1741
    %2210 = vmatprep.subr.bf16.mxu0 %v1746
    %2211 = vmatpush1.bf16.msra.mxu0 %v1745
    %2212 = vmatprep.subr.bf16.mxu0 %v1750
    %2213 = vmatpush1.bf16.msra.mxu0 %v1749
    %2214 = vmatprep.subr.bf16.mxu0 %v1754
    %2215 = vmatpush1.bf16.msra.mxu0 %v1753
    %2216 = vmatprep.mubr.bf16.mxu0 %v1360
    %2217 = vmatmul.mubr.bf16.gmra.mrb[0].mxu0 %v1359
    %v2218 = vpop.f32.mrb[0].mxu0
    %v2219 = vadd.f32 %v2176, %v2218
    %v2220 = vpop.f32.mrb[0].mxu0
    %v2221 = vadd.f32 %v2178, %v2220
    %v2222 = vpop.f32.mrb[0].mxu0
    %v2223 = vadd.f32 %v2180, %v2222
    %v2224 = vpop.f32.mrb[0].mxu0
    %v2225 = vadd.f32 %v2182, %v2224
    %2226 = vdwg.mxu0
    %2227 = vmatprep.subr.bf16.mxu0 %v1758
    %2228 = vmatpush1.bf16.msra.mxu0 %v1757
    %2229 = vmatprep.subr.bf16.mxu0 %v1762
    %2230 = vmatpush1.bf16.msra.mxu0 %v1761
    %2231 = vmatprep.subr.bf16.mxu0 %v1766
    %2232 = vmatpush1.bf16.msra.mxu0 %v1765
    %2233 = vmatprep.subr.bf16.mxu0 %v1770
    %2234 = vmatpush1.bf16.msra.mxu0 %v1769
    %2235 = vmatprep.subr.bf16.mxu0 %v1774
    %2236 = vmatpush1.bf16.msra.mxu0 %v1773
    %2237 = vmatprep.subr.bf16.mxu0 %v1778
    %2238 = vmatpush1.bf16.msra.mxu0 %v1777
    %2239 = vmatprep.subr.bf16.mxu0 %v1782
    %2240 = vmatpush1.bf16.msra.mxu0 %v1781
    %2241 = vmatprep.subr.bf16.mxu0 %v1786
    %2242 = vmatpush1.bf16.msra.mxu0 %v1785
    %2243 = vmatprep.subr.bf16.mxu0 %v1790
    %2244 = vmatpush1.bf16.msra.mxu0 %v1789
    %2245 = vmatprep.subr.bf16.mxu0 %v1794
    %2246 = vmatpush1.bf16.msra.mxu0 %v1793
    %2247 = vmatprep.subr.bf16.mxu0 %v1798
    %2248 = vmatpush1.bf16.msra.mxu0 %v1797
    %2249 = vmatprep.subr.bf16.mxu0 %v1802
    %2250 = vmatpush1.bf16.msra.mxu0 %v1801
    %2251 = vmatprep.subr.bf16.mxu0 %v1806
    %2252 = vmatpush1.bf16.msra.mxu0 %v1805
    %2253 = vmatprep.subr.bf16.mxu0 %v1810
    %2254 = vmatpush1.bf16.msra.mxu0 %v1809
    %2255 = vmatprep.subr.bf16.mxu0 %v1814
    %2256 = vmatpush1.bf16.msra.mxu0 %v1813
    %2257 = vmatprep.subr.bf16.mxu0 %v1818
    %2258 = vmatpush1.bf16.msra.mxu0 %v1817
    %2259 = vmatprep.mubr.bf16.mxu0 %v1362
    %2260 = vmatmul.mubr.bf16.gmra.mrb[0].mxu0 %v1361
    %v2261 = vpop.f32.mrb[0].mxu0
    %v2262 = vadd.f32 %v2219, %v2261
    %v2263 = vpop.f32.mrb[0].mxu0
    %v2264 = vadd.f32 %v2221, %v2263
    %v2265 = vpop.f32.mrb[0].mxu0
    %v2266 = vadd.f32 %v2223, %v2265
    %v2267 = vpop.f32.mrb[0].mxu0
    %v2268 = vadd.f32 %v2225, %v2267
    %2269 = vdwg.mxu0
    %2270 = vmatprep.subr.bf16.mxu0 %v1822
    %2271 = vmatpush1.bf16.msra.mxu0 %v1821
    %2272 = vmatprep.subr.bf16.mxu0 %v1826
    %2273 = vmatpush1.bf16.msra.mxu0 %v1825
    %2274 = vmatprep.subr.bf16.mxu0 %v1830
    %2275 = vmatpush1.bf16.msra.mxu0 %v1829
    %2276 = vmatprep.subr.bf16.mxu0 %v1834
    %2277 = vmatpush1.bf16.msra.mxu0 %v1833
    %2278 = vmatprep.subr.bf16.mxu0 %v1838
    %2279 = vmatpush1.bf16.msra.mxu0 %v1837
    %2280 = vmatprep.subr.bf16.mxu0 %v1842
    %2281 = vmatpush1.bf16.msra.mxu0 %v1841
    %2282 = vmatprep.subr.bf16.mxu0 %v1846
    %2283 = vmatpush1.bf16.msra.mxu0 %v1845
    %2284 = vmatprep.subr.bf16.mxu0 %v1850
    %2285 = vmatpush1.bf16.msra.mxu0 %v1849
    %2286 = vmatprep.subr.bf16.mxu0 %v1854
    %2287 = vmatpush1.bf16.msra.mxu0 %v1853
    %2288 = vmatprep.subr.bf16.mxu0 %v1858
    %2289 = vmatpush1.bf16.msra.mxu0 %v1857
    %2290 = vmatprep.subr.bf16.mxu0 %v1862
    %2291 = vmatpush1.bf16.msra.mxu0 %v1861
    %2292 = vmatprep.subr.bf16.mxu0 %v1866
    %2293 = vmatpush1.bf16.msra.mxu0 %v1865
    %2294 = vmatprep.subr.bf16.mxu0 %v1870
    %2295 = vmatpush1.bf16.msra.mxu0 %v1869
    %2296 = vmatprep.subr.bf16.mxu0 %v1874
    %2297 = vmatpush1.bf16.msra.mxu0 %v1873
    %2298 = vmatprep.subr.bf16.mxu0 %v1878
    %2299 = vmatpush1.bf16.msra.mxu0 %v1877
    %2300 = vmatprep.subr.bf16.mxu0 %v1882
    %2301 = vmatpush1.bf16.msra.mxu0 %v1881
    %2302 = vmatprep.mubr.bf16.mxu0 %v1364
    %2303 = vmatmul.mubr.bf16.gmra.mrb[0].mxu0 %v1363
    %v2304 = vpop.f32.mrb[0].mxu0
    %v2305 = vadd.f32 %v2262, %v2304
    %v2306 = vpop.f32.mrb[0].mxu0
    %v2307 = vadd.f32 %v2264, %v2306
    %v2308 = vpop.f32.mrb[0].mxu0
    %v2309 = vadd.f32 %v2266, %v2308
    %v2310 = vpop.f32.mrb[0].mxu0
    %v2311 = vadd.f32 %v2268, %v2310
    %2312 = vdwg.mxu0
    %2313 = vmatprep.subr.bf16.mxu0 %v1886
    %2314 = vmatpush1.bf16.msra.mxu0 %v1885
    %2315 = vmatprep.subr.bf16.mxu0 %v1890
    %2316 = vmatpush1.bf16.msra.mxu0 %v1889
    %2317 = vmatprep.subr.bf16.mxu0 %v1894
    %2318 = vmatpush1.bf16.msra.mxu0 %v1893
    %2319 = vmatprep.subr.bf16.mxu0 %v1898
    %2320 = vmatpush1.bf16.msra.mxu0 %v1897
    %2321 = vmatprep.subr.bf16.mxu0 %v1902
    %2322 = vmatpush1.bf16.msra.mxu0 %v1901
    %2323 = vmatprep.subr.bf16.mxu0 %v1906
    %2324 = vmatpush1.bf16.msra.mxu0 %v1905
    %2325 = vmatprep.subr.bf16.mxu0 %v1910
    %2326 = vmatpush1.bf16.msra.mxu0 %v1909
    %2327 = vmatprep.subr.bf16.mxu0 %v1914
    %2328 = vmatpush1.bf16.msra.mxu0 %v1913
    %2329 = vmatprep.subr.bf16.mxu0 %v1918
    %2330 = vmatpush1.bf16.msra.mxu0 %v1917
    %2331 = vmatprep.subr.bf16.mxu0 %v1922
    %2332 = vmatpush1.bf16.msra.mxu0 %v1921
    %2333 = vmatprep.subr.bf16.mxu0 %v1926
    %2334 = vmatpush1.bf16.msra.mxu0 %v1925
    %2335 = vmatprep.subr.bf16.mxu0 %v1930
    %2336 = vmatpush1.bf16.msra.mxu0 %v1929
    %2337 = vmatprep.subr.bf16.mxu0 %v1934
    %2338 = vmatpush1.bf16.msra.mxu0 %v1933
    %2339 = vmatprep.subr.bf16.mxu0 %v1938
    %2340 = vmatpush1.bf16.msra.mxu0 %v1937
    %2341 = vmatprep.subr.bf16.mxu0 %v1942
    %2342 = vmatpush1.bf16.msra.mxu0 %v1941
    %2343 = vmatprep.subr.bf16.mxu0 %v1946
    %2344 = vmatpush1.bf16.msra.mxu0 %v1945
    %2345 = vmatprep.mubr.bf16.mxu0 %v1366
    %2346 = vmatmul.mubr.bf16.gmra.mrb[0].mxu0 %v1365
    %v2347 = vpop.f32.mrb[0].mxu0
    %v2348 = vadd.f32 %v2305, %v2347
    %v2349 = vpop.f32.mrb[0].mxu0
    %v2350 = vadd.f32 %v2307, %v2349
    %v2351 = vpop.f32.mrb[0].mxu0
    %v2352 = vadd.f32 %v2309, %v2351
    %v2353 = vpop.f32.mrb[0].mxu0
    %v2354 = vadd.f32 %v2311, %v2353
    %2355 = vdwg.mxu0
    %2356 = vmatprep.subr.bf16.mxu0 %v1950
    %2357 = vmatpush1.bf16.msra.mxu0 %v1949
    %2358 = vmatprep.subr.bf16.mxu0 %v1954
    %2359 = vmatpush1.bf16.msra.mxu0 %v1953
    %2360 = vmatprep.subr.bf16.mxu0 %v1958
    %2361 = vmatpush1.bf16.msra.mxu0 %v1957
    %2362 = vmatprep.subr.bf16.mxu0 %v1962
    %2363 = vmatpush1.bf16.msra.mxu0 %v1961
    %2364 = vmatprep.subr.bf16.mxu0 %v1966
    %2365 = vmatpush1.bf16.msra.mxu0 %v1965
    %2366 = vmatprep.subr.bf16.mxu0 %v1970
    %2367 = vmatpush1.bf16.msra.mxu0 %v1969
    %2368 = vmatprep.subr.bf16.mxu0 %v1974
    %2369 = vmatpush1.bf16.msra.mxu0 %v1973
    %2370 = vmatprep.subr.bf16.mxu0 %v1978
    %2371 = vmatpush1.bf16.msra.mxu0 %v1977
    %2372 = vmatprep.subr.bf16.mxu0 %v1982
    %2373 = vmatpush1.bf16.msra.mxu0 %v1981
    %2374 = vmatprep.subr.bf16.mxu0 %v1986
    %2375 = vmatpush1.bf16.msra.mxu0 %v1985
    %2376 = vmatprep.subr.bf16.mxu0 %v1990
    %2377 = vmatpush1.bf16.msra.mxu0 %v1989
    %2378 = vmatprep.subr.bf16.mxu0 %v1994
    %2379 = vmatpush1.bf16.msra.mxu0 %v1993
    %2380 = vmatprep.subr.bf16.mxu0 %v1998
    %2381 = vmatpush1.bf16.msra.mxu0 %v1997
    %2382 = vmatprep.subr.bf16.mxu0 %v2002
    %2383 = vmatpush1.bf16.msra.mxu0 %v2001
    %2384 = vmatprep.subr.bf16.mxu0 %v2006
    %2385 = vmatpush1.bf16.msra.mxu0 %v2005
    %2386 = vmatprep.subr.bf16.mxu0 %v2010
    %2387 = vmatpush1.bf16.msra.mxu0 %v2009
    %2388 = vmatprep.mubr.bf16.mxu0 %v1368
    %2389 = vmatmul.mubr.bf16.gmra.mrb[0].mxu0 %v1367
    %v2390 = vpop.f32.mrb[0].mxu0
    %v2391 = vadd.f32 %v2348, %v2390
    %v2392 = vpop.f32.mrb[0].mxu0
    %v2393 = vadd.f32 %v2350, %v2392
    %v2394 = vpop.f32.mrb[0].mxu0
    %v2395 = vadd.f32 %v2352, %v2394
    %v2396 = vpop.f32.mrb[0].mxu0
    %v2397 = vadd.f32 %v2354, %v2396
    %2398 = vdwg.mxu0
    %2399 = vmatprep.subr.bf16.mxu0 %v2014
    %2400 = vmatpush1.bf16.msra.mxu0 %v2013
    %2401 = vmatprep.subr.bf16.mxu0 %v2018
    %2402 = vmatpush1.bf16.msra.mxu0 %v2017
    %2403 = vmatprep.subr.bf16.mxu0 %v2022
    %2404 = vmatpush1.bf16.msra.mxu0 %v2021
    %2405 = vmatprep.subr.bf16.mxu0 %v2026
    %2406 = vmatpush1.bf16.msra.mxu0 %v2025
    %2407 = vmatprep.subr.bf16.mxu0 %v2030
    %2408 = vmatpush1.bf16.msra.mxu0 %v2029
    %2409 = vmatprep.subr.bf16.mxu0 %v2034
    %2410 = vmatpush1.bf16.msra.mxu0 %v2033
    %2411 = vmatprep.subr.bf16.mxu0 %v2038
    %2412 = vmatpush1.bf16.msra.mxu0 %v2037
    %2413 = vmatprep.subr.bf16.mxu0 %v2042
    %2414 = vmatpush1.bf16.msra.mxu0 %v2041
    %2415 = vmatprep.subr.bf16.mxu0 %v2046
    %2416 = vmatpush1.bf16.msra.mxu0 %v2045
    %2417 = vmatprep.subr.bf16.mxu0 %v2050
    %2418 = vmatpush1.bf16.msra.mxu0 %v2049
    %2419 = vmatprep.subr.bf16.mxu0 %v2054
    %2420 = vmatpush1.bf16.msra.mxu0 %v2053
    %2421 = vmatprep.subr.bf16.mxu0 %v2058
    %2422 = vmatpush1.bf16.msra.mxu0 %v2057
    %2423 = vmatprep.subr.bf16.mxu0 %v2062
    %2424 = vmatpush1.bf16.msra.mxu0 %v2061
    %2425 = vmatprep.subr.bf16.mxu0 %v2066
    %2426 = vmatpush1.bf16.msra.mxu0 %v2065
    %2427 = vmatprep.subr.bf16.mxu0 %v2070
    %2428 = vmatpush1.bf16.msra.mxu0 %v2069
    %2429 = vmatprep.subr.bf16.mxu0 %v2074
    %2430 = vmatpush1.bf16.msra.mxu0 %v2073
    %2431 = vmatprep.mubr.bf16.mxu0 %v1370
    %2432 = vmatmul.mubr.bf16.gmra.mrb[0].mxu0 %v1369
    %v2433 = vpop.f32.mrb[0].mxu0
    %v2434 = vadd.f32 %v2391, %v2433
    %v2435 = vpop.f32.mrb[0].mxu0
    %v2436 = vadd.f32 %v2393, %v2435
    %v2437 = vpop.f32.mrb[0].mxu0
    %v2438 = vadd.f32 %v2395, %v2437
    %v2439 = vpop.f32.mrb[0].mxu0
    %v2440 = vadd.f32 %v2397, %v2439
    %2441 = vdwg.mxu0
    %2442 = vmatprep.subr.bf16.mxu0 %v2078
    %2443 = vmatpush1.bf16.msra.mxu0 %v2077
    %2444 = vmatprep.subr.bf16.mxu0 %v2082
    %2445 = vmatpush1.bf16.msra.mxu0 %v2081
    %2446 = vmatprep.subr.bf16.mxu0 %v2086
    %2447 = vmatpush1.bf16.msra.mxu0 %v2085
    %2448 = vmatprep.subr.bf16.mxu0 %v2090
    %2449 = vmatpush1.bf16.msra.mxu0 %v2089
    %2450 = vmatprep.subr.bf16.mxu0 %v2094
    %2451 = vmatpush1.bf16.msra.mxu0 %v2093
    %2452 = vmatprep.subr.bf16.mxu0 %v2098
    %2453 = vmatpush1.bf16.msra.mxu0 %v2097
    %2454 = vmatprep.subr.bf16.mxu0 %v2102
    %2455 = vmatpush1.bf16.msra.mxu0 %v2101
    %2456 = vmatprep.subr.bf16.mxu0 %v2106
    %2457 = vmatpush1.bf16.msra.mxu0 %v2105
    %2458 = vmatprep.subr.bf16.mxu0 %v2110
    %2459 = vmatpush1.bf16.msra.mxu0 %v2109
    %2460 = vmatprep.subr.bf16.mxu0 %v2114
    %2461 = vmatpush1.bf16.msra.mxu0 %v2113
    %2462 = vmatprep.subr.bf16.mxu0 %v2118
    %2463 = vmatpush1.bf16.msra.mxu0 %v2117
    %2464 = vmatprep.subr.bf16.mxu0 %v2122
    %2465 = vmatpush1.bf16.msra.mxu0 %v2121
    %2466 = vmatprep.subr.bf16.mxu0 %v2126
    %2467 = vmatpush1.bf16.msra.mxu0 %v2125
    %2468 = vmatprep.subr.bf16.mxu0 %v2130
    %2469 = vmatpush1.bf16.msra.mxu0 %v2129
    %2470 = vmatprep.subr.bf16.mxu0 %v2134
    %2471 = vmatpush1.bf16.msra.mxu0 %v2133
    %2472 = vmatprep.subr.bf16.mxu0 %v2138
    %2473 = vmatpush1.bf16.msra.mxu0 %v2137
    %2474 = vmatprep.mubr.bf16.mxu0 %v1372
    %2475 = vmatmul.mubr.bf16.gmra.mrb[0].mxu0 %v1371
    %v2476 = vpop.f32.mrb[0].mxu0
    %v2477 = vadd.f32 %v2434, %v2476
    %v2478 = vpop.f32.mrb[0].mxu0
    %v2479 = vadd.f32 %v2436, %v2478
    %v2480 = vpop.f32.mrb[0].mxu0
    %v2481 = vadd.f32 %v2438, %v2480
    %v2482 = vpop.f32.mrb[0].mxu0
    %v2483 = vadd.f32 %v2440, %v2482
    %2484 = vdwg.mxu0
    %2485 = vmatprep.subr.bf16.mxu0 %v1632
    %2486 = vmatpush1.bf16.msra.mxu0 %v1631
    %2487 = vmatprep.subr.bf16.mxu0 %v1636
    %2488 = vmatpush1.bf16.msra.mxu0 %v1635
    %2489 = vmatprep.subr.bf16.mxu0 %v1640
    %2490 = vmatpush1.bf16.msra.mxu0 %v1639
    %2491 = vmatprep.subr.bf16.mxu0 %v1644
    %2492 = vmatpush1.bf16.msra.mxu0 %v1643
    %2493 = vmatprep.subr.bf16.mxu0 %v1648
    %2494 = vmatpush1.bf16.msra.mxu0 %v1647
    %2495 = vmatprep.subr.bf16.mxu0 %v1652
    %2496 = vmatpush1.bf16.msra.mxu0 %v1651
    %2497 = vmatprep.subr.bf16.mxu0 %v1656
    %2498 = vmatpush1.bf16.msra.mxu0 %v1655
    %2499 = vmatprep.subr.bf16.mxu0 %v1660
    %2500 = vmatpush1.bf16.msra.mxu0 %v1659
    %2501 = vmatprep.subr.bf16.mxu0 %v1664
    %2502 = vmatpush1.bf16.msra.mxu0 %v1663
    %2503 = vmatprep.subr.bf16.mxu0 %v1668
    %2504 = vmatpush1.bf16.msra.mxu0 %v1667
    %2505 = vmatprep.subr.bf16.mxu0 %v1672
    %2506 = vmatpush1.bf16.msra.mxu0 %v1671
    %2507 = vmatprep.subr.bf16.mxu0 %v1676
    %2508 = vmatpush1.bf16.msra.mxu0 %v1675
    %2509 = vmatprep.subr.bf16.mxu0 %v1680
    %2510 = vmatpush1.bf16.msra.mxu0 %v1679
    %2511 = vmatprep.subr.bf16.mxu0 %v1684
    %2512 = vmatpush1.bf16.msra.mxu0 %v1683
    %2513 = vmatprep.subr.bf16.mxu0 %v1688
    %2514 = vmatpush1.bf16.msra.mxu0 %v1687
    %2515 = vmatprep.subr.bf16.mxu0 %v1692
    %2516 = vmatpush1.bf16.msra.mxu0 %v1691
    %2517 = vmatprep.mubr.bf16.mxu0 %v1358
    %2518 = vmatmul.mubr.bf16.gmra.mrb[0].mxu0 %v1357
    %v2519 = vpop.f32.mrb[0].mxu0
    %v2520 = vadd.f32 0.0, %v2519
    %v2521 = vpop.f32.mrb[0].mxu0
    %v2522 = vadd.f32 0.0, %v2521
    %v2523 = vpop.f32.mrb[0].mxu0
    %v2524 = vadd.f32 0.0, %v2523
    %v2525 = vpop.f32.mrb[0].mxu0
    %v2526 = vadd.f32 0.0, %v2525
    %2527 = vdwg.mxu0
    %2528 = vmatprep.subr.bf16.mxu0 %v1696
    %2529 = vmatpush1.bf16.msra.mxu0 %v1695
    %2530 = vmatprep.subr.bf16.mxu0 %v1700
    %2531 = vmatpush1.bf16.msra.mxu0 %v1699
    %2532 = vmatprep.subr.bf16.mxu0 %v1704
    %2533 = vmatpush1.bf16.msra.mxu0 %v1703
    %2534 = vmatprep.subr.bf16.mxu0 %v1708
    %2535 = vmatpush1.bf16.msra.mxu0 %v1707
    %2536 = vmatprep.subr.bf16.mxu0 %v1712
    %2537 = vmatpush1.bf16.msra.mxu0 %v1711
    %2538 = vmatprep.subr.bf16.mxu0 %v1716
    %2539 = vmatpush1.bf16.msra.mxu0 %v1715
    %2540 = vmatprep.subr.bf16.mxu0 %v1720
    %2541 = vmatpush1.bf16.msra.mxu0 %v1719
    %2542 = vmatprep.subr.bf16.mxu0 %v1724
    %2543 = vmatpush1.bf16.msra.mxu0 %v1723
    %2544 = vmatprep.subr.bf16.mxu0 %v1728
    %2545 = vmatpush1.bf16.msra.mxu0 %v1727
    %2546 = vmatprep.subr.bf16.mxu0 %v1732
    %2547 = vmatpush1.bf16.msra.mxu0 %v1731
    %2548 = vmatprep.subr.bf16.mxu0 %v1736
    %2549 = vmatpush1.bf16.msra.mxu0 %v1735
    %2550 = vmatprep.subr.bf16.mxu0 %v1740
    %2551 = vmatpush1.bf16.msra.mxu0 %v1739
    %2552 = vmatprep.subr.bf16.mxu0 %v1744
    %2553 = vmatpush1.bf16.msra.mxu0 %v1743
    %2554 = vmatprep.subr.bf16.mxu0 %v1748
    %2555 = vmatpush1.bf16.msra.mxu0 %v1747
    %2556 = vmatprep.subr.bf16.mxu0 %v1752
    %2557 = vmatpush1.bf16.msra.mxu0 %v1751
    %2558 = vmatprep.subr.bf16.mxu0 %v1756
    %2559 = vmatpush1.bf16.msra.mxu0 %v1755
    %2560 = vmatprep.mubr.bf16.mxu0 %v1360
    %2561 = vmatmul.mubr.bf16.gmra.mrb[0].mxu0 %v1359
    %v2562 = vpop.f32.mrb[0].mxu0
    %v2563 = vadd.f32 %v2520, %v2562
    %v2564 = vpop.f32.mrb[0].mxu0
    %v2565 = vadd.f32 %v2522, %v2564
    %v2566 = vpop.f32.mrb[0].mxu0
    %v2567 = vadd.f32 %v2524, %v2566
    %v2568 = vpop.f32.mrb[0].mxu0
    %v2569 = vadd.f32 %v2526, %v2568
    %2570 = vdwg.mxu0
    %2571 = vmatprep.subr.bf16.mxu0 %v1760
    %2572 = vmatpush1.bf16.msra.mxu0 %v1759
    %2573 = vmatprep.subr.bf16.mxu0 %v1764
    %2574 = vmatpush1.bf16.msra.mxu0 %v1763
    %2575 = vmatprep.subr.bf16.mxu0 %v1768
    %2576 = vmatpush1.bf16.msra.mxu0 %v1767
    %2577 = vmatprep.subr.bf16.mxu0 %v1772
    %2578 = vmatpush1.bf16.msra.mxu0 %v1771
    %2579 = vmatprep.subr.bf16.mxu0 %v1776
    %2580 = vmatpush1.bf16.msra.mxu0 %v1775
    %2581 = vmatprep.subr.bf16.mxu0 %v1780
    %2582 = vmatpush1.bf16.msra.mxu0 %v1779
    %2583 = vmatprep.subr.bf16.mxu0 %v1784
    %2584 = vmatpush1.bf16.msra.mxu0 %v1783
    %2585 = vmatprep.subr.bf16.mxu0 %v1788
    %2586 = vmatpush1.bf16.msra.mxu0 %v1787
    %2587 = vmatprep.subr.bf16.mxu0 %v1792
    %2588 = vmatpush1.bf16.msra.mxu0 %v1791
    %2589 = vmatprep.subr.bf16.mxu0 %v1796
    %2590 = vmatpush1.bf16.msra.mxu0 %v1795
    %2591 = vmatprep.subr.bf16.mxu0 %v1800
    %2592 = vmatpush1.bf16.msra.mxu0 %v1799
    %2593 = vmatprep.subr.bf16.mxu0 %v1804
    %2594 = vmatpush1.bf16.msra.mxu0 %v1803
    %2595 = vmatprep.subr.bf16.mxu0 %v1808
    %2596 = vmatpush1.bf16.msra.mxu0 %v1807
    %2597 = vmatprep.subr.bf16.mxu0 %v1812
    %2598 = vmatpush1.bf16.msra.mxu0 %v1811
    %2599 = vmatprep.subr.bf16.mxu0 %v1816
    %2600 = vmatpush1.bf16.msra.mxu0 %v1815
    %2601 = vmatprep.subr.bf16.mxu0 %v1820
    %2602 = vmatpush1.bf16.msra.mxu0 %v1819
    %2603 = vmatprep.mubr.bf16.mxu0 %v1362
    %2604 = vmatmul.mubr.bf16.gmra.mrb[0].mxu0 %v1361
    %v2605 = vpop.f32.mrb[0].mxu0
    %v2606 = vadd.f32 %v2563, %v2605
    %v2607 = vpop.f32.mrb[0].mxu0
    %v2608 = vadd.f32 %v2565, %v2607
    %v2609 = vpop.f32.mrb[0].mxu0
    %v2610 = vadd.f32 %v2567, %v2609
    %v2611 = vpop.f32.mrb[0].mxu0
    %v2612 = vadd.f32 %v2569, %v2611
    %2613 = vdwg.mxu0
    %2614 = vmatprep.subr.bf16.mxu0 %v1824
    %2615 = vmatpush1.bf16.msra.mxu0 %v1823
    %2616 = vmatprep.subr.bf16.mxu0 %v1828
    %2617 = vmatpush1.bf16.msra.mxu0 %v1827
    %2618 = vmatprep.subr.bf16.mxu0 %v1832
    %2619 = vmatpush1.bf16.msra.mxu0 %v1831
    %2620 = vmatprep.subr.bf16.mxu0 %v1836
    %2621 = vmatpush1.bf16.msra.mxu0 %v1835
    %2622 = vmatprep.subr.bf16.mxu0 %v1840
    %2623 = vmatpush1.bf16.msra.mxu0 %v1839
    %2624 = vmatprep.subr.bf16.mxu0 %v1844
    %2625 = vmatpush1.bf16.msra.mxu0 %v1843
    %2626 = vmatprep.subr.bf16.mxu0 %v1848
    %2627 = vmatpush1.bf16.msra.mxu0 %v1847
    %2628 = vmatprep.subr.bf16.mxu0 %v1852
    %2629 = vmatpush1.bf16.msra.mxu0 %v1851
    %2630 = vmatprep.subr.bf16.mxu0 %v1856
    %2631 = vmatpush1.bf16.msra.mxu0 %v1855
    %2632 = vmatprep.subr.bf16.mxu0 %v1860
    %2633 = vmatpush1.bf16.msra.mxu0 %v1859
    %2634 = vmatprep.subr.bf16.mxu0 %v1864
    %2635 = vmatpush1.bf16.msra.mxu0 %v1863
    %2636 = vmatprep.subr.bf16.mxu0 %v1868
    %2637 = vmatpush1.bf16.msra.mxu0 %v1867
    %2638 = vmatprep.subr.bf16.mxu0 %v1872
    %2639 = vmatpush1.bf16.msra.mxu0 %v1871
    %2640 = vmatprep.subr.bf16.mxu0 %v1876
    %2641 = vmatpush1.bf16.msra.mxu0 %v1875
    %2642 = vmatprep.subr.bf16.mxu0 %v1880
    %2643 = vmatpush1.bf16.msra.mxu0 %v1879
    %2644 = vmatprep.subr.bf16.mxu0 %v1884
    %2645 = vmatpush1.bf16.msra.mxu0 %v1883
    %2646 = vmatprep.mubr.bf16.mxu0 %v1364
    %2647 = vmatmul.mubr.bf16.gmra.mrb[0].mxu0 %v1363
    %v2648 = vpop.f32.mrb[0].mxu0
    %v2649 = vadd.f32 %v2606, %v2648
    %v2650 = vpop.f32.mrb[0].mxu0
    %v2651 = vadd.f32 %v2608, %v2650
    %v2652 = vpop.f32.mrb[0].mxu0
    %v2653 = vadd.f32 %v2610, %v2652
    %v2654 = vpop.f32.mrb[0].mxu0
    %v2655 = vadd.f32 %v2612, %v2654
    %2656 = vdwg.mxu0
    %2657 = vmatprep.subr.bf16.mxu0 %v1888
    %2658 = vmatpush1.bf16.msra.mxu0 %v1887
    %2659 = vmatprep.subr.bf16.mxu0 %v1892
    %2660 = vmatpush1.bf16.msra.mxu0 %v1891
    %2661 = vmatprep.subr.bf16.mxu0 %v1896
    %2662 = vmatpush1.bf16.msra.mxu0 %v1895
    %2663 = vmatprep.subr.bf16.mxu0 %v1900
    %2664 = vmatpush1.bf16.msra.mxu0 %v1899
    %2665 = vmatprep.subr.bf16.mxu0 %v1904
    %2666 = vmatpush1.bf16.msra.mxu0 %v1903
    %2667 = vmatprep.subr.bf16.mxu0 %v1908
    %2668 = vmatpush1.bf16.msra.mxu0 %v1907
    %2669 = vmatprep.subr.bf16.mxu0 %v1912
    %2670 = vmatpush1.bf16.msra.mxu0 %v1911
    %2671 = vmatprep.subr.bf16.mxu0 %v1916
    %2672 = vmatpush1.bf16.msra.mxu0 %v1915
    %2673 = vmatprep.subr.bf16.mxu0 %v1920
    %2674 = vmatpush1.bf16.msra.mxu0 %v1919
    %2675 = vmatprep.subr.bf16.mxu0 %v1924
    %2676 = vmatpush1.bf16.msra.mxu0 %v1923
    %2677 = vmatprep.subr.bf16.mxu0 %v1928
    %2678 = vmatpush1.bf16.msra.mxu0 %v1927
    %2679 = vmatprep.subr.bf16.mxu0 %v1932
    %2680 = vmatpush1.bf16.msra.mxu0 %v1931
    %2681 = vmatprep.subr.bf16.mxu0 %v1936
    %2682 = vmatpush1.bf16.msra.mxu0 %v1935
    %2683 = vmatprep.subr.bf16.mxu0 %v1940
    %2684 = vmatpush1.bf16.msra.mxu0 %v1939
    %2685 = vmatprep.subr.bf16.mxu0 %v1944
    %2686 = vmatpush1.bf16.msra.mxu0 %v1943
    %2687 = vmatprep.subr.bf16.mxu0 %v1948
    %2688 = vmatpush1.bf16.msra.mxu0 %v1947
    %2689 = vmatprep.mubr.bf16.mxu0 %v1366
    %2690 = vmatmul.mubr.bf16.gmra.mrb[0].mxu0 %v1365
    %v2691 = vpop.f32.mrb[0].mxu0
    %v2692 = vadd.f32 %v2649, %v2691
    %v2693 = vpop.f32.mrb[0].mxu0
    %v2694 = vadd.f32 %v2651, %v2693
    %v2695 = vpop.f32.mrb[0].mxu0
    %v2696 = vadd.f32 %v2653, %v2695
    %v2697 = vpop.f32.mrb[0].mxu0
    %v2698 = vadd.f32 %v2655, %v2697
    %2699 = vdwg.mxu0
    %2700 = vmatprep.subr.bf16.mxu0 %v1952
    %2701 = vmatpush1.bf16.msra.mxu0 %v1951
    %2702 = vmatprep.subr.bf16.mxu0 %v1956
    %2703 = vmatpush1.bf16.msra.mxu0 %v1955
    %2704 = vmatprep.subr.bf16.mxu0 %v1960
    %2705 = vmatpush1.bf16.msra.mxu0 %v1959
    %2706 = vmatprep.subr.bf16.mxu0 %v1964
    %2707 = vmatpush1.bf16.msra.mxu0 %v1963
    %2708 = vmatprep.subr.bf16.mxu0 %v1968
    %2709 = vmatpush1.bf16.msra.mxu0 %v1967
    %2710 = vmatprep.subr.bf16.mxu0 %v1972
    %2711 = vmatpush1.bf16.msra.mxu0 %v1971
    %2712 = vmatprep.subr.bf16.mxu0 %v1976
    %2713 = vmatpush1.bf16.msra.mxu0 %v1975
    %2714 = vmatprep.subr.bf16.mxu0 %v1980
    %2715 = vmatpush1.bf16.msra.mxu0 %v1979
    %2716 = vmatprep.subr.bf16.mxu0 %v1984
    %2717 = vmatpush1.bf16.msra.mxu0 %v1983
    %2718 = vmatprep.subr.bf16.mxu0 %v1988
    %2719 = vmatpush1.bf16.msra.mxu0 %v1987
    %2720 = vmatprep.subr.bf16.mxu0 %v1992
    %2721 = vmatpush1.bf16.msra.mxu0 %v1991
    %2722 = vmatprep.subr.bf16.mxu0 %v1996
    %2723 = vmatpush1.bf16.msra.mxu0 %v1995
    %2724 = vmatprep.subr.bf16.mxu0 %v2000
    %2725 = vmatpush1.bf16.msra.mxu0 %v1999
    %2726 = vmatprep.subr.bf16.mxu0 %v2004
    %2727 = vmatpush1.bf16.msra.mxu0 %v2003
    %2728 = vmatprep.subr.bf16.mxu0 %v2008
    %2729 = vmatpush1.bf16.msra.mxu0 %v2007
    %2730 = vmatprep.subr.bf16.mxu0 %v2012
    %2731 = vmatpush1.bf16.msra.mxu0 %v2011
    %2732 = vmatprep.mubr.bf16.mxu0 %v1368
    %2733 = vmatmul.mubr.bf16.gmra.mrb[0].mxu0 %v1367
    %v2734 = vpop.f32.mrb[0].mxu0
    %v2735 = vadd.f32 %v2692, %v2734
    %v2736 = vpop.f32.mrb[0].mxu0
    %v2737 = vadd.f32 %v2694, %v2736
    %v2738 = vpop.f32.mrb[0].mxu0
    %v2739 = vadd.f32 %v2696, %v2738
    %v2740 = vpop.f32.mrb[0].mxu0
    %v2741 = vadd.f32 %v2698, %v2740
    %2742 = vdwg.mxu0
    %2743 = vmatprep.subr.bf16.mxu0 %v2016
    %2744 = vmatpush1.bf16.msra.mxu0 %v2015
    %2745 = vmatprep.subr.bf16.mxu0 %v2020
    %2746 = vmatpush1.bf16.msra.mxu0 %v2019
    %2747 = vmatprep.subr.bf16.mxu0 %v2024
    %2748 = vmatpush1.bf16.msra.mxu0 %v2023
    %2749 = vmatprep.subr.bf16.mxu0 %v2028
    %2750 = vmatpush1.bf16.msra.mxu0 %v2027
    %2751 = vmatprep.subr.bf16.mxu0 %v2032
    %2752 = vmatpush1.bf16.msra.mxu0 %v2031
    %2753 = vmatprep.subr.bf16.mxu0 %v2036
    %2754 = vmatpush1.bf16.msra.mxu0 %v2035
    %2755 = vmatprep.subr.bf16.mxu0 %v2040
    %2756 = vmatpush1.bf16.msra.mxu0 %v2039
    %2757 = vmatprep.subr.bf16.mxu0 %v2044
    %2758 = vmatpush1.bf16.msra.mxu0 %v2043
    %2759 = vmatprep.subr.bf16.mxu0 %v2048
    %2760 = vmatpush1.bf16.msra.mxu0 %v2047
    %2761 = vmatprep.subr.bf16.mxu0 %v2052
    %2762 = vmatpush1.bf16.msra.mxu0 %v2051
    %2763 = vmatprep.subr.bf16.mxu0 %v2056
    %2764 = vmatpush1.bf16.msra.mxu0 %v2055
    %2765 = vmatprep.subr.bf16.mxu0 %v2060
    %2766 = vmatpush1.bf16.msra.mxu0 %v2059
    %2767 = vmatprep.subr.bf16.mxu0 %v2064
    %2768 = vmatpush1.bf16.msra.mxu0 %v2063
    %2769 = vmatprep.subr.bf16.mxu0 %v2068
    %2770 = vmatpush1.bf16.msra.mxu0 %v2067
    %2771 = vmatprep.subr.bf16.mxu0 %v2072
    %2772 = vmatpush1.bf16.msra.mxu0 %v2071
    %2773 = vmatprep.subr.bf16.mxu0 %v2076
    %2774 = vmatpush1.bf16.msra.mxu0 %v2075
    %2775 = vmatprep.mubr.bf16.mxu0 %v1370
    %2776 = vmatmul.mubr.bf16.gmra.mrb[0].mxu0 %v1369
    %v2777 = vpop.f32.mrb[0].mxu0
    %v2778 = vadd.f32 %v2735, %v2777
    %v2779 = vpop.f32.mrb[0].mxu0
    %v2780 = vadd.f32 %v2737, %v2779
    %v2781 = vpop.f32.mrb[0].mxu0
    %v2782 = vadd.f32 %v2739, %v2781
    %v2783 = vpop.f32.mrb[0].mxu0
    %v2784 = vadd.f32 %v2741, %v2783
    %2785 = vdwg.mxu0
    %2786 = vmatprep.subr.bf16.mxu0 %v2080
    %2787 = vmatpush1.bf16.msra.mxu0 %v2079
    %2788 = vmatprep.subr.bf16.mxu0 %v2084
    %2789 = vmatpush1.bf16.msra.mxu0 %v2083
    %2790 = vmatprep.subr.bf16.mxu0 %v2088
    %2791 = vmatpush1.bf16.msra.mxu0 %v2087
    %2792 = vmatprep.subr.bf16.mxu0 %v2092
    %2793 = vmatpush1.bf16.msra.mxu0 %v2091
    %2794 = vmatprep.subr.bf16.mxu0 %v2096
    %2795 = vmatpush1.bf16.msra.mxu0 %v2095
    %2796 = vmatprep.subr.bf16.mxu0 %v2100
    %2797 = vmatpush1.bf16.msra.mxu0 %v2099
    %2798 = vmatprep.subr.bf16.mxu0 %v2104
    %2799 = vmatpush1.bf16.msra.mxu0 %v2103
    %2800 = vmatprep.subr.bf16.mxu0 %v2108
    %2801 = vmatpush1.bf16.msra.mxu0 %v2107
    %2802 = vmatprep.subr.bf16.mxu0 %v2112
    %2803 = vmatpush1.bf16.msra.mxu0 %v2111
    %2804 = vmatprep.subr.bf16.mxu0 %v2116
    %2805 = vmatpush1.bf16.msra.mxu0 %v2115
    %2806 = vmatprep.subr.bf16.mxu0 %v2120
    %2807 = vmatpush1.bf16.msra.mxu0 %v2119
    %2808 = vmatprep.subr.bf16.mxu0 %v2124
    %2809 = vmatpush1.bf16.msra.mxu0 %v2123
    %2810 = vmatprep.subr.bf16.mxu0 %v2128
    %2811 = vmatpush1.bf16.msra.mxu0 %v2127
    %2812 = vmatprep.subr.bf16.mxu0 %v2132
    %2813 = vmatpush1.bf16.msra.mxu0 %v2131
    %2814 = vmatprep.subr.bf16.mxu0 %v2136
    %2815 = vmatpush1.bf16.msra.mxu0 %v2135
    %2816 = vmatprep.subr.bf16.mxu0 %v2140
    %2817 = vmatpush1.bf16.msra.mxu0 %v2139
    %2818 = vmatprep.mubr.bf16.mxu0 %v1372
    %2819 = vmatmul.mubr.bf16.gmra.mrb[0].mxu0 %v1371
    %v2820 = vpop.f32.mrb[0].mxu0
    %v2821 = vadd.f32 %v2778, %v2820
    %v2822 = vpop.f32.mrb[0].mxu0
    %v2823 = vadd.f32 %v2780, %v2822
    %v2824 = vpop.f32.mrb[0].mxu0
    %v2825 = vadd.f32 %v2782, %v2824
    %v2826 = vpop.f32.mrb[0].mxu0
    %v2827 = vadd.f32 %v2784, %v2826
    %2828 = vdwg.mxu0
    %v2829 = vld [vmem:[#allocation13 + $0x17] sm:$0xf]
    %v2831 = vlaneseq
    %v2832 = vshrl.u32 %v2831, 7
    %v2833 = vsub.s32 0, %v2832
    %v2834 = vrot.slane %v2829, %v2833
    %v2835 = vlaneseq
    %v2836 = vshrl.u32 %v2835, 7
    %v2837 = vsub.s32 1, %v2836
    %v2838 = vrot.slane %v2829, %v2837
    %v2839 = vlaneseq
    %v2840 = vshrl.u32 %v2839, 7
    %v2841 = vsub.s32 2, %v2840
    %v2842 = vrot.slane %v2829, %v2841
    %v2843 = vlaneseq
    %v2844 = vshrl.u32 %v2843, 7
    %v2845 = vsub.s32 3, %v2844
    %v2846 = vrot.slane %v2829, %v2845
    %v2851 = vmul.f32 %v2477, %v2834
    %v2852 = vmul.f32 %v2479, %v2838
    %v2853 = vmul.f32 %v2821, %v2842
    %v2854 = vmul.f32 %v2823, %v2846
    %v2855 = vmul.f32 %v2481, %v2834
    %v2856 = vmul.f32 %v2483, %v2838
    %v2857 = vmul.f32 %v2825, %v2842
    %v2858 = vmul.f32 %v2827, %v2846
    %v2859 = vld [vmem:[#allocation13 + $0x10] sm:$0xf]
    %v2861 = vlaneseq
    %v2862 = vshrl.u32 %v2861, 7
    %v2863 = vsub.s32 0, %v2862
    %v2864 = vrot.slane %v2859, %v2863
    %v2865 = vlaneseq
    %v2866 = vshrl.u32 %v2865, 7
    %v2867 = vsub.s32 1, %v2866
    %v2868 = vrot.slane %v2859, %v2867
    %v2869 = vlaneseq
    %v2870 = vshrl.u32 %v2869, 7
    %v2871 = vsub.s32 2, %v2870
    %v2872 = vrot.slane %v2859, %v2871
    %v2873 = vlaneseq
    %v2874 = vshrl.u32 %v2873, 7
    %v2875 = vsub.s32 3, %v2874
    %v2876 = vrot.slane %v2859, %v2875
    %v2881 = vadd.f32 %v2851, %v2864
    %v2882 = vadd.f32 %v2852, %v2868
    %v2883 = vadd.f32 %v2853, %v2872
    %v2884 = vadd.f32 %v2854, %v2876
    %v2885 = vadd.f32 %v2855, %v2864
    %v2886 = vadd.f32 %v2856, %v2868
    %v2887 = vadd.f32 %v2857, %v2872
    %v2888 = vadd.f32 %v2858, %v2876
    %v2889 = vmax.f32 %v2881, 0.0
    %v2890 = vmax.f32 %v2882, 0.0
    %v2891 = vmax.f32 %v2883, 0.0
    %v2892 = vmax.f32 %v2884, 0.0
    %v2893 = vmax.f32 %v2885, 0.0
    %v2894 = vmax.f32 %v2886, 0.0
    %v2895 = vmax.f32 %v2887, 0.0
    %v2896 = vmax.f32 %v2888, 0.0
    %v2897 = vpack.c.bf16 %v2893, %v2889
    %v2898 = vpack.c.bf16 %v2894, %v2890
    %v2899 = vpack.c.bf16 %v2895, %v2891
    %v2900 = vpack.c.bf16 %v2896, %v2892
    %v2901 = vld [vmem:[#allocation8] sm:$0xf]
    %v2902 = vld [vmem:[#allocation8 + $0x4] sm:$0xf]
    %v2903 = vld [vmem:[#allocation8 + $0x8] sm:$0xf]
    %v2904 = vld [vmem:[#allocation8 + $0xc] sm:$0xf]
    %v2905 = vld [vmem:[#allocation8 + $0x10] sm:$0xf]
    %v2906 = vld [vmem:[#allocation8 + $0x14] sm:$0xf]
    %v2907 = vld [vmem:[#allocation8 + $0x18] sm:$0xf]
    %v2908 = vld [vmem:[#allocation8 + $0x1c] sm:$0xf]
    %v2909 = vld [vmem:[#allocation8 + $0x20] sm:$0xf]
    %v2910 = vld [vmem:[#allocation8 + $0x24] sm:$0xf]
    %v2911 = vld [vmem:[#allocation8 + $0x28] sm:$0xf]
    %v2912 = vld [vmem:[#allocation8 + $0x2c] sm:$0xf]
    %v2913 = vld [vmem:[#allocation8 + $0x30] sm:$0xf]
    %v2914 = vld [vmem:[#allocation8 + $0x34] sm:$0xf]
    %v2915 = vld [vmem:[#allocation8 + $0x38] sm:$0xf]
    %v2916 = vld [vmem:[#allocation8 + $0x3c] sm:$0xf]
    %v2917 = vld [vmem:[#allocation8 + $0x40] sm:$0xf]
    %v2918 = vld [vmem:[#allocation8 + $0x44] sm:$0xf]
    %v2919 = vld [vmem:[#allocation8 + $0x48] sm:$0xf]
    %v2920 = vld [vmem:[#allocation8 + $0x4c] sm:$0xf]
    %v2921 = vld [vmem:[#allocation8 + $0x50] sm:$0xf]
    %v2922 = vld [vmem:[#allocation8 + $0x54] sm:$0xf]
    %v2923 = vld [vmem:[#allocation8 + $0x58] sm:$0xf]
    %v2924 = vld [vmem:[#allocation8 + $0x5c] sm:$0xf]
    %v2925 = vld [vmem:[#allocation8 + $0x60] sm:$0xf]
    %v2926 = vld [vmem:[#allocation8 + $0x64] sm:$0xf]
    %v2927 = vld [vmem:[#allocation8 + $0x68] sm:$0xf]
    %v2928 = vld [vmem:[#allocation8 + $0x6c] sm:$0xf]
    %v2929 = vld [vmem:[#allocation8 + $0x70] sm:$0xf]
    %v2930 = vld [vmem:[#allocation8 + $0x74] sm:$0xf]
    %v2931 = vld [vmem:[#allocation8 + $0x78] sm:$0xf]
    %v2932 = vld [vmem:[#allocation8 + $0x7c] sm:$0xf]
    %v2933 = vld [vmem:[#allocation8 + $0x80] sm:$0xf]
    %v2934 = vld [vmem:[#allocation8 + $0x84] sm:$0xf]
    %v2935 = vld [vmem:[#allocation8 + $0x88] sm:$0xf]
    %v2936 = vld [vmem:[#allocation8 + $0x8c] sm:$0xf]
    %v2937 = vld [vmem:[#allocation8 + $0x90] sm:$0xf]
    %v2938 = vld [vmem:[#allocation8 + $0x94] sm:$0xf]
    %v2939 = vld [vmem:[#allocation8 + $0x98] sm:$0xf]
    %v2940 = vld [vmem:[#allocation8 + $0x9c] sm:$0xf]
    %v2941 = vld [vmem:[#allocation8 + $0xa0] sm:$0xf]
    %v2942 = vld [vmem:[#allocation8 + $0xa4] sm:$0xf]
    %v2943 = vld [vmem:[#allocation8 + $0xa8] sm:$0xf]
    %v2944 = vld [vmem:[#allocation8 + $0xac] sm:$0xf]
    %v2945 = vld [vmem:[#allocation8 + $0xb0] sm:$0xf]
    %v2946 = vld [vmem:[#allocation8 + $0xb4] sm:$0xf]
    %v2947 = vld [vmem:[#allocation8 + $0xb8] sm:$0xf]
    %v2948 = vld [vmem:[#allocation8 + $0xbc] sm:$0xf]
    %v2949 = vld [vmem:[#allocation8 + $0xc0] sm:$0xf]
    %v2950 = vld [vmem:[#allocation8 + $0xc4] sm:$0xf]
    %v2951 = vld [vmem:[#allocation8 + $0xc8] sm:$0xf]
    %v2952 = vld [vmem:[#allocation8 + $0xcc] sm:$0xf]
    %v2953 = vld [vmem:[#allocation8 + $0xd0] sm:$0xf]
    %v2954 = vld [vmem:[#allocation8 + $0xd4] sm:$0xf]
    %v2955 = vld [vmem:[#allocation8 + $0xd8] sm:$0xf]
    %v2956 = vld [vmem:[#allocation8 + $0xdc] sm:$0xf]
    %v2957 = vld [vmem:[#allocation8 + $0xe0] sm:$0xf]
    %v2958 = vld [vmem:[#allocation8 + $0xe4] sm:$0xf]
    %v2959 = vld [vmem:[#allocation8 + $0xe8] sm:$0xf]
    %v2960 = vld [vmem:[#allocation8 + $0xec] sm:$0xf]
    %v2961 = vld [vmem:[#allocation8 + $0xf0] sm:$0xf]
    %v2962 = vld [vmem:[#allocation8 + $0xf4] sm:$0xf]
    %v2963 = vld [vmem:[#allocation8 + $0xf8] sm:$0xf]
    %v2964 = vld [vmem:[#allocation8 + $0xfc] sm:$0xf]
    %v2965 = vld [vmem:[#allocation13 + $0x14] sm:$0x1]
    %v2967 = vlaneseq
    %v2968 = vshrl.u32 %v2967, 7
    %v2969 = vsub.s32 0, %v2968
    %v2970 = vrot.slane %v2965, %v2969
    %v3036 = vunpack.c.l.b16 %v2901
    %v3037 = vunpack.c.l.b16 %v2902
    %v3038 = vunpack.c.l.b16 %v2903
    %v3039 = vunpack.c.l.b16 %v2904
    %v3040 = vunpack.c.l.b16 %v2905
    %v3041 = vunpack.c.l.b16 %v2906
    %v3042 = vunpack.c.l.b16 %v2907
    %v3043 = vunpack.c.l.b16 %v2908
    %v3044 = vunpack.c.l.b16 %v2909
    %v3045 = vunpack.c.l.b16 %v2910
    %v3046 = vunpack.c.l.b16 %v2911
    %v3047 = vunpack.c.l.b16 %v2912
    %v3048 = vunpack.c.l.b16 %v2913
    %v3049 = vunpack.c.l.b16 %v2914
    %v3050 = vunpack.c.l.b16 %v2915
    %v3051 = vunpack.c.l.b16 %v2916
    %v3052 = vunpack.c.l.b16 %v2917
    %v3053 = vunpack.c.l.b16 %v2918
    %v3054 = vunpack.c.l.b16 %v2919
    %v3055 = vunpack.c.l.b16 %v2920
    %v3056 = vunpack.c.l.b16 %v2921
    %v3057 = vunpack.c.l.b16 %v2922
    %v3058 = vunpack.c.l.b16 %v2923
    %v3059 = vunpack.c.l.b16 %v2924
    %v3060 = vunpack.c.l.b16 %v2925
    %v3061 = vunpack.c.l.b16 %v2926
    %v3062 = vunpack.c.l.b16 %v2927
    %v3063 = vunpack.c.l.b16 %v2928
    %v3064 = vunpack.c.l.b16 %v2929
    %v3065 = vunpack.c.l.b16 %v2930
    %v3066 = vunpack.c.l.b16 %v2931
    %v3067 = vunpack.c.l.b16 %v2932
    %v3068 = vunpack.c.l.b16 %v2933
    %v3069 = vunpack.c.l.b16 %v2934
    %v3070 = vunpack.c.l.b16 %v2935
    %v3071 = vunpack.c.l.b16 %v2936
    %v3072 = vunpack.c.l.b16 %v2937
    %v3073 = vunpack.c.l.b16 %v2938
    %v3074 = vunpack.c.l.b16 %v2939
    %v3075 = vunpack.c.l.b16 %v2940
    %v3076 = vunpack.c.l.b16 %v2941
    %v3077 = vunpack.c.l.b16 %v2942
    %v3078 = vunpack.c.l.b16 %v2943
    %v3079 = vunpack.c.l.b16 %v2944
    %v3080 = vunpack.c.l.b16 %v2945
    %v3081 = vunpack.c.l.b16 %v2946
    %v3082 = vunpack.c.l.b16 %v2947
    %v3083 = vunpack.c.l.b16 %v2948
    %v3084 = vunpack.c.l.b16 %v2949
    %v3085 = vunpack.c.l.b16 %v2950
    %v3086 = vunpack.c.l.b16 %v2951
    %v3087 = vunpack.c.l.b16 %v2952
    %v3088 = vunpack.c.l.b16 %v2953
    %v3089 = vunpack.c.l.b16 %v2954
    %v3090 = vunpack.c.l.b16 %v2955
    %v3091 = vunpack.c.l.b16 %v2956
    %v3092 = vunpack.c.l.b16 %v2957
    %v3093 = vunpack.c.l.b16 %v2958
    %v3094 = vunpack.c.l.b16 %v2959
    %v3095 = vunpack.c.l.b16 %v2960
    %v3096 = vunpack.c.l.b16 %v2961
    %v3097 = vunpack.c.l.b16 %v2962
    %v3098 = vunpack.c.l.b16 %v2963
    %v3099 = vunpack.c.l.b16 %v2964
    %v3100 = vpack.c.b16 %v3037, %v3036
    %v3101 = vpack.c.b16 %v3039, %v3038
    %v3102 = vpack.c.b16 %v3041, %v3040
    %v3103 = vpack.c.b16 %v3043, %v3042
    %v3104 = vpack.c.b16 %v3045, %v3044
    %v3105 = vpack.c.b16 %v3047, %v3046
    %v3106 = vpack.c.b16 %v3049, %v3048
    %v3107 = vpack.c.b16 %v3051, %v3050
    %v3108 = vpack.c.b16 %v3053, %v3052
    %v3109 = vpack.c.b16 %v3055, %v3054
    %v3110 = vpack.c.b16 %v3057, %v3056
    %v3111 = vpack.c.b16 %v3059, %v3058
    %v3112 = vpack.c.b16 %v3061, %v3060
    %v3113 = vpack.c.b16 %v3063, %v3062
    %v3114 = vpack.c.b16 %v3065, %v3064
    %v3115 = vpack.c.b16 %v3067, %v3066
    %v3116 = vpack.c.b16 %v3069, %v3068
    %v3117 = vpack.c.b16 %v3071, %v3070
    %v3118 = vpack.c.b16 %v3073, %v3072
    %v3119 = vpack.c.b16 %v3075, %v3074
    %v3120 = vpack.c.b16 %v3077, %v3076
    %v3121 = vpack.c.b16 %v3079, %v3078
    %v3122 = vpack.c.b16 %v3081, %v3080
    %v3123 = vpack.c.b16 %v3083, %v3082
    %v3124 = vpack.c.b16 %v3085, %v3084
    %v3125 = vpack.c.b16 %v3087, %v3086
    %v3126 = vpack.c.b16 %v3089, %v3088
    %v3127 = vpack.c.b16 %v3091, %v3090
    %v3128 = vpack.c.b16 %v3093, %v3092
    %v3129 = vpack.c.b16 %v3095, %v3094
    %v3130 = vpack.c.b16 %v3097, %v3096
    %v3131 = vpack.c.b16 %v3099, %v3098
    %3164 = vmatprep.subr.bf16.mxu0 0
    %3165 = vmatpush1.bf16.msra.mxu0 %v3100
    %3166 = vmatprep.subr.bf16.mxu0 0
    %3167 = vmatpush1.bf16.msra.mxu0 %v3101
    %3168 = vmatprep.subr.bf16.mxu0 0
    %3169 = vmatpush1.bf16.msra.mxu0 %v3102
    %3170 = vmatprep.subr.bf16.mxu0 0
    %3171 = vmatpush1.bf16.msra.mxu0 %v3103
    %3172 = vmatprep.subr.bf16.mxu0 0
    %3173 = vmatpush1.bf16.msra.mxu0 %v3104
    %3174 = vmatprep.subr.bf16.mxu0 0
    %3175 = vmatpush1.bf16.msra.mxu0 %v3105
    %3176 = vmatprep.subr.bf16.mxu0 0
    %3177 = vmatpush1.bf16.msra.mxu0 %v3106
    %3178 = vmatprep.subr.bf16.mxu0 0
    %3179 = vmatpush1.bf16.msra.mxu0 %v3107
    %3180 = vmatprep.subr.bf16.mxu0 0
    %3181 = vmatpush1.bf16.msra.mxu0 %v3108
    %3182 = vmatprep.subr.bf16.mxu0 0
    %3183 = vmatpush1.bf16.msra.mxu0 %v3109
    %3184 = vmatprep.subr.bf16.mxu0 0
    %3185 = vmatpush1.bf16.msra.mxu0 %v3110
    %3186 = vmatprep.subr.bf16.mxu0 0
    %3187 = vmatpush1.bf16.msra.mxu0 %v3111
    %3188 = vmatprep.subr.bf16.mxu0 0
    %3189 = vmatpush1.bf16.msra.mxu0 %v3112
    %3190 = vmatprep.subr.bf16.mxu0 0
    %3191 = vmatpush1.bf16.msra.mxu0 %v3113
    %3192 = vmatprep.subr.bf16.mxu0 0
    %3193 = vmatpush1.bf16.msra.mxu0 %v3114
    %3194 = vmatprep.subr.bf16.mxu0 0
    %3195 = vmatpush1.bf16.msra.mxu0 %v3115
    %3196 = vmatprep.mubr.bf16.mxu0 %v2898
    %3197 = vmatmul.mubr.bf16.gmra.mrb[0].mxu0 %v2897
    %v3198 = vpop.f32.mrb[0].mxu0
    %v3199 = vadd.f32 %v2970, %v3198
    %v3200 = vpop.f32.mrb[0].mxu0
    %v3201 = vpop.f32.mrb[0].mxu0
    %v3202 = vadd.f32 %v2970, %v3201
    %v3203 = vpop.f32.mrb[0].mxu0
    %3204 = vdwg.mxu0
    %3205 = vmatprep.subr.bf16.mxu0 0
    %3206 = vmatpush1.bf16.msra.mxu0 %v3116
    %3207 = vmatprep.subr.bf16.mxu0 0
    %3208 = vmatpush1.bf16.msra.mxu0 %v3117
    %3209 = vmatprep.subr.bf16.mxu0 0
    %3210 = vmatpush1.bf16.msra.mxu0 %v3118
    %3211 = vmatprep.subr.bf16.mxu0 0
    %3212 = vmatpush1.bf16.msra.mxu0 %v3119
    %3213 = vmatprep.subr.bf16.mxu0 0
    %3214 = vmatpush1.bf16.msra.mxu0 %v3120
    %3215 = vmatprep.subr.bf16.mxu0 0
    %3216 = vmatpush1.bf16.msra.mxu0 %v3121
    %3217 = vmatprep.subr.bf16.mxu0 0
    %3218 = vmatpush1.bf16.msra.mxu0 %v3122
    %3219 = vmatprep.subr.bf16.mxu0 0
    %3220 = vmatpush1.bf16.msra.mxu0 %v3123
    %3221 = vmatprep.subr.bf16.mxu0 0
    %3222 = vmatpush1.bf16.msra.mxu0 %v3124
    %3223 = vmatprep.subr.bf16.mxu0 0
    %3224 = vmatpush1.bf16.msra.mxu0 %v3125
    %3225 = vmatprep.subr.bf16.mxu0 0
    %3226 = vmatpush1.bf16.msra.mxu0 %v3126
    %3227 = vmatprep.subr.bf16.mxu0 0
    %3228 = vmatpush1.bf16.msra.mxu0 %v3127
    %3229 = vmatprep.subr.bf16.mxu0 0
    %3230 = vmatpush1.bf16.msra.mxu0 %v3128
    %3231 = vmatprep.subr.bf16.mxu0 0
    %3232 = vmatpush1.bf16.msra.mxu0 %v3129
    %3233 = vmatprep.subr.bf16.mxu0 0
    %3234 = vmatpush1.bf16.msra.mxu0 %v3130
    %3235 = vmatprep.subr.bf16.mxu0 0
    %3236 = vmatpush1.bf16.msra.mxu0 %v3131
    %3237 = vmatprep.mubr.bf16.mxu0 %v2900
    %3238 = vmatmul.mubr.bf16.gmra.mrb[0].mxu0 %v2899
    %v3239 = vpop.f32.mrb[0].mxu0
    %v3240 = vadd.f32 %v3199, %v3239
    %v3241 = vpop.f32.mrb[0].mxu0
    %v3242 = vpop.f32.mrb[0].mxu0
    %v3243 = vadd.f32 %v3202, %v3242
    %v3244 = vpop.f32.mrb[0].mxu0
    %3245 = vdwg.mxu0
    %v3246 = vmax.f32 %v3240, 0.0
    %v3247 = vmax.f32 %v3243, 0.0
    %v3248 = vpack.c.bf16 %v3247, %v3246
    %v3249 = vld [vmem:[#allocation10] sm:$0xf]
    %v3250 = vld [vmem:[#allocation10 + $0x4] sm:$0xf]
    %v3251 = vld [vmem:[#allocation10 + $0x8] sm:$0xf]
    %v3252 = vld [vmem:[#allocation10 + $0xc] sm:$0xf]
    %v3253 = vld [vmem:[#allocation10 + $0x10] sm:$0xf]
    %v3254 = vld [vmem:[#allocation10 + $0x14] sm:$0xf]
    %v3255 = vld [vmem:[#allocation10 + $0x18] sm:$0xf]
    %v3256 = vld [vmem:[#allocation10 + $0x1c] sm:$0xf]
    %v3257 = vld [vmem:[#allocation10 + $0x20] sm:$0xf]
    %v3258 = vld [vmem:[#allocation10 + $0x24] sm:$0xf]
    %v3259 = vld [vmem:[#allocation10 + $0x28] sm:$0xf]
    %v3260 = vld [vmem:[#allocation10 + $0x2c] sm:$0xf]
    %v3261 = vld [vmem:[#allocation10 + $0x30] sm:$0xf]
    %v3262 = vld [vmem:[#allocation10 + $0x34] sm:$0xf]
    %v3263 = vld [vmem:[#allocation10 + $0x38] sm:$0xf]
    %v3264 = vld [vmem:[#allocation10 + $0x3c] sm:$0xf]
    %v3265 = vld [vmem:[#allocation13 + $0x15] sm:$0x1]
    %v3267 = vlaneseq
    %v3268 = vshrl.u32 %v3267, 7
    %v3269 = vsub.s32 0, %v3268
    %v3270 = vrot.slane %v3265, %v3269
    %v3288 = vunpack.c.l.b16 %v3249
    %v3289 = vunpack.c.l.b16 %v3250
    %v3290 = vunpack.c.l.b16 %v3251
    %v3291 = vunpack.c.l.b16 %v3252
    %v3292 = vunpack.c.l.b16 %v3253
    %v3293 = vunpack.c.l.b16 %v3254
    %v3294 = vunpack.c.l.b16 %v3255
    %v3295 = vunpack.c.l.b16 %v3256
    %v3296 = vunpack.c.l.b16 %v3257
    %v3297 = vunpack.c.l.b16 %v3258
    %v3298 = vunpack.c.l.b16 %v3259
    %v3299 = vunpack.c.l.b16 %v3260
    %v3300 = vunpack.c.l.b16 %v3261
    %v3301 = vunpack.c.l.b16 %v3262
    %v3302 = vunpack.c.l.b16 %v3263
    %v3303 = vunpack.c.l.b16 %v3264
    %v3304 = vpack.c.b16 %v3289, %v3288
    %v3305 = vpack.c.b16 %v3291, %v3290
    %v3306 = vpack.c.b16 %v3293, %v3292
    %v3307 = vpack.c.b16 %v3295, %v3294
    %v3308 = vpack.c.b16 %v3297, %v3296
    %v3309 = vpack.c.b16 %v3299, %v3298
    %v3310 = vpack.c.b16 %v3301, %v3300
    %v3311 = vpack.c.b16 %v3303, %v3302
    %3320 = vmatprep.subr.bf16.mxu0 0
    %3321 = vmatpush1.bf16.msra.mxu0 %v3304
    %3322 = vmatprep.subr.bf16.mxu0 0
    %3323 = vmatpush1.bf16.msra.mxu0 %v3305
    %3324 = vmatprep.subr.bf16.mxu0 0
    %3325 = vmatpush1.bf16.msra.mxu0 %v3306
    %3326 = vmatprep.subr.bf16.mxu0 0
    %3327 = vmatpush1.bf16.msra.mxu0 %v3307
    %3328 = vmatprep.subr.bf16.mxu0 0
    %3329 = vmatpush1.bf16.msra.mxu0 %v3308
    %3330 = vmatprep.subr.bf16.mxu0 0
    %3331 = vmatpush1.bf16.msra.mxu0 %v3309
    %3332 = vmatprep.subr.bf16.mxu0 0
    %3333 = vmatpush1.bf16.msra.mxu0 %v3310
    %3334 = vmatprep.subr.bf16.mxu0 0
    %3335 = vmatpush1.bf16.msra.mxu0 %v3311
    %3336 = vmatprep.subr.bf16.mxu0 0
    %3337 = vmatpush1.bf16.msra.mxu0 0
    %3338 = vmatprep.subr.bf16.mxu0 0
    %3339 = vmatpush1.bf16.msra.mxu0 0
    %3340 = vmatprep.subr.bf16.mxu0 0
    %3341 = vmatpush1.bf16.msra.mxu0 0
    %3342 = vmatprep.subr.bf16.mxu0 0
    %3343 = vmatpush1.bf16.msra.mxu0 0
    %3344 = vmatprep.subr.bf16.mxu0 0
    %3345 = vmatpush1.bf16.msra.mxu0 0
    %3346 = vmatprep.subr.bf16.mxu0 0
    %3347 = vmatpush1.bf16.msra.mxu0 0
    %3348 = vmatprep.subr.bf16.mxu0 0
    %3349 = vmatpush1.bf16.msra.mxu0 0
    %3350 = vmatprep.subr.bf16.mxu0 0
    %3351 = vmatpush1.bf16.msra.mxu0 0
    %3352 = vmatprep.mubr.bf16.mxu0 0
    %3353 = vmatmul.mubr.bf16.gmra.mrb[0].mxu0 %v3248
    %v3354 = vpop.f32.mrb[0].mxu0
    %v3355 = vadd.f32 %v3270, %v3354
    %v3356 = vpop.f32.mrb[0].mxu0
    %v3357 = vpop.f32.mrb[0].mxu0
    %v3358 = vadd.f32 %v3270, %v3357
    %v3359 = vpop.f32.mrb[0].mxu0
    %3360 = vdwg.mxu0
    %v3361 = vmax.f32 %v3355, 0.0
    %v3362 = vmax.f32 %v3358, 0.0
    %v3363 = vpack.c.bf16 %v3362, %v3361
    %v3364 = vld [vmem:[#allocation11] sm:$0xf]
    %v3365 = vld [vmem:[#allocation11 + $0x4] sm:$0xf]
    %v3366 = vld [vmem:[#allocation11 + $0x8] sm:$0xf]
    %v3367 = vld [vmem:[#allocation11 + $0xc] sm:$0xf]
    %v3368 = vld [vmem:[#allocation11 + $0x10] sm:$0xf]
    %v3369 = vld [vmem:[#allocation11 + $0x14] sm:$0xf]
    %v3370 = vld [vmem:[#allocation11 + $0x18] sm:$0xf]
    %v3371 = vld [vmem:[#allocation11 + $0x1c] sm:$0xf]
    %v3372 = vld [vmem:[#allocation11 + $0x20] sm:$0xf]
    %v3373 = vld [vmem:[#allocation11 + $0x24] sm:$0xf]
    %v3374 = vld [vmem:[#allocation11 + $0x28] sm:$0xf]
    %v3375 = vld [vmem:[#allocation11 + $0x2c] sm:$0xf]
    %v3376 = vld [vmem:[#allocation11 + $0x30] sm:$0xf]
    %v3377 = vld [vmem:[#allocation11 + $0x34] sm:$0xf]
    %v3378 = vld [vmem:[#allocation11 + $0x38] sm:$0xf]
    %v3379 = vld [vmem:[#allocation11 + $0x3c] sm:$0xf]
    %v3380 = vld [vmem:[#allocation13 + $0x16] sm:$0x1]
    %v3382 = vlaneseq
    %v3383 = vshrl.u32 %v3382, 7
    %v3384 = vsub.s32 0, %v3383
    %v3385 = vrot.slane %v3380, %v3384
    %v3403 = vunpack.c.l.b16 %v3364
    %v3404 = vunpack.c.l.b16 %v3365
    %v3405 = vunpack.c.l.b16 %v3366
    %v3406 = vunpack.c.l.b16 %v3367
    %v3407 = vunpack.c.l.b16 %v3368
    %v3408 = vunpack.c.l.b16 %v3369
    %v3409 = vunpack.c.l.b16 %v3370
    %v3410 = vunpack.c.l.b16 %v3371
    %v3411 = vunpack.c.l.b16 %v3372
    %v3412 = vunpack.c.l.b16 %v3373
    %v3413 = vunpack.c.l.b16 %v3374
    %v3414 = vunpack.c.l.b16 %v3375
    %v3415 = vunpack.c.l.b16 %v3376
    %v3416 = vunpack.c.l.b16 %v3377
    %v3417 = vunpack.c.l.b16 %v3378
    %v3418 = vunpack.c.l.b16 %v3379
    %v3419 = vpack.c.b16 %v3404, %v3403
    %v3420 = vpack.c.b16 %v3406, %v3405
    %v3421 = vpack.c.b16 %v3408, %v3407
    %v3422 = vpack.c.b16 %v3410, %v3409
    %v3423 = vpack.c.b16 %v3412, %v3411
    %v3424 = vpack.c.b16 %v3414, %v3413
    %v3425 = vpack.c.b16 %v3416, %v3415
    %v3426 = vpack.c.b16 %v3418, %v3417
    %3435 = vmatprep.subr.bf16.mxu0 0
    %3436 = vmatpush1.bf16.msra.mxu0 %v3419
    %3437 = vmatprep.subr.bf16.mxu0 0
    %3438 = vmatpush1.bf16.msra.mxu0 %v3420
    %3439 = vmatprep.subr.bf16.mxu0 0
    %3440 = vmatpush1.bf16.msra.mxu0 %v3421
    %3441 = vmatprep.subr.bf16.mxu0 0
    %3442 = vmatpush1.bf16.msra.mxu0 %v3422
    %3443 = vmatprep.subr.bf16.mxu0 0
    %3444 = vmatpush1.bf16.msra.mxu0 %v3423
    %3445 = vmatprep.subr.bf16.mxu0 0
    %3446 = vmatpush1.bf16.msra.mxu0 %v3424
    %3447 = vmatprep.subr.bf16.mxu0 0
    %3448 = vmatpush1.bf16.msra.mxu0 %v3425
    %3449 = vmatprep.subr.bf16.mxu0 0
    %3450 = vmatpush1.bf16.msra.mxu0 %v3426
    %3451 = vmatprep.subr.bf16.mxu0 0
    %3452 = vmatpush1.bf16.msra.mxu0 0
    %3453 = vmatprep.subr.bf16.mxu0 0
    %3454 = vmatpush1.bf16.msra.mxu0 0
    %3455 = vmatprep.subr.bf16.mxu0 0
    %3456 = vmatpush1.bf16.msra.mxu0 0
    %3457 = vmatprep.subr.bf16.mxu0 0
    %3458 = vmatpush1.bf16.msra.mxu0 0
    %3459 = vmatprep.subr.bf16.mxu0 0
    %3460 = vmatpush1.bf16.msra.mxu0 0
    %3461 = vmatprep.subr.bf16.mxu0 0
    %3462 = vmatpush1.bf16.msra.mxu0 0
    %3463 = vmatprep.subr.bf16.mxu0 0
    %3464 = vmatpush1.bf16.msra.mxu0 0
    %3465 = vmatprep.subr.bf16.mxu0 0
    %3466 = vmatpush1.bf16.msra.mxu0 0
    %3467 = vmatprep.mubr.bf16.mxu0 0
    %3468 = vmatmul.mubr.bf16.gmra.mrb[0].mxu0 %v3363
    %v3469 = vpop.f32.mrb[0].mxu0
    %v3470 = vadd.f32 %v3385, %v3469
    %v3471 = vpop.f32.mrb[0].mxu0
    %v3472 = vpop.f32.mrb[0].mxu0
    %v3473 = vadd.f32 %v3385, %v3472
    %v3474 = vpop.f32.mrb[0].mxu0
    %3475 = vdwg.mxu0
    %3476 = vst [vmem:[#allocation14] sm:$0xff] %v3470
    %3477 = vst [vmem:[#allocation14 + $0x8] sm:$0xff] %v3473
    // Predicated region
    $region58: #{tpu_custom_call.1} parent=1 // pred_check
      _
    $region59: #{tpu_custom_call.1} parent=1 // pred_check_branch
      %3479 = sbr.rel (0) target = $region61
    $region60: #{tpu_custom_call.1} parent=1 // pred_region
      %s3481 = ssub.s32 256, 256
      %3482 = vsyncadd [#allocation4], %s3481
      %s3483 = sshll.u32 [#allocation14], 4
      %s3484 = int_to_ptr.vmem [resolvable:$true] %s3483
      %3489 = dma.vmem_to_hbm [thread:$0]  %s3484, 256, %s7, [#allocation4], 128, 128, 8
    $region61: #{tpu_custom_call.1} parent=1 // pred_fallthru
      _
    // Predicated region
    $region62: #{tpu_custom_call.1} parent=1 // pred_check
      _
    $region63: #{tpu_custom_call.1} parent=1 // pred_check_branch
      %3491 = sbr.rel (0) target = $region65
    $region64: #{tpu_custom_call.1} parent=1 // pred_region
      %3492 = dma.done [#allocation4], 256
    $region65: #{tpu_custom_call.1} parent=1 // pred_fallthru
      _
    %3493 = vsyncpa [#allocation3], 1
    %3494 = vsyncpa [#allocation6], 1
    %3495 = vsyncpa [#allocation9], 1
    %3496 = vsyncpa [#allocation12], 1
    %3497 = vsyncpa [#allocation4], 1

</llo_original>
